<compile_context>
chip_gen: v7x
topology: tpu7x:2x2x1
jax: 0.10.0
libtpu: 0.0.40
codegen_flags: <defaults>
</compile_context>

<pallas_src>
import functools

import jax
import jax.numpy as jnp
from jax.experimental import pallas as pl
from jax.experimental.pallas import tpu as pltpu

_BN_EPS = 1e-5


# ----------------------------------------------------------------------------
# Fused Pallas kernel: Decomposition + message + conv_Update for one part,
# all N images at once. Layout: channels on sublanes, (batch*pixels) on lanes.
# ----------------------------------------------------------------------------
def fused_part_kernel(_sel_ref,                    # SMEM prefetch (used in index_maps)
                      xh_ref, xp_ref,              # (h, L) activations, L = N*H*W
                      w1t_ref,                     # (2h, 2h) merged 1x1 conv weight^T
                      bn1s_ref, bn1b_ref,          # (2h, 1) folded BN
                      w2r_ref,                     # (1, 2h) 1x1 conv -> attention
                      w3r_ref,                     # (2h, 9*2h) im2col-packed 3x3 w^T
                      bn3s_ref, bn3b_ref,          # (2h, 1)
                      w4r_ref,                     # (h, 9*2h) im2col-packed 3x3 w^T
                      bn4s_ref, bn4b_ref,          # (h, 1)
                      sc_ref,                      # SMEM (Pn, 2) = [b2, gamma] per part
                      att_ref,                     # out (1, L)
                      xpn_ref,                     # out (h, L)
                      col_ref,                     # VMEM scratch (9*2h, L) im2col buf
                      *, H, W, N):
    HW = H * W
    L = N * HW
    h = xp_ref.shape[0]
    h2 = 2 * h
    p = pl.program_id(0)

    xh = xh_ref[...]
    xp = xp_ref[...]

    # ---- Decomposition: sigmoid(conv1x1(leaky_relu(bn(conv1x1(cat[xh, xp]))))) ----
    cat1 = jnp.concatenate([xh, xp], axis=0)                     # sublane-aligned (h=8)
    y = jnp.dot(w1t_ref[...], cat1, preferred_element_type=jnp.float32)
    y = y * bn1s_ref[...] + bn1b_ref[...]                        # folded BN (eval mode)
    y = jnp.where(y >= 0.0, y, 0.01 * y)                         # LeakyReLU(0.01)
    z = jnp.dot(w2r_ref[...], y, preferred_element_type=jnp.float32) + sc_ref[p, 0]
    att = 1.0 / (1.0 + jnp.exp(-z))                              # exact sigmoid
    att_ref[...] = att

    # conv_Update input cat([xp, att * xh]) kept in vregs (no VMEM round trip)
    cat2 = jnp.concatenate([xp, att * xh], axis=0)               # (2h, L)

    # ---- hoisted per-image boundary masks (4 compares total) ----
    pix = jax.lax.broadcasted_iota(jnp.int32, (1, L), 1)
    if (HW & (HW - 1)) == 0:
        pin = pix & (HW - 1)                                     # pixel index inside image
    else:
        pin = pix % HW
    if (W & (W - 1)) == 0:
        col = pin & (W - 1)
        row = pin >> (W.bit_length() - 1)
    else:
        col = pin % W
        row = pin // W
    col_ok = {-1: col >= 1, 0: None, 1: col < (W - 1)}
    row_ok = {-1: row >= 1, 0: None, 1: row < (H - 1)}
    taps = [(dy, dx) for dy in (-1, 0, 1) for dx in (-1, 0, 1)]

    def im2col(x):
        # fill col_ref with the 9 shifted / zero-padded taps of x (Cin = 2h)
        for t, (dy, dx) in enumerate(taps):
            d = dy * W + dx
            if d == 0:
                xs = x
            else:
                xs = pltpu.roll(x, shift=(-d) % L, axis=1)
                m = row_ok[dy]
                if col_ok[dx] is not None:
                    m = col_ok[dx] if m is None else (m & col_ok[dx])
                xs = jnp.where(m, xs, 0.0)
            col_ref[t * h2:(t + 1) * h2, :] = xs

    # ---- conv_Update: 3x3+BN+ReLU, 3x3+BN+ReLU, relu(gamma*x + out) ----
    im2col(cat2)
    o1 = jnp.dot(w3r_ref[...], col_ref[...], preferred_element_type=jnp.float32)
    o1 = jnp.maximum(o1 * bn3s_ref[...] + bn3b_ref[...], 0.0)

    im2col(o1)
    o2 = jnp.dot(w4r_ref[...], col_ref[...], preferred_element_type=jnp.float32)
    o2 = jnp.maximum(o2 * bn4s_ref[...] + bn4b_ref[...], 0.0)

    gamma = sc_ref[p, 1]
    xpn_ref[...] = jnp.maximum(gamma * xp + o2, 0.0)


# ----------------------------------------------------------------------------
# Pallas wrapper: one call for all parts, grid = (num_parts,), batch folded
# into the lane dimension, xh selected via scalar-prefetched half_sel.
# ----------------------------------------------------------------------------
@jax.jit
def part_graph_forward(xh2_stack, xp_stack, sel, sp):
    # xh2_stack: (2, N, h, H, W)   xp_stack: (Pn, N, h, H, W)   sel: (Pn,) int32
    Pn, N, h, H, W = xp_stack.shape
    HW = H * W
    L = N * HW
    h2 = 2 * h

    # channels-on-sublanes / (batch*pixels)-on-lanes
    xh_f = jnp.transpose(xh2_stack, (0, 2, 1, 3, 4)).reshape(xh2_stack.shape[0], h, L)
    xp_f = jnp.transpose(xp_stack, (0, 2, 1, 3, 4)).reshape(Pn, h, L)

    def per_part(shape):
        nd = len(shape)
        return pl.BlockSpec((None,) + shape, lambda p, sel_ref: (p,) + (0,) * nd)

    grid_spec = pltpu.PrefetchScalarGridSpec(
        num_scalar_prefetch=1,
        grid=(Pn,),
        in_specs=[
            pl.BlockSpec((None, h, L), lambda p, sel_ref: (sel_ref[p], 0, 0)),  # xh
            pl.BlockSpec((None, h, L), lambda p, sel_ref: (p, 0, 0)),           # xp
            per_part((h2, h2)),                          # w1t (merged 1x1)
            per_part((h2, 1)), per_part((h2, 1)),        # bn1 scale/shift
            per_part((1, h2)),                           # w2 row
            per_part((h2, 9 * h2)),                      # w3 im2col-packed
            per_part((h2, 1)), per_part((h2, 1)),        # bn3 scale/shift
            per_part((h, 9 * h2)),                       # w4 im2col-packed
            per_part((h, 1)), per_part((h, 1)),          # bn4 scale/shift
            pl.BlockSpec(memory_space=pltpu.MemorySpace.SMEM),   # [b2, gamma] (Pn, 2)
        ],
        out_specs=(
            pl.BlockSpec((None, 1, L), lambda p, sel_ref: (p, 0, 0)),
            pl.BlockSpec((None, h, L), lambda p, sel_ref: (p, 0, 0)),
        ),
        scratch_shapes=[pltpu.VMEM((9 * h2, L), jnp.float32)],
    )

    att_f, xpn_f = pl.pallas_call(
        functools.partial(fused_part_kernel, H=H, W=W, N=N),
        out_shape=(jax.ShapeDtypeStruct((Pn, 1, L), jnp.float32),
                   jax.ShapeDtypeStruct((Pn, h, L), jnp.float32)),
        grid_spec=grid_spec,
        compiler_params=pltpu.CompilerParams(
            dimension_semantics=("parallel",)),
    )(sel, xh_f, xp_f,
      sp["w1t"], sp["bn1s"], sp["bn1b"], sp["w2r"],
      sp["w3r"], sp["bn3s"], sp["bn3b"],
      sp["w4r"], sp["bn4s"], sp["bn4b"],
      sp["scalars"])

    att = att_f.reshape(Pn, 1, N, H, W).transpose(0, 2, 1, 3, 4)
    xpn = xpn_f.reshape(Pn, h, N, H, W).transpose(0, 2, 1, 3, 4)
    return xpn, att


# ----------------------------------------------------------------------------
# Parameters (synthetic, deterministic) and parameter folding
# ----------------------------------------------------------------------------
def init_part_params(key, hidden_dim):
    h = hidden_dim
    ks = jax.random.split(key, 11)

    def rnd(k, shape, scale=0.1):
        return (scale * jax.random.normal(k, shape)).astype(jnp.float32)

    return {
        # Decomposition.att_fh : Conv1x1(2h->2h, no bias) + BN + LeakyReLU
        "w1": rnd(ks[0], (2 * h, 2 * h)),                 # (Cin, Cout)
        "bn1_w": (1.0 + rnd(ks[1], (2 * h,))).astype(jnp.float32),
        "bn1_b": rnd(ks[2], (2 * h,)),
        # Decomposition.att_fh1 : Conv1x1(2h->1, bias) + Sigmoid
        "w2": rnd(ks[3], (2 * h, 1)),
        "b2": rnd(ks[4], (1,)),
        # conv_Update conv1 : 3x3 (2h->2h, no bias) + BN + ReLU   (HWIO)
        "w3": rnd(ks[5], (3, 3, 2 * h, 2 * h)),
        "bn3_w": (1.0 + rnd(ks[6], (2 * h,))).astype(jnp.float32),
        "bn3_b": rnd(ks[7], (2 * h,)),
        # conv_Update conv2 : 3x3 (2h->h, no bias) + BN + ReLU    (HWIO)
        "w4": rnd(ks[8], (3, 3, 2 * h, h)),
        "bn4_w": (1.0 + rnd(ks[9], (h,))).astype(jnp.float32),
        "bn4_b": rnd(ks[10], (h,)),
        # conv_Update.gamma initialized to zero (as in the module)
        "gamma": jnp.zeros((1,), jnp.float32),
    }


def stack_part_params(raw_list, hidden_dim):
    """Fold BN (eval mode), pack weights for the (C, lanes) layout, stack per part."""
    h = hidden_dim
    h2 = 2 * h
    inv = 1.0 / jnp.sqrt(1.0 + _BN_EPS)   # running_mean = 0, running_var = 1

    def stack(fn):
        return jnp.stack([fn(p) for p in raw_list], axis=0)

    def pack3x3(w, cout):
        # HWIO (3,3,2h,cout) -> (cout, 9*2h):  out[co, t*2h+ci] = w[t//3, t%3, ci, co]
        return jnp.transpose(w.reshape(9, h2, cout), (2, 0, 1)).reshape(cout, 9 * h2)

    return {
        "w1t":  stack(lambda p: p["w1"].T),                            # (2h, 2h)
        "bn1s": stack(lambda p: (p["bn1_w"] * inv).reshape(-1, 1)),
        "bn1b": stack(lambda p: p["bn1_b"].reshape(-1, 1)),
        "w2r":  stack(lambda p: p["w2"].T),                            # (1, 2h)
        "w3r":  stack(lambda p: pack3x3(p["w3"], h2)),                 # (2h, 9*2h)
        "bn3s": stack(lambda p: (p["bn3_w"] * inv).reshape(-1, 1)),
        "bn3b": stack(lambda p: p["bn3_b"].reshape(-1, 1)),
        "w4r":  stack(lambda p: pack3x3(p["w4"], h)),                  # (h, 9*2h)
        "bn4s": stack(lambda p: (p["bn4_w"] * inv).reshape(-1, 1)),
        "bn4b": stack(lambda p: p["bn4_b"].reshape(-1, 1)),
        "scalars": stack(lambda p: jnp.stack(
            [p["b2"].reshape(()), p["gamma"].reshape(())])),           # (2,)
    }


# ----------------------------------------------------------------------------
# Pure-JAX reference (im2col formulation) for correctness cross-check
# ----------------------------------------------------------------------------
def reference_part_forward(xh_nchw, xp_nchw, p):
    N, h, H, W = xh_nchw.shape
    inv = 1.0 / jnp.sqrt(1.0 + _BN_EPS)
    xh = jnp.transpose(xh_nchw, (0, 2, 3, 1)).reshape(-1, h)
    xp = jnp.transpose(xp_nchw, (0, 2, 3, 1)).reshape(-1, h)

    y = jnp.concatenate([xh, xp], axis=-1) @ p["w1"]
    y = y * (p["bn1_w"] * inv) + p["bn1_b"]
    y = jnp.where(y >= 0.0, y, 0.01 * y)
    att = jax.nn.sigmoid(y @ p["w2"] + p["b2"])                       # (P, 1)
    msg = att * xh

    def im2col(x):  # (N,H,W,C) -> (N*H*W, 9C)
        xpad = jnp.pad(x, ((0, 0), (1, 1), (1, 1), (0, 0)))
        cols = [xpad[:, dy:dy + H, dx:dx + W, :]
                for dy in range(3) for dx in range(3)]
        return jnp.concatenate(cols, axis=-1).reshape(N * H * W, -1)

    cat2 = jnp.concatenate([xp, msg], axis=-1).reshape(N, H, W, 2 * h)
    o1 = im2col(cat2) @ p["w3"].reshape(9 * 2 * h, 2 * h)
    o1 = jnp.maximum(o1 * (p["bn3_w"] * inv) + p["bn3_b"], 0.0)
    o2 = im2col(o1.reshape(N, H, W, 2 * h)) @ p["w4"].reshape(9 * 2 * h, h)
    o2 = jnp.maximum(o2 * (p["bn4_w"] * inv) + p["bn4_b"], 0.0)
    out = jnp.maximum(p["gamma"][0] * xp + o2, 0.0)

    att_nchw = att.reshape(N, H, W, 1).transpose(0, 3, 1, 2)
    out_nchw = out.reshape(N, H, W, h).transpose(0, 3, 1, 2)
    return out_nchw, att_nchw


# ----------------------------------------------------------------------------
# Part_Graph module (Pallas-backed)
# ----------------------------------------------------------------------------
class PartGraphPallas:
    def __init__(self, adj_matrix, upper_part_list=(1, 2, 3, 4),
                 lower_part_list=(5, 6), in_dim=256, hidden_dim=8, cls_p=7,
                 cls_h=3, cls_f=2, key=None):
        self.cls_p = cls_p
        self.hidden_dim = hidden_dim
        self.upper_part_list = list(upper_part_list)
        self.lower_part_list = list(lower_part_list)
        # kept for parity with the PyTorch __init__ (unused in forward)
        self.edge_index = jnp.stack(jnp.nonzero(adj_matrix), axis=-1)
        self.edge_index_num = self.edge_index.shape[0]

        key = jax.random.PRNGKey(0) if key is None else key
        keys = jax.random.split(key, cls_p - 1)
        self.params = [init_part_params(keys[i], hidden_dim)
                       for i in range(cls_p - 1)]

        # parts used by forward and which half feature (0=upper, 1=lower) feeds each
        self.part_ids, self.half_sel = [], []
        for i in range(1, cls_p):
            if i in self.upper_part_list:
                self.part_ids.append(i)
                self.half_sel.append(0)
            elif i in self.lower_part_list:
                self.part_ids.append(i)
                self.half_sel.append(1)

        self.sel = jnp.array(self.half_sel, dtype=jnp.int32)
        self.stacked = stack_part_params(
            [self.params[i - 1] for i in self.part_ids], hidden_dim)

    def __call__(self, xf, xh_list, xp_list):
        xh2 = jnp.stack(xh_list, axis=0)                              # (2, N, h, H, W)
        xp_stack = jnp.stack([xp_list[i - 1] for i in self.part_ids], axis=0)
        xpn, att = part_graph_forward(xh2, xp_stack, self.sel, self.stacked)
        xp_list_new = [xpn[k] for k in range(len(self.part_ids))]
        att_hp_list = [att[k] for k in range(len(self.part_ids))]
        return xp_list_new, att_hp_list


# ----------------------------------------------------------------------------
# Demo
# ----------------------------------------------------------------------------
if __name__ == "__main__":
    key = jax.random.PRNGKey(0)
    N, H, W = 2, 16, 16
    hidden_dim = 8
    in_dim = 16
    cls_p = 7

    kx, khh, kpp, kparam = jax.random.split(key, 4)
    xf = jax.random.normal(kx, (N, in_dim, H, W), jnp.float32)      # unused in forward
    xh_list = [jax.random.normal(jax.random.fold_in(khh, j),
                                 (N, hidden_dim, H, W), jnp.float32)
               for j in range(2)]
    xp_list = [jax.random.normal(jax.random.fold_in(kpp, j),
                                 (N, hidden_dim, H, W), jnp.float32)
               for j in range(cls_p - 1)]
    adj = jnp.ones((cls_p, cls_p), jnp.float32) - jnp.eye(cls_p, dtype=jnp.float32)

    model = PartGraphPallas(adj, hidden_dim=hidden_dim, cls_p=cls_p, key=kparam)
    xp_list_new, att_hp_list = model(xf, xh_list, xp_list)

    jax.block_until_ready(xp_list_new)
    jax.block_until_ready(att_hp_list)

    assert len(xp_list_new) == cls_p - 1 and len(att_hp_list) == cls_p - 1
    assert all(x.shape == (N, hidden_dim, H, W) for x in xp_list_new)
    assert all(a.shape == (N, 1, H, W) for a in att_hp_list)
    assert all(bool(jnp.all(x >= 0)) for x in xp_list_new)              # final ReLU
    assert all(bool(jnp.all((a > 0) & (a < 1))) for a in att_hp_list)   # sigmoid range

    # cross-check the fused Pallas path against a plain-JAX im2col reference
    max_err = 0.0
    for k, i in enumerate(model.part_ids):
        xh = xh_list[model.half_sel[k]]
        ref_xp, ref_att = reference_part_forward(xh, xp_list[i - 1],
                                                 model.params[i - 1])
        max_err = max(max_err,
                      float(jnp.max(jnp.abs(ref_xp - xp_list_new[k]))),
                      float(jnp.max(jnp.abs(ref_att - att_hp_list[k]))))
    assert max_err < 5e-2, f"mismatch vs reference: {max_err}"

    print("KERNEL_OK")
</pallas_src>

<mosaic_0001>
module attributes {stable_mosaic.version = 11 : i64} {
  func.func @fused_part_kernel(%arg0: i32, %arg1: memref<6xi32, #tpu.memory_space<smem>>, %arg2: memref<1x8x512xf32, #tpu.memory_space<vmem>>, %arg3: memref<1x8x512xf32, #tpu.memory_space<vmem>>, %arg4: memref<1x16x16xf32, #tpu.memory_space<vmem>>, %arg5: memref<1x16x1xf32, #tpu.memory_space<vmem>>, %arg6: memref<1x16x1xf32, #tpu.memory_space<vmem>>, %arg7: memref<1x1x16xf32, #tpu.memory_space<vmem>>, %arg8: memref<1x16x144xf32, #tpu.memory_space<vmem>>, %arg9: memref<1x16x1xf32, #tpu.memory_space<vmem>>, %arg10: memref<1x16x1xf32, #tpu.memory_space<vmem>>, %arg11: memref<1x8x144xf32, #tpu.memory_space<vmem>>, %arg12: memref<1x8x1xf32, #tpu.memory_space<vmem>>, %arg13: memref<1x8x1xf32, #tpu.memory_space<vmem>>, %arg14: memref<6x2xf32, #tpu.memory_space<smem>>, %arg15: memref<1x1x512xf32, #tpu.memory_space<vmem>>, %arg16: memref<1x8x512xf32, #tpu.memory_space<vmem>>, %arg17: memref<144x512xf32, #tpu.memory_space<vmem>>) attributes {dimension_semantics = [#tpu.dimension_semantics<parallel>], iteration_bounds = array<i64: 6>, scalar_prefetch = 1 : i64, scratch_operands = 1 : i64, tpu.core_type = #tpu.core_type<tc>, window_params = [{transform_indices = @transform_0, window_bounds = array<i64: 1, 8, 512>}, {transform_indices = @transform_1, window_bounds = array<i64: 1, 8, 512>}, {transform_indices = @transform_2, window_bounds = array<i64: 1, 16, 16>}, {transform_indices = @transform_3, window_bounds = array<i64: 1, 16, 1>}, {transform_indices = @transform_4, window_bounds = array<i64: 1, 16, 1>}, {transform_indices = @transform_5, window_bounds = array<i64: 1, 1, 16>}, {transform_indices = @transform_6, window_bounds = array<i64: 1, 16, 144>}, {transform_indices = @transform_7, window_bounds = array<i64: 1, 16, 1>}, {transform_indices = @transform_8, window_bounds = array<i64: 1, 16, 1>}, {transform_indices = @transform_9, window_bounds = array<i64: 1, 8, 144>}, {transform_indices = @transform_10, window_bounds = array<i64: 1, 8, 1>}, {transform_indices = @transform_11, window_bounds = array<i64: 1, 8, 1>}, {transform_indices = @transform_12, window_bounds = array<i64: 6, 2>}, {transform_indices = @transform_13, window_bounds = array<i64: 1, 1, 512>}, {transform_indices = @transform_14, window_bounds = array<i64: 1, 8, 512>}]} {
    %c0 = arith.constant 0 : index
    %c0_0 = arith.constant 0 : index
    %c0_1 = arith.constant 0 : index
    %0 = vector.load %arg2[%c0, %c0_0, %c0_1] : memref<1x8x512xf32, #tpu.memory_space<vmem>>, vector<1x8x512xf32>
    %1 = vector.shape_cast %0 : vector<1x8x512xf32> to vector<8x512xf32>
    %c0_2 = arith.constant 0 : index
    %c0_3 = arith.constant 0 : index
    %c0_4 = arith.constant 0 : index
    %2 = vector.load %arg3[%c0_2, %c0_3, %c0_4] : memref<1x8x512xf32, #tpu.memory_space<vmem>>, vector<1x8x512xf32>
    %3 = vector.shape_cast %2 : vector<1x8x512xf32> to vector<8x512xf32>
    %4 = tpu.concatenate %1, %3 in 0 : vector<8x512xf32>, vector<8x512xf32> -> vector<16x512xf32>
    %c0_5 = arith.constant 0 : index
    %c0_6 = arith.constant 0 : index
    %c0_7 = arith.constant 0 : index
    %5 = vector.load %arg4[%c0_5, %c0_6, %c0_7] : memref<1x16x16xf32, #tpu.memory_space<vmem>>, vector<1x16x16xf32>
    %6 = vector.shape_cast %5 : vector<1x16x16xf32> to vector<16x16xf32>
    %cst = arith.constant dense<0.000000e+00> : vector<16x512xf32>
    %7 = tpu.matmul %6, %4, %cst {dimension_numbers = #tpu.dot_dimension_numbers<[1], [0], [0], [1], [0, 0, 1, 1], [], []>} : vector<16x16xf32>, vector<16x512xf32>, vector<16x512xf32> -> vector<16x512xf32>
    %c0_8 = arith.constant 0 : index
    %c0_9 = arith.constant 0 : index
    %c0_10 = arith.constant 0 : index
    %8 = vector.load %arg5[%c0_8, %c0_9, %c0_10] : memref<1x16x1xf32, #tpu.memory_space<vmem>>, vector<1x16x1xf32>
    %9 = vector.shape_cast %8 : vector<1x16x1xf32> to vector<16x1xf32>
    %10 = vector.broadcast %9 : vector<16x1xf32> to vector<16x512xf32>
    %11 = arith.mulf %7, %10 : vector<16x512xf32>
    %c0_11 = arith.constant 0 : index
    %c0_12 = arith.constant 0 : index
    %c0_13 = arith.constant 0 : index
    %12 = vector.load %arg6[%c0_11, %c0_12, %c0_13] : memref<1x16x1xf32, #tpu.memory_space<vmem>>, vector<1x16x1xf32>
    %13 = vector.shape_cast %12 : vector<1x16x1xf32> to vector<16x1xf32>
    %14 = vector.broadcast %13 : vector<16x1xf32> to vector<16x512xf32>
    %15 = arith.addf %11, %14 : vector<16x512xf32>
    %cst_14 = arith.constant 0.000000e+00 : f32
    %16 = vector.broadcast %cst_14 : f32 to vector<16x512xf32>
    %17 = arith.cmpf oge, %15, %16 : vector<16x512xf32>
    %cst_15 = arith.constant 0.00999999977 : f32
    %18 = vector.broadcast %cst_15 : f32 to vector<16x512xf32>
    %19 = arith.mulf %18, %15 : vector<16x512xf32>
    %20 = arith.select %17, %15, %19 : vector<16x512xi1>, vector<16x512xf32>
    %c0_16 = arith.constant 0 : index
    %c0_17 = arith.constant 0 : index
    %c0_18 = arith.constant 0 : index
    %21 = vector.load %arg7[%c0_16, %c0_17, %c0_18] : memref<1x1x16xf32, #tpu.memory_space<vmem>>, vector<1x1x16xf32>
    %22 = vector.shape_cast %21 : vector<1x1x16xf32> to vector<1x16xf32>
    %cst_19 = arith.constant dense<0.000000e+00> : vector<1x512xf32>
    %23 = tpu.matmul %22, %20, %cst_19 {dimension_numbers = #tpu.dot_dimension_numbers<[1], [0], [0], [1], [0, 0, 1, 1], [], []>} : vector<1x16xf32>, vector<16x512xf32>, vector<1x512xf32> -> vector<1x512xf32>
    %24 = arith.index_cast %arg0 : i32 to index
    %c0_20 = arith.constant 0 : index
    %25 = memref.load %arg14[%24, %c0_20] : memref<6x2xf32, #tpu.memory_space<smem>>
    %26 = vector.broadcast %25 : f32 to vector<1x512xf32>
    %27 = arith.addf %23, %26 : vector<1x512xf32>
    %cst_21 = arith.constant 0.000000e+00 : f32
    %28 = vector.broadcast %cst_21 : f32 to vector<1x512xf32>
    %29 = arith.subf %28, %27 : vector<1x512xf32>
    %30 = math.exp %29 : vector<1x512xf32>
    %cst_22 = arith.constant 1.000000e+00 : f32
    %31 = vector.broadcast %cst_22 : f32 to vector<1x512xf32>
    %32 = arith.addf %31, %30 : vector<1x512xf32>
    %cst_23 = arith.constant 1.000000e+00 : f32
    %33 = vector.broadcast %cst_23 : f32 to vector<1x512xf32>
    %34 = arith.divf %33, %32 : vector<1x512xf32>
    %c0_24 = arith.constant 0 : index
    %c0_25 = arith.constant 0 : index
    %c0_26 = arith.constant 0 : index
    %35 = vector.load %arg15[%c0_24, %c0_25, %c0_26] : memref<1x1x512xf32, #tpu.memory_space<vmem>>, vector<1x1x512xf32>
    %36 = vector.shape_cast %35 : vector<1x1x512xf32> to vector<1x512xf32>
    %37 = vector.shape_cast %34 : vector<1x512xf32> to vector<1x1x512xf32>
    tpu.vector_store %arg15[%c0_24, %c0_25, %c0_26], %37 {strides = array<i32>} : memref<1x1x512xf32, #tpu.memory_space<vmem>>, vector<1x1x512xf32>,
    %38 = vector.broadcast %34 : vector<1x512xf32> to vector<8x512xf32>
    %39 = arith.mulf %38, %1 : vector<8x512xf32>
    %40 = tpu.concatenate %3, %39 in 0 : vector<8x512xf32>, vector<8x512xf32> -> vector<16x512xf32>
    %41 = tpu.iota {dimensions = array<i32: 1>} : vector<1x512xi32>
    %c255_i32 = arith.constant 255 : i32
    %42 = vector.broadcast %c255_i32 : i32 to vector<1x512xi32>
    %43 = arith.andi %41, %42 : vector<1x512xi32>
    %c15_i32 = arith.constant 15 : i32
    %44 = vector.broadcast %c15_i32 : i32 to vector<1x512xi32>
    %45 = arith.andi %43, %44 : vector<1x512xi32>
    %c4_i32 = arith.constant 4 : i32
    %46 = vector.broadcast %c4_i32 : i32 to vector<1x512xi32>
    %47 = arith.shrsi %43, %46 : vector<1x512xi32>
    %c1_i32 = arith.constant 1 : i32
    %48 = vector.broadcast %c1_i32 : i32 to vector<1x512xi32>
    %49 = arith.cmpi sge, %45, %48 : vector<1x512xi32>
    %c15_i32_27 = arith.constant 15 : i32
    %50 = vector.broadcast %c15_i32_27 : i32 to vector<1x512xi32>
    %51 = arith.cmpi slt, %45, %50 : vector<1x512xi32>
    %c1_i32_28 = arith.constant 1 : i32
    %52 = vector.broadcast %c1_i32_28 : i32 to vector<1x512xi32>
    %53 = arith.cmpi sge, %47, %52 : vector<1x512xi32>
    %c15_i32_29 = arith.constant 15 : i32
    %54 = vector.broadcast %c15_i32_29 : i32 to vector<1x512xi32>
    %55 = arith.cmpi slt, %47, %54 : vector<1x512xi32>
    %c17_i32 = arith.constant 17 : i32
    %56 = tpu.dynamic_rotate %40 by %c17_i32 dim 1 : vector<16x512xf32>, i32 -> vector<16x512xf32>
    %57 = arith.andi %53, %49 : vector<1x512xi1>
    %cst_30 = arith.constant 0.000000e+00 : f32
    %58 = vector.shape_cast %57 : vector<1x512xi1> to vector<1x512xi1>
    %59 = vector.broadcast %58 : vector<1x512xi1> to vector<16x512xi1>
    %60 = vector.broadcast %cst_30 : f32 to vector<16x512xf32>
    %61 = arith.select %59, %56, %60 : vector<16x512xi1>, vector<16x512xf32>
    %c0_31 = arith.constant 0 : index
    %c0_32 = arith.constant 0 : index
    %62 = vector.load %arg17[%c0_31, %c0_32] : memref<144x512xf32, #tpu.memory_space<vmem>>, vector<16x512xf32>
    tpu.vector_store %arg17[%c0_31, %c0_32], %61 {strides = array<i32>} : memref<144x512xf32, #tpu.memory_space<vmem>>, vector<16x512xf32>,
    %c16_i32 = arith.constant 16 : i32
    %63 = tpu.dynamic_rotate %40 by %c16_i32 dim 1 : vector<16x512xf32>, i32 -> vector<16x512xf32>
    %cst_33 = arith.constant 0.000000e+00 : f32
    %64 = vector.shape_cast %53 : vector<1x512xi1> to vector<1x512xi1>
    %65 = vector.broadcast %64 : vector<1x512xi1> to vector<16x512xi1>
    %66 = vector.broadcast %cst_33 : f32 to vector<16x512xf32>
    %67 = arith.select %65, %63, %66 : vector<16x512xi1>, vector<16x512xf32>
    %c16 = arith.constant 16 : index
    %c0_34 = arith.constant 0 : index
    %68 = vector.load %arg17[%c16, %c0_34] : memref<144x512xf32, #tpu.memory_space<vmem>>, vector<16x512xf32>
    tpu.vector_store %arg17[%c16, %c0_34], %67 {strides = array<i32>} : memref<144x512xf32, #tpu.memory_space<vmem>>, vector<16x512xf32>,
    %c15_i32_35 = arith.constant 15 : i32
    %69 = tpu.dynamic_rotate %40 by %c15_i32_35 dim 1 : vector<16x512xf32>, i32 -> vector<16x512xf32>
    %70 = arith.andi %53, %51 : vector<1x512xi1>
    %cst_36 = arith.constant 0.000000e+00 : f32
    %71 = vector.shape_cast %70 : vector<1x512xi1> to vector<1x512xi1>
    %72 = vector.broadcast %71 : vector<1x512xi1> to vector<16x512xi1>
    %73 = vector.broadcast %cst_36 : f32 to vector<16x512xf32>
    %74 = arith.select %72, %69, %73 : vector<16x512xi1>, vector<16x512xf32>
    %c32 = arith.constant 32 : index
    %c0_37 = arith.constant 0 : index
    %75 = vector.load %arg17[%c32, %c0_37] : memref<144x512xf32, #tpu.memory_space<vmem>>, vector<16x512xf32>
    tpu.vector_store %arg17[%c32, %c0_37], %74 {strides = array<i32>} : memref<144x512xf32, #tpu.memory_space<vmem>>, vector<16x512xf32>,
    %c1_i32_38 = arith.constant 1 : i32
    %76 = tpu.dynamic_rotate %40 by %c1_i32_38 dim 1 : vector<16x512xf32>, i32 -> vector<16x512xf32>
    %cst_39 = arith.constant 0.000000e+00 : f32
    %77 = vector.shape_cast %49 : vector<1x512xi1> to vector<1x512xi1>
    %78 = vector.broadcast %77 : vector<1x512xi1> to vector<16x512xi1>
    %79 = vector.broadcast %cst_39 : f32 to vector<16x512xf32>
    %80 = arith.select %78, %76, %79 : vector<16x512xi1>, vector<16x512xf32>
    %c48 = arith.constant 48 : index
    %c0_40 = arith.constant 0 : index
    %81 = vector.load %arg17[%c48, %c0_40] : memref<144x512xf32, #tpu.memory_space<vmem>>, vector<16x512xf32>
    tpu.vector_store %arg17[%c48, %c0_40], %80 {strides = array<i32>} : memref<144x512xf32, #tpu.memory_space<vmem>>, vector<16x512xf32>,
    %c64 = arith.constant 64 : index
    %c0_41 = arith.constant 0 : index
    %82 = vector.load %arg17[%c64, %c0_41] : memref<144x512xf32, #tpu.memory_space<vmem>>, vector<16x512xf32>
    tpu.vector_store %arg17[%c64, %c0_41], %40 {strides = array<i32>} : memref<144x512xf32, #tpu.memory_space<vmem>>, vector<16x512xf32>,
    %c511_i32 = arith.constant 511 : i32
    %83 = tpu.dynamic_rotate %40 by %c511_i32 dim 1 : vector<16x512xf32>, i32 -> vector<16x512xf32>
    %cst_42 = arith.constant 0.000000e+00 : f32
    %84 = vector.shape_cast %51 : vector<1x512xi1> to vector<1x512xi1>
    %85 = vector.broadcast %84 : vector<1x512xi1> to vector<16x512xi1>
    %86 = vector.broadcast %cst_42 : f32 to vector<16x512xf32>
    %87 = arith.select %85, %83, %86 : vector<16x512xi1>, vector<16x512xf32>
    %c80 = arith.constant 80 : index
    %c0_43 = arith.constant 0 : index
    %88 = vector.load %arg17[%c80, %c0_43] : memref<144x512xf32, #tpu.memory_space<vmem>>, vector<16x512xf32>
    tpu.vector_store %arg17[%c80, %c0_43], %87 {strides = array<i32>} : memref<144x512xf32, #tpu.memory_space<vmem>>, vector<16x512xf32>,
    %c497_i32 = arith.constant 497 : i32
    %89 = tpu.dynamic_rotate %40 by %c497_i32 dim 1 : vector<16x512xf32>, i32 -> vector<16x512xf32>
    %90 = arith.andi %55, %49 : vector<1x512xi1>
    %cst_44 = arith.constant 0.000000e+00 : f32
    %91 = vector.shape_cast %90 : vector<1x512xi1> to vector<1x512xi1>
    %92 = vector.broadcast %91 : vector<1x512xi1> to vector<16x512xi1>
    %93 = vector.broadcast %cst_44 : f32 to vector<16x512xf32>
    %94 = arith.select %92, %89, %93 : vector<16x512xi1>, vector<16x512xf32>
    %c96 = arith.constant 96 : index
    %c0_45 = arith.constant 0 : index
    %95 = vector.load %arg17[%c96, %c0_45] : memref<144x512xf32, #tpu.memory_space<vmem>>, vector<16x512xf32>
    tpu.vector_store %arg17[%c96, %c0_45], %94 {strides = array<i32>} : memref<144x512xf32, #tpu.memory_space<vmem>>, vector<16x512xf32>,
    %c496_i32 = arith.constant 496 : i32
    %96 = tpu.dynamic_rotate %40 by %c496_i32 dim 1 : vector<16x512xf32>, i32 -> vector<16x512xf32>
    %cst_46 = arith.constant 0.000000e+00 : f32
    %97 = vector.shape_cast %55 : vector<1x512xi1> to vector<1x512xi1>
    %98 = vector.broadcast %97 : vector<1x512xi1> to vector<16x512xi1>
    %99 = vector.broadcast %cst_46 : f32 to vector<16x512xf32>
    %100 = arith.select %98, %96, %99 : vector<16x512xi1>, vector<16x512xf32>
    %c112 = arith.constant 112 : index
    %c0_47 = arith.constant 0 : index
    %101 = vector.load %arg17[%c112, %c0_47] : memref<144x512xf32, #tpu.memory_space<vmem>>, vector<16x512xf32>
    tpu.vector_store %arg17[%c112, %c0_47], %100 {strides = array<i32>} : memref<144x512xf32, #tpu.memory_space<vmem>>, vector<16x512xf32>,
    %c495_i32 = arith.constant 495 : i32
    %102 = tpu.dynamic_rotate %40 by %c495_i32 dim 1 : vector<16x512xf32>, i32 -> vector<16x512xf32>
    %103 = arith.andi %55, %51 : vector<1x512xi1>
    %cst_48 = arith.constant 0.000000e+00 : f32
    %104 = vector.shape_cast %103 : vector<1x512xi1> to vector<1x512xi1>
    %105 = vector.broadcast %104 : vector<1x512xi1> to vector<16x512xi1>
    %106 = vector.broadcast %cst_48 : f32 to vector<16x512xf32>
    %107 = arith.select %105, %102, %106 : vector<16x512xi1>, vector<16x512xf32>
    %c128 = arith.constant 128 : index
    %c0_49 = arith.constant 0 : index
    %108 = vector.load %arg17[%c128, %c0_49] : memref<144x512xf32, #tpu.memory_space<vmem>>, vector<16x512xf32>
    tpu.vector_store %arg17[%c128, %c0_49], %107 {strides = array<i32>} : memref<144x512xf32, #tpu.memory_space<vmem>>, vector<16x512xf32>,
    %c0_50 = arith.constant 0 : index
    %c0_51 = arith.constant 0 : index
    %c0_52 = arith.constant 0 : index
    %109 = vector.load %arg8[%c0_50, %c0_51, %c0_52] : memref<1x16x144xf32, #tpu.memory_space<vmem>>, vector<1x16x144xf32>
    %110 = vector.shape_cast %109 : vector<1x16x144xf32> to vector<16x144xf32>
    %c0_53 = arith.constant 0 : index
    %c0_54 = arith.constant 0 : index
    %111 = vector.load %arg17[%c0_53, %c0_54] : memref<144x512xf32, #tpu.memory_space<vmem>>, vector<144x512xf32>
    %cst_55 = arith.constant dense<0.000000e+00> : vector<16x512xf32>
    %112 = tpu.matmul %110, %111, %cst_55 {dimension_numbers = #tpu.dot_dimension_numbers<[1], [0], [0], [1], [0, 0, 1, 1], [], []>} : vector<16x144xf32>, vector<144x512xf32>, vector<16x512xf32> -> vector<16x512xf32>
    %c0_56 = arith.constant 0 : index
    %c0_57 = arith.constant 0 : index
    %c0_58 = arith.constant 0 : index
    %113 = vector.load %arg9[%c0_56, %c0_57, %c0_58] : memref<1x16x1xf32, #tpu.memory_space<vmem>>, vector<1x16x1xf32>
    %114 = vector.shape_cast %113 : vector<1x16x1xf32> to vector<16x1xf32>
    %115 = vector.broadcast %114 : vector<16x1xf32> to vector<16x512xf32>
    %116 = arith.mulf %112, %115 : vector<16x512xf32>
    %c0_59 = arith.constant 0 : index
    %c0_60 = arith.constant 0 : index
    %c0_61 = arith.constant 0 : index
    %117 = vector.load %arg10[%c0_59, %c0_60, %c0_61] : memref<1x16x1xf32, #tpu.memory_space<vmem>>, vector<1x16x1xf32>
    %118 = vector.shape_cast %117 : vector<1x16x1xf32> to vector<16x1xf32>
    %119 = vector.broadcast %118 : vector<16x1xf32> to vector<16x512xf32>
    %120 = arith.addf %116, %119 : vector<16x512xf32>
    %cst_62 = arith.constant 0.000000e+00 : f32
    %121 = vector.broadcast %cst_62 : f32 to vector<16x512xf32>
    %122 = arith.maximumf %120, %121 : vector<16x512xf32>
    %c17_i32_63 = arith.constant 17 : i32
    %123 = tpu.dynamic_rotate %122 by %c17_i32_63 dim 1 : vector<16x512xf32>, i32 -> vector<16x512xf32>
    %124 = arith.andi %53, %49 : vector<1x512xi1>
    %cst_64 = arith.constant 0.000000e+00 : f32
    %125 = vector.shape_cast %124 : vector<1x512xi1> to vector<1x512xi1>
    %126 = vector.broadcast %125 : vector<1x512xi1> to vector<16x512xi1>
    %127 = vector.broadcast %cst_64 : f32 to vector<16x512xf32>
    %128 = arith.select %126, %123, %127 : vector<16x512xi1>, vector<16x512xf32>
    %c0_65 = arith.constant 0 : index
    %c0_66 = arith.constant 0 : index
    %129 = vector.load %arg17[%c0_65, %c0_66] : memref<144x512xf32, #tpu.memory_space<vmem>>, vector<16x512xf32>
    tpu.vector_store %arg17[%c0_65, %c0_66], %128 {strides = array<i32>} : memref<144x512xf32, #tpu.memory_space<vmem>>, vector<16x512xf32>,
    %c16_i32_67 = arith.constant 16 : i32
    %130 = tpu.dynamic_rotate %122 by %c16_i32_67 dim 1 : vector<16x512xf32>, i32 -> vector<16x512xf32>
    %cst_68 = arith.constant 0.000000e+00 : f32
    %131 = vector.shape_cast %53 : vector<1x512xi1> to vector<1x512xi1>
    %132 = vector.broadcast %131 : vector<1x512xi1> to vector<16x512xi1>
    %133 = vector.broadcast %cst_68 : f32 to vector<16x512xf32>
    %134 = arith.select %132, %130, %133 : vector<16x512xi1>, vector<16x512xf32>
    %c16_69 = arith.constant 16 : index
    %c0_70 = arith.constant 0 : index
    %135 = vector.load %arg17[%c16_69, %c0_70] : memref<144x512xf32, #tpu.memory_space<vmem>>, vector<16x512xf32>
    tpu.vector_store %arg17[%c16_69, %c0_70], %134 {strides = array<i32>} : memref<144x512xf32, #tpu.memory_space<vmem>>, vector<16x512xf32>,
    %c15_i32_71 = arith.constant 15 : i32
    %136 = tpu.dynamic_rotate %122 by %c15_i32_71 dim 1 : vector<16x512xf32>, i32 -> vector<16x512xf32>
    %137 = arith.andi %53, %51 : vector<1x512xi1>
    %cst_72 = arith.constant 0.000000e+00 : f32
    %138 = vector.shape_cast %137 : vector<1x512xi1> to vector<1x512xi1>
    %139 = vector.broadcast %138 : vector<1x512xi1> to vector<16x512xi1>
    %140 = vector.broadcast %cst_72 : f32 to vector<16x512xf32>
    %141 = arith.select %139, %136, %140 : vector<16x512xi1>, vector<16x512xf32>
    %c32_73 = arith.constant 32 : index
    %c0_74 = arith.constant 0 : index
    %142 = vector.load %arg17[%c32_73, %c0_74] : memref<144x512xf32, #tpu.memory_space<vmem>>, vector<16x512xf32>
    tpu.vector_store %arg17[%c32_73, %c0_74], %141 {strides = array<i32>} : memref<144x512xf32, #tpu.memory_space<vmem>>, vector<16x512xf32>,
    %c1_i32_75 = arith.constant 1 : i32
    %143 = tpu.dynamic_rotate %122 by %c1_i32_75 dim 1 : vector<16x512xf32>, i32 -> vector<16x512xf32>
    %cst_76 = arith.constant 0.000000e+00 : f32
    %144 = vector.shape_cast %49 : vector<1x512xi1> to vector<1x512xi1>
    %145 = vector.broadcast %144 : vector<1x512xi1> to vector<16x512xi1>
    %146 = vector.broadcast %cst_76 : f32 to vector<16x512xf32>
    %147 = arith.select %145, %143, %146 : vector<16x512xi1>, vector<16x512xf32>
    %c48_77 = arith.constant 48 : index
    %c0_78 = arith.constant 0 : index
    %148 = vector.load %arg17[%c48_77, %c0_78] : memref<144x512xf32, #tpu.memory_space<vmem>>, vector<16x512xf32>
    tpu.vector_store %arg17[%c48_77, %c0_78], %147 {strides = array<i32>} : memref<144x512xf32, #tpu.memory_space<vmem>>, vector<16x512xf32>,
    %c64_79 = arith.constant 64 : index
    %c0_80 = arith.constant 0 : index
    %149 = vector.load %arg17[%c64_79, %c0_80] : memref<144x512xf32, #tpu.memory_space<vmem>>, vector<16x512xf32>
    tpu.vector_store %arg17[%c64_79, %c0_80], %122 {strides = array<i32>} : memref<144x512xf32, #tpu.memory_space<vmem>>, vector<16x512xf32>,
    %c511_i32_81 = arith.constant 511 : i32
    %150 = tpu.dynamic_rotate %122 by %c511_i32_81 dim 1 : vector<16x512xf32>, i32 -> vector<16x512xf32>
    %cst_82 = arith.constant 0.000000e+00 : f32
    %151 = vector.shape_cast %51 : vector<1x512xi1> to vector<1x512xi1>
    %152 = vector.broadcast %151 : vector<1x512xi1> to vector<16x512xi1>
    %153 = vector.broadcast %cst_82 : f32 to vector<16x512xf32>
    %154 = arith.select %152, %150, %153 : vector<16x512xi1>, vector<16x512xf32>
    %c80_83 = arith.constant 80 : index
    %c0_84 = arith.constant 0 : index
    %155 = vector.load %arg17[%c80_83, %c0_84] : memref<144x512xf32, #tpu.memory_space<vmem>>, vector<16x512xf32>
    tpu.vector_store %arg17[%c80_83, %c0_84], %154 {strides = array<i32>} : memref<144x512xf32, #tpu.memory_space<vmem>>, vector<16x512xf32>,
    %c497_i32_85 = arith.constant 497 : i32
    %156 = tpu.dynamic_rotate %122 by %c497_i32_85 dim 1 : vector<16x512xf32>, i32 -> vector<16x512xf32>
    %157 = arith.andi %55, %49 : vector<1x512xi1>
    %cst_86 = arith.constant 0.000000e+00 : f32
    %158 = vector.shape_cast %157 : vector<1x512xi1> to vector<1x512xi1>
    %159 = vector.broadcast %158 : vector<1x512xi1> to vector<16x512xi1>
    %160 = vector.broadcast %cst_86 : f32 to vector<16x512xf32>
    %161 = arith.select %159, %156, %160 : vector<16x512xi1>, vector<16x512xf32>
    %c96_87 = arith.constant 96 : index
    %c0_88 = arith.constant 0 : index
    %162 = vector.load %arg17[%c96_87, %c0_88] : memref<144x512xf32, #tpu.memory_space<vmem>>, vector<16x512xf32>
    tpu.vector_store %arg17[%c96_87, %c0_88], %161 {strides = array<i32>} : memref<144x512xf32, #tpu.memory_space<vmem>>, vector<16x512xf32>,
    %c496_i32_89 = arith.constant 496 : i32
    %163 = tpu.dynamic_rotate %122 by %c496_i32_89 dim 1 : vector<16x512xf32>, i32 -> vector<16x512xf32>
    %cst_90 = arith.constant 0.000000e+00 : f32
    %164 = vector.shape_cast %55 : vector<1x512xi1> to vector<1x512xi1>
    %165 = vector.broadcast %164 : vector<1x512xi1> to vector<16x512xi1>
    %166 = vector.broadcast %cst_90 : f32 to vector<16x512xf32>
    %167 = arith.select %165, %163, %166 : vector<16x512xi1>, vector<16x512xf32>
    %c112_91 = arith.constant 112 : index
    %c0_92 = arith.constant 0 : index
    %168 = vector.load %arg17[%c112_91, %c0_92] : memref<144x512xf32, #tpu.memory_space<vmem>>, vector<16x512xf32>
    tpu.vector_store %arg17[%c112_91, %c0_92], %167 {strides = array<i32>} : memref<144x512xf32, #tpu.memory_space<vmem>>, vector<16x512xf32>,
    %c495_i32_93 = arith.constant 495 : i32
    %169 = tpu.dynamic_rotate %122 by %c495_i32_93 dim 1 : vector<16x512xf32>, i32 -> vector<16x512xf32>
    %170 = arith.andi %55, %51 : vector<1x512xi1>
    %cst_94 = arith.constant 0.000000e+00 : f32
    %171 = vector.shape_cast %170 : vector<1x512xi1> to vector<1x512xi1>
    %172 = vector.broadcast %171 : vector<1x512xi1> to vector<16x512xi1>
    %173 = vector.broadcast %cst_94 : f32 to vector<16x512xf32>
    %174 = arith.select %172, %169, %173 : vector<16x512xi1>, vector<16x512xf32>
    %c128_95 = arith.constant 128 : index
    %c0_96 = arith.constant 0 : index
    %175 = vector.load %arg17[%c128_95, %c0_96] : memref<144x512xf32, #tpu.memory_space<vmem>>, vector<16x512xf32>
    tpu.vector_store %arg17[%c128_95, %c0_96], %174 {strides = array<i32>} : memref<144x512xf32, #tpu.memory_space<vmem>>, vector<16x512xf32>,
    %c0_97 = arith.constant 0 : index
    %c0_98 = arith.constant 0 : index
    %c0_99 = arith.constant 0 : index
    %176 = vector.load %arg11[%c0_97, %c0_98, %c0_99] : memref<1x8x144xf32, #tpu.memory_space<vmem>>, vector<1x8x144xf32>
    %177 = vector.shape_cast %176 : vector<1x8x144xf32> to vector<8x144xf32>
    %c0_100 = arith.constant 0 : index
    %c0_101 = arith.constant 0 : index
    %178 = vector.load %arg17[%c0_100, %c0_101] : memref<144x512xf32, #tpu.memory_space<vmem>>, vector<144x512xf32>
    %cst_102 = arith.constant dense<0.000000e+00> : vector<8x512xf32>
    %179 = tpu.matmul %177, %178, %cst_102 {dimension_numbers = #tpu.dot_dimension_numbers<[1], [0], [0], [1], [0, 0, 1, 1], [], []>} : vector<8x144xf32>, vector<144x512xf32>, vector<8x512xf32> -> vector<8x512xf32>
    %c0_103 = arith.constant 0 : index
    %c0_104 = arith.constant 0 : index
    %c0_105 = arith.constant 0 : index
    %180 = vector.load %arg12[%c0_103, %c0_104, %c0_105] : memref<1x8x1xf32, #tpu.memory_space<vmem>>, vector<1x8x1xf32>
    %181 = vector.shape_cast %180 : vector<1x8x1xf32> to vector<8x1xf32>
    %182 = vector.broadcast %181 : vector<8x1xf32> to vector<8x512xf32>
    %183 = arith.mulf %179, %182 : vector<8x512xf32>
    %c0_106 = arith.constant 0 : index
    %c0_107 = arith.constant 0 : index
    %c0_108 = arith.constant 0 : index
    %184 = vector.load %arg13[%c0_106, %c0_107, %c0_108] : memref<1x8x1xf32, #tpu.memory_space<vmem>>, vector<1x8x1xf32>
    %185 = vector.shape_cast %184 : vector<1x8x1xf32> to vector<8x1xf32>
    %186 = vector.broadcast %185 : vector<8x1xf32> to vector<8x512xf32>
    %187 = arith.addf %183, %186 : vector<8x512xf32>
    %cst_109 = arith.constant 0.000000e+00 : f32
    %188 = vector.broadcast %cst_109 : f32 to vector<8x512xf32>
    %189 = arith.maximumf %187, %188 : vector<8x512xf32>
    %190 = arith.index_cast %arg0 : i32 to index
    %c1 = arith.constant 1 : index
    %191 = memref.load %arg14[%190, %c1] : memref<6x2xf32, #tpu.memory_space<smem>>
    %192 = vector.broadcast %191 : f32 to vector<8x512xf32>
    %193 = arith.mulf %192, %3 : vector<8x512xf32>
    %194 = arith.addf %193, %189 : vector<8x512xf32>
    %cst_110 = arith.constant 0.000000e+00 : f32
    %195 = vector.broadcast %cst_110 : f32 to vector<8x512xf32>
    %196 = arith.maximumf %194, %195 : vector<8x512xf32>
    %c0_111 = arith.constant 0 : index
    %c0_112 = arith.constant 0 : index
    %c0_113 = arith.constant 0 : index
    %197 = vector.load %arg16[%c0_111, %c0_112, %c0_113] : memref<1x8x512xf32, #tpu.memory_space<vmem>>, vector<1x8x512xf32>
    %198 = vector.shape_cast %197 : vector<1x8x512xf32> to vector<8x512xf32>
    %199 = vector.shape_cast %196 : vector<8x512xf32> to vector<1x8x512xf32>
    tpu.vector_store %arg16[%c0_111, %c0_112, %c0_113], %199 {strides = array<i32>} : memref<1x8x512xf32, #tpu.memory_space<vmem>>, vector<1x8x512xf32>,
    return
  }
  func.func @transform_0(%arg0: i32, %arg1: memref<6xi32, #tpu.memory_space<smem>>) -> (i32, i32, i32) {
    %0 = arith.index_cast %arg0 : i32 to index
    %1 = memref.load %arg1[%0] : memref<6xi32, #tpu.memory_space<smem>>
    %c0_i32 = arith.constant 0 : i32
    %c0_i32_0 = arith.constant 0 : i32
    %c0_i32_1 = arith.constant 0 : i32
    return %1, %c0_i32, %c0_i32_0 : i32, i32, i32
  }
  func.func @transform_1(%arg0: i32, %arg1: memref<6xi32, #tpu.memory_space<smem>>) -> (i32, i32, i32) {
    %c0_i32 = arith.constant 0 : i32
    %c0_i32_0 = arith.constant 0 : i32
    %c0_i32_1 = arith.constant 0 : i32
    return %arg0, %c0_i32, %c0_i32_0 : i32, i32, i32
  }
  func.func @transform_2(%arg0: i32, %arg1: memref<6xi32, #tpu.memory_space<smem>>) -> (i32, i32, i32) {
    %c0_i32 = arith.constant 0 : i32
    %c0_i32_0 = arith.constant 0 : i32
    %c0_i32_1 = arith.constant 0 : i32
    return %arg0, %c0_i32, %c0_i32_0 : i32, i32, i32
  }
  func.func @transform_3(%arg0: i32, %arg1: memref<6xi32, #tpu.memory_space<smem>>) -> (i32, i32, i32) {
    %c0_i32 = arith.constant 0 : i32
    %c0_i32_0 = arith.constant 0 : i32
    %c0_i32_1 = arith.constant 0 : i32
    return %arg0, %c0_i32, %c0_i32_0 : i32, i32, i32
  }
  func.func @transform_4(%arg0: i32, %arg1: memref<6xi32, #tpu.memory_space<smem>>) -> (i32, i32, i32) {
    %c0_i32 = arith.constant 0 : i32
    %c0_i32_0 = arith.constant 0 : i32
    %c0_i32_1 = arith.constant 0 : i32
    return %arg0, %c0_i32, %c0_i32_0 : i32, i32, i32
  }
  func.func @transform_5(%arg0: i32, %arg1: memref<6xi32, #tpu.memory_space<smem>>) -> (i32, i32, i32) {
    %c0_i32 = arith.constant 0 : i32
    %c0_i32_0 = arith.constant 0 : i32
    %c0_i32_1 = arith.constant 0 : i32
    return %arg0, %c0_i32, %c0_i32_0 : i32, i32, i32
  }
  func.func @transform_6(%arg0: i32, %arg1: memref<6xi32, #tpu.memory_space<smem>>) -> (i32, i32, i32) {
    %c0_i32 = arith.constant 0 : i32
    %c0_i32_0 = arith.constant 0 : i32
    %c0_i32_1 = arith.constant 0 : i32
    return %arg0, %c0_i32, %c0_i32_0 : i32, i32, i32
  }
  func.func @transform_7(%arg0: i32, %arg1: memref<6xi32, #tpu.memory_space<smem>>) -> (i32, i32, i32) {
    %c0_i32 = arith.constant 0 : i32
    %c0_i32_0 = arith.constant 0 : i32
    %c0_i32_1 = arith.constant 0 : i32
    return %arg0, %c0_i32, %c0_i32_0 : i32, i32, i32
  }
  func.func @transform_8(%arg0: i32, %arg1: memref<6xi32, #tpu.memory_space<smem>>) -> (i32, i32, i32) {
    %c0_i32 = arith.constant 0 : i32
    %c0_i32_0 = arith.constant 0 : i32
    %c0_i32_1 = arith.constant 0 : i32
    return %arg0, %c0_i32, %c0_i32_0 : i32, i32, i32
  }
  func.func @transform_9(%arg0: i32, %arg1: memref<6xi32, #tpu.memory_space<smem>>) -> (i32, i32, i32) {
    %c0_i32 = arith.constant 0 : i32
    %c0_i32_0 = arith.constant 0 : i32
    %c0_i32_1 = arith.constant 0 : i32
    return %arg0, %c0_i32, %c0_i32_0 : i32, i32, i32
  }
  func.func @transform_10(%arg0: i32, %arg1: memref<6xi32, #tpu.memory_space<smem>>) -> (i32, i32, i32) {
    %c0_i32 = arith.constant 0 : i32
    %c0_i32_0 = arith.constant 0 : i32
    %c0_i32_1 = arith.constant 0 : i32
    return %arg0, %c0_i32, %c0_i32_0 : i32, i32, i32
  }
  func.func @transform_11(%arg0: i32, %arg1: memref<6xi32, #tpu.memory_space<smem>>) -> (i32, i32, i32) {
    %c0_i32 = arith.constant 0 : i32
    %c0_i32_0 = arith.constant 0 : i32
    %c0_i32_1 = arith.constant 0 : i32
    return %arg0, %c0_i32, %c0_i32_0 : i32, i32, i32
  }
  func.func @transform_12(%arg0: i32, %arg1: memref<6xi32, #tpu.memory_space<smem>>) -> (i32, i32) {
    %c0_i32 = arith.constant 0 : i32
    %c0_i32_0 = arith.constant 0 : i32
    %c0_i32_1 = arith.constant 0 : i32
    return %c0_i32, %c0_i32_0 : i32, i32
  }
  func.func @transform_13(%arg0: i32, %arg1: memref<6xi32, #tpu.memory_space<smem>>) -> (i32, i32, i32) {
    %c0_i32 = arith.constant 0 : i32
    %c0_i32_0 = arith.constant 0 : i32
    %c0_i32_1 = arith.constant 0 : i32
    return %arg0, %c0_i32, %c0_i32_0 : i32, i32, i32
  }
  func.func @transform_14(%arg0: i32, %arg1: memref<6xi32, #tpu.memory_space<smem>>) -> (i32, i32, i32) {
    %c0_i32 = arith.constant 0 : i32
    %c0_i32_0 = arith.constant 0 : i32
    %c0_i32_1 = arith.constant 0 : i32
    return %arg0, %c0_i32, %c0_i32_0 : i32, i32, i32
  }
}

</mosaic_0001>

<llo_original>
// kernel: part_graph_forward.1
$region0: #{part_graph_forward.1}
  #allocation0 [shape = 'u32[]', space=smem, size = 0x4, offset = 0x4, fixed_abs, tag = 'smem constant byte address 0x4 - core index']
  #allocation1 [shape = 'u32[144,128]{1,0:T(1,128)}', space=vmem, size = 0x12000, scoped, tag = 'internal scratch']
  #allocation2 [shape = 'f32[144,512]{1,0:T(8,128)}', space=vmem, size = 0x48000, scoped, tag = 'scratch operand']
  #allocation3 [shape = 's32[1]{0}', space=sflag, size = 0x4, scoped, tag = 'scoped memory for part_graph_forward.1']
  #allocation4 [shape = 'u8[512]{0}', space=smem, size = 0x200, scoped, tag = 'prefetched SMEM operand 0']
  %s0 = inlined_call_operand.vmem [shape: s32[6], index: 0, kind: input, shape index: {}]
  %s1 = inlined_call_operand.vmem [shape: f32[2,8,512], index: 1, kind: input, shape index: {}]
  %s2 = inlined_call_operand.vmem [shape: f32[6,8,512], index: 2, kind: input, shape index: {}]
  %s3 = inlined_call_operand.vmem [shape: f32[6,16,16], index: 3, kind: input, shape index: {}]
  %s4 = inlined_call_operand.vmem [shape: f32[6,16,1], index: 4, kind: input, shape index: {}]
  %s5 = inlined_call_operand.vmem [shape: f32[6,16,1], index: 5, kind: input, shape index: {}]
  %s6 = inlined_call_operand.vmem [shape: f32[6,1,16], index: 6, kind: input, shape index: {}]
  %s7 = inlined_call_operand.vmem [shape: f32[6,16,144], index: 7, kind: input, shape index: {}]
  %s8 = inlined_call_operand.vmem [shape: f32[6,16,1], index: 8, kind: input, shape index: {}]
  %s9 = inlined_call_operand.vmem [shape: f32[6,16,1], index: 9, kind: input, shape index: {}]
  %s10 = inlined_call_operand.vmem [shape: f32[6,8,144], index: 10, kind: input, shape index: {}]
  %s11 = inlined_call_operand.vmem [shape: f32[6,8,1], index: 11, kind: input, shape index: {}]
  %s12 = inlined_call_operand.vmem [shape: f32[6,8,1], index: 12, kind: input, shape index: {}]
  %s13 = inlined_call_operand.vmem [shape: f32[6,2], index: 13, kind: input, shape index: {}]
  %s14 = inlined_call_operand.vmem [shape: f32[6,1,512], index: 14, kind: output, shape index: {0}]
  %s15 = inlined_call_operand.vmem [shape: f32[6,8,512], index: 15, kind: output, shape index: {1}]
  %16 = xla_tuple %s14, %s15
  %s17 = sld [smem:[#allocation0]]
  $region97: #{part_graph_forward.1} parent=0
    _
  %s19 = ssub.s32 1, %s17
  %s20 = scalar_select 0, %s19, %s17
  %s21 = sshll.u32 %s0, 4
  %s22 = int_to_ptr.vmem [resolvable:$true] %s21
  %24 = dma.vmem_to_smem %s22, 16, [#allocation4], [#allocation3]
  %25 = dma.done [#allocation3], 16
  %26 = sfence
  $region1: #{part_graph_forward.1} parent=0
    #allocation5 [shape = 'u8[4096]{0}', space=smem, size = 0x1000, scoped, tag = 'input window, operand 13, single buffered']
    #allocation6 [shape = 's32[2]{0}', space=sflag, size = 0x8, scoped, tag = 'scoped memory for part_graph_forward.1']
    %27 = vsyncpa [#allocation6], 0
    loop: start=0, step=1, limit=8
    $region2: #{part_graph_forward.1} parent=1 // loop_pre_header
      _
    $region3: #{part_graph_forward.1} parent=1 // loop_header
      %s29 = sphi 0, %s33
      %p30 = scmp.ge.s32.totalorder %s29, 8
      %s41 = sphi 0, %s43
      %s44 = sphi 0, %s41
      %s45 = sphi 0, %s44
      %s61 = sphi 0, %s45
      %s67 = sphi 0, %s69
      %s70 = sphi 0, %s67
      %s71 = sphi 0, %s70
      %s87 = sphi 0, %s71
      %s93 = sphi 0, %s95
      %s96 = sphi 0, %s93
      %s97 = sphi 0, %s96
      %s113 = sphi 0, %s97
      %s119 = sphi 0, %s121
      %s122 = sphi 0, %s119
      %s123 = sphi 0, %s122
      %s139 = sphi 0, %s123
      %s145 = sphi 0, %s147
      %s148 = sphi 0, %s145
      %s149 = sphi 0, %s148
      %s165 = sphi 0, %s149
      %s171 = sphi 0, %s173
      %s174 = sphi 0, %s171
      %s175 = sphi 0, %s174
      %s191 = sphi 0, %s175
      %s197 = sphi 0, %s199
      %s200 = sphi 0, %s197
      %s201 = sphi 0, %s200
      %s217 = sphi 0, %s201
      %s223 = sphi 0, %s225
      %s226 = sphi 0, %s223
      %s227 = sphi 0, %s226
      %s243 = sphi 0, %s227
      %s249 = sphi 0, %s251
      %s252 = sphi 0, %s249
      %s253 = sphi 0, %s252
      %s269 = sphi 0, %s253
      %s275 = sphi 0, %s277
      %s278 = sphi 0, %s275
      %s279 = sphi 0, %s278
      %s295 = sphi 0, %s279
      %s301 = sphi 0, %s303
      %s304 = sphi 0, %s301
      %s305 = sphi 0, %s304
      %s321 = sphi 0, %s305
      %s327 = sphi 0, %s329
      %s330 = sphi 0, %s327
      %s331 = sphi 0, %s330
      %s347 = sphi 0, %s331
      %s351 = sphi 0, %s351
      %s353 = sphi 0, %s351
      %s354 = sphi 0, %s353
      %s368 = sphi 0, %s354
      %s374 = sphi 0, %s376
      %s377 = sphi 0, %s374
      %s378 = sphi 0, %s377
      %s394 = sphi 0, %s378
      %s400 = sphi 0, %s402
      %s403 = sphi 0, %s400
      %s404 = sphi 0, %s403
      %s420 = sphi 0, %s404
    $region4: #{part_graph_forward.1} parent=1 // loop_header_branch
      %32 = sbr.rel (%p30) target = $region8
    $region5: #{part_graph_forward.1} parent=1 // loop_body
      %s34 = ssub.s32 %s29, 1
      %s35 = ssub.s32 %s29, 2
      %s36 = sadd.s32 %s29, 1
      %s37 = sld [smem:[#allocation4 + %s29]]
      %s38 = sld [smem:[#allocation4 + %s36]]
      %s39 = ssub.s32 %s37, %s38
      %p40 = scmp.eq.s32.totalorder %s39, 0
      %s42 = sadd.s32 %s41, 1
      %s43 = scalar_select %p40, %s41, %s42
      %p46 = pneg %p40
      %p47 = scmp.eq.s32.totalorder %s29, 5
      %p48 = por %p46, %p47
      %p49 = scmp.ne.s32.totalorder %s41, %s44
      %p50 = scmp.eq.s32.totalorder %s29, 0
      %p51 = por %p49, %p50
      %p52 = scmp.ne.s32.totalorder %s41, %s44
      %p53 = scmp.eq.s32.totalorder %s34, 5
      %p54 = por %p52, %p53
      %p55 = scmp.ne.s32.totalorder %s44, %s45
      %p56 = scmp.eq.s32.totalorder %s34, 0
      %p57 = por %p55, %p56
      %p58 = scmp.ne.s32.totalorder %s44, %s45
      %p59 = scmp.eq.s32.totalorder %s35, 5
      %p60 = por %p58, %p59
      %p62 = scmp.ne.s32.totalorder %s45, %s61
      %p63 = scmp.eq.s32.totalorder %s35, 0
      %p64 = por %p62, %p63
      %s65 = ssub.s32 %s29, %s36
      %p66 = scmp.eq.s32.totalorder %s65, 0
      %s68 = sadd.s32 %s67, 1
      %s69 = scalar_select %p66, %s67, %s68
      %p72 = pneg %p66
      %p73 = scmp.eq.s32.totalorder %s29, 5
      %p74 = por %p72, %p73
      %p75 = scmp.ne.s32.totalorder %s67, %s70
      %p76 = scmp.eq.s32.totalorder %s29, 0
      %p77 = por %p75, %p76
      %p78 = scmp.ne.s32.totalorder %s67, %s70
      %p79 = scmp.eq.s32.totalorder %s34, 5
      %p80 = por %p78, %p79
      %p81 = scmp.ne.s32.totalorder %s70, %s71
      %p82 = scmp.eq.s32.totalorder %s34, 0
      %p83 = por %p81, %p82
      %p84 = scmp.ne.s32.totalorder %s70, %s71
      %p85 = scmp.eq.s32.totalorder %s35, 5
      %p86 = por %p84, %p85
      %p88 = scmp.ne.s32.totalorder %s71, %s87
      %p89 = scmp.eq.s32.totalorder %s35, 0
      %p90 = por %p88, %p89
      %s91 = ssub.s32 %s29, %s36
      %p92 = scmp.eq.s32.totalorder %s91, 0
      %s94 = sadd.s32 %s93, 1
      %s95 = scalar_select %p92, %s93, %s94
      %p98 = pneg %p92
      %p99 = scmp.eq.s32.totalorder %s29, 5
      %p100 = por %p98, %p99
      %p101 = scmp.ne.s32.totalorder %s93, %s96
      %p102 = scmp.eq.s32.totalorder %s29, 0
      %p103 = por %p101, %p102
      %p104 = scmp.ne.s32.totalorder %s93, %s96
      %p105 = scmp.eq.s32.totalorder %s34, 5
      %p106 = por %p104, %p105
      %p107 = scmp.ne.s32.totalorder %s96, %s97
      %p108 = scmp.eq.s32.totalorder %s34, 0
      %p109 = por %p107, %p108
      %p110 = scmp.ne.s32.totalorder %s96, %s97
      %p111 = scmp.eq.s32.totalorder %s35, 5
      %p112 = por %p110, %p111
      %p114 = scmp.ne.s32.totalorder %s97, %s113
      %p115 = scmp.eq.s32.totalorder %s35, 0
      %p116 = por %p114, %p115
      %s117 = ssub.s32 %s29, %s36
      %p118 = scmp.eq.s32.totalorder %s117, 0
      %s120 = sadd.s32 %s119, 1
      %s121 = scalar_select %p118, %s119, %s120
      %p124 = pneg %p118
      %p125 = scmp.eq.s32.totalorder %s29, 5
      %p126 = por %p124, %p125
      %p127 = scmp.ne.s32.totalorder %s119, %s122
      %p128 = scmp.eq.s32.totalorder %s29, 0
      %p129 = por %p127, %p128
      %p130 = scmp.ne.s32.totalorder %s119, %s122
      %p131 = scmp.eq.s32.totalorder %s34, 5
      %p132 = por %p130, %p131
      %p133 = scmp.ne.s32.totalorder %s122, %s123
      %p134 = scmp.eq.s32.totalorder %s34, 0
      %p135 = por %p133, %p134
      %p136 = scmp.ne.s32.totalorder %s122, %s123
      %p137 = scmp.eq.s32.totalorder %s35, 5
      %p138 = por %p136, %p137
      %p140 = scmp.ne.s32.totalorder %s123, %s139
      %p141 = scmp.eq.s32.totalorder %s35, 0
      %p142 = por %p140, %p141
      %s143 = ssub.s32 %s29, %s36
      %p144 = scmp.eq.s32.totalorder %s143, 0
      %s146 = sadd.s32 %s145, 1
      %s147 = scalar_select %p144, %s145, %s146
      %p150 = pneg %p144
      %p151 = scmp.eq.s32.totalorder %s29, 5
      %p152 = por %p150, %p151
      %p153 = scmp.ne.s32.totalorder %s145, %s148
      %p154 = scmp.eq.s32.totalorder %s29, 0
      %p155 = por %p153, %p154
      %p156 = scmp.ne.s32.totalorder %s145, %s148
      %p157 = scmp.eq.s32.totalorder %s34, 5
      %p158 = por %p156, %p157
      %p159 = scmp.ne.s32.totalorder %s148, %s149
      %p160 = scmp.eq.s32.totalorder %s34, 0
      %p161 = por %p159, %p160
      %p162 = scmp.ne.s32.totalorder %s148, %s149
      %p163 = scmp.eq.s32.totalorder %s35, 5
      %p164 = por %p162, %p163
      %p166 = scmp.ne.s32.totalorder %s149, %s165
      %p167 = scmp.eq.s32.totalorder %s35, 0
      %p168 = por %p166, %p167
      %s169 = ssub.s32 %s29, %s36
      %p170 = scmp.eq.s32.totalorder %s169, 0
      %s172 = sadd.s32 %s171, 1
      %s173 = scalar_select %p170, %s171, %s172
      %p176 = pneg %p170
      %p177 = scmp.eq.s32.totalorder %s29, 5
      %p178 = por %p176, %p177
      %p179 = scmp.ne.s32.totalorder %s171, %s174
      %p180 = scmp.eq.s32.totalorder %s29, 0
      %p181 = por %p179, %p180
      %p182 = scmp.ne.s32.totalorder %s171, %s174
      %p183 = scmp.eq.s32.totalorder %s34, 5
      %p184 = por %p182, %p183
      %p185 = scmp.ne.s32.totalorder %s174, %s175
      %p186 = scmp.eq.s32.totalorder %s34, 0
      %p187 = por %p185, %p186
      %p188 = scmp.ne.s32.totalorder %s174, %s175
      %p189 = scmp.eq.s32.totalorder %s35, 5
      %p190 = por %p188, %p189
      %p192 = scmp.ne.s32.totalorder %s175, %s191
      %p193 = scmp.eq.s32.totalorder %s35, 0
      %p194 = por %p192, %p193
      %s195 = ssub.s32 %s29, %s36
      %p196 = scmp.eq.s32.totalorder %s195, 0
      %s198 = sadd.s32 %s197, 1
      %s199 = scalar_select %p196, %s197, %s198
      %p202 = pneg %p196
      %p203 = scmp.eq.s32.totalorder %s29, 5
      %p204 = por %p202, %p203
      %p205 = scmp.ne.s32.totalorder %s197, %s200
      %p206 = scmp.eq.s32.totalorder %s29, 0
      %p207 = por %p205, %p206
      %p208 = scmp.ne.s32.totalorder %s197, %s200
      %p209 = scmp.eq.s32.totalorder %s34, 5
      %p210 = por %p208, %p209
      %p211 = scmp.ne.s32.totalorder %s200, %s201
      %p212 = scmp.eq.s32.totalorder %s34, 0
      %p213 = por %p211, %p212
      %p214 = scmp.ne.s32.totalorder %s200, %s201
      %p215 = scmp.eq.s32.totalorder %s35, 5
      %p216 = por %p214, %p215
      %p218 = scmp.ne.s32.totalorder %s201, %s217
      %p219 = scmp.eq.s32.totalorder %s35, 0
      %p220 = por %p218, %p219
      %s221 = ssub.s32 %s29, %s36
      %p222 = scmp.eq.s32.totalorder %s221, 0
      %s224 = sadd.s32 %s223, 1
      %s225 = scalar_select %p222, %s223, %s224
      %p228 = pneg %p222
      %p229 = scmp.eq.s32.totalorder %s29, 5
      %p230 = por %p228, %p229
      %p231 = scmp.ne.s32.totalorder %s223, %s226
      %p232 = scmp.eq.s32.totalorder %s29, 0
      %p233 = por %p231, %p232
      %p234 = scmp.ne.s32.totalorder %s223, %s226
      %p235 = scmp.eq.s32.totalorder %s34, 5
      %p236 = por %p234, %p235
      %p237 = scmp.ne.s32.totalorder %s226, %s227
      %p238 = scmp.eq.s32.totalorder %s34, 0
      %p239 = por %p237, %p238
      %p240 = scmp.ne.s32.totalorder %s226, %s227
      %p241 = scmp.eq.s32.totalorder %s35, 5
      %p242 = por %p240, %p241
      %p244 = scmp.ne.s32.totalorder %s227, %s243
      %p245 = scmp.eq.s32.totalorder %s35, 0
      %p246 = por %p244, %p245
      %s247 = ssub.s32 %s29, %s36
      %p248 = scmp.eq.s32.totalorder %s247, 0
      %s250 = sadd.s32 %s249, 1
      %s251 = scalar_select %p248, %s249, %s250
      %p254 = pneg %p248
      %p255 = scmp.eq.s32.totalorder %s29, 5
      %p256 = por %p254, %p255
      %p257 = scmp.ne.s32.totalorder %s249, %s252
      %p258 = scmp.eq.s32.totalorder %s29, 0
      %p259 = por %p257, %p258
      %p260 = scmp.ne.s32.totalorder %s249, %s252
      %p261 = scmp.eq.s32.totalorder %s34, 5
      %p262 = por %p260, %p261
      %p263 = scmp.ne.s32.totalorder %s252, %s253
      %p264 = scmp.eq.s32.totalorder %s34, 0
      %p265 = por %p263, %p264
      %p266 = scmp.ne.s32.totalorder %s252, %s253
      %p267 = scmp.eq.s32.totalorder %s35, 5
      %p268 = por %p266, %p267
      %p270 = scmp.ne.s32.totalorder %s253, %s269
      %p271 = scmp.eq.s32.totalorder %s35, 0
      %p272 = por %p270, %p271
      %s273 = ssub.s32 %s29, %s36
      %p274 = scmp.eq.s32.totalorder %s273, 0
      %s276 = sadd.s32 %s275, 1
      %s277 = scalar_select %p274, %s275, %s276
      %p280 = pneg %p274
      %p281 = scmp.eq.s32.totalorder %s29, 5
      %p282 = por %p280, %p281
      %p283 = scmp.ne.s32.totalorder %s275, %s278
      %p284 = scmp.eq.s32.totalorder %s29, 0
      %p285 = por %p283, %p284
      %p286 = scmp.ne.s32.totalorder %s275, %s278
      %p287 = scmp.eq.s32.totalorder %s34, 5
      %p288 = por %p286, %p287
      %p289 = scmp.ne.s32.totalorder %s278, %s279
      %p290 = scmp.eq.s32.totalorder %s34, 0
      %p291 = por %p289, %p290
      %p292 = scmp.ne.s32.totalorder %s278, %s279
      %p293 = scmp.eq.s32.totalorder %s35, 5
      %p294 = por %p292, %p293
      %p296 = scmp.ne.s32.totalorder %s279, %s295
      %p297 = scmp.eq.s32.totalorder %s35, 0
      %p298 = por %p296, %p297
      %s299 = ssub.s32 %s29, %s36
      %p300 = scmp.eq.s32.totalorder %s299, 0
      %s302 = sadd.s32 %s301, 1
      %s303 = scalar_select %p300, %s301, %s302
      %p306 = pneg %p300
      %p307 = scmp.eq.s32.totalorder %s29, 5
      %p308 = por %p306, %p307
      %p309 = scmp.ne.s32.totalorder %s301, %s304
      %p310 = scmp.eq.s32.totalorder %s29, 0
      %p311 = por %p309, %p310
      %p312 = scmp.ne.s32.totalorder %s301, %s304
      %p313 = scmp.eq.s32.totalorder %s34, 5
      %p314 = por %p312, %p313
      %p315 = scmp.ne.s32.totalorder %s304, %s305
      %p316 = scmp.eq.s32.totalorder %s34, 0
      %p317 = por %p315, %p316
      %p318 = scmp.ne.s32.totalorder %s304, %s305
      %p319 = scmp.eq.s32.totalorder %s35, 5
      %p320 = por %p318, %p319
      %p322 = scmp.ne.s32.totalorder %s305, %s321
      %p323 = scmp.eq.s32.totalorder %s35, 0
      %p324 = por %p322, %p323
      %s325 = ssub.s32 %s29, %s36
      %p326 = scmp.eq.s32.totalorder %s325, 0
      %s328 = sadd.s32 %s327, 1
      %s329 = scalar_select %p326, %s327, %s328
      %p332 = pneg %p326
      %p333 = scmp.eq.s32.totalorder %s29, 5
      %p334 = por %p332, %p333
      %p335 = scmp.ne.s32.totalorder %s327, %s330
      %p336 = scmp.eq.s32.totalorder %s29, 0
      %p337 = por %p335, %p336
      %p338 = scmp.ne.s32.totalorder %s327, %s330
      %p339 = scmp.eq.s32.totalorder %s34, 5
      %p340 = por %p338, %p339
      %p341 = scmp.ne.s32.totalorder %s330, %s331
      %p342 = scmp.eq.s32.totalorder %s34, 0
      %p343 = por %p341, %p342
      %p344 = scmp.ne.s32.totalorder %s330, %s331
      %p345 = scmp.eq.s32.totalorder %s35, 5
      %p346 = por %p344, %p345
      %p348 = scmp.ne.s32.totalorder %s331, %s347
      %p349 = scmp.eq.s32.totalorder %s35, 0
      %p350 = por %p348, %p349
      %s352 = sadd.s32 %s351, 1
      %p355 = scmp.eq.s32.totalorder %s29, 5
      %p356 = scmp.ne.s32.totalorder %s351, %s353
      %p357 = scmp.eq.s32.totalorder %s29, 0
      %p358 = por %p356, %p357
      %p359 = scmp.ne.s32.totalorder %s351, %s353
      %p360 = scmp.eq.s32.totalorder %s34, 5
      %p361 = por %p359, %p360
      %p362 = scmp.ne.s32.totalorder %s353, %s354
      %p363 = scmp.eq.s32.totalorder %s34, 0
      %p364 = por %p362, %p363
      %p365 = scmp.ne.s32.totalorder %s353, %s354
      %p366 = scmp.eq.s32.totalorder %s35, 5
      %p367 = por %p365, %p366
      %p369 = scmp.ne.s32.totalorder %s354, %s368
      %p370 = scmp.eq.s32.totalorder %s35, 0
      %p371 = por %p369, %p370
      %s372 = ssub.s32 %s29, %s36
      %p373 = scmp.eq.s32.totalorder %s372, 0
      %s375 = sadd.s32 %s374, 1
      %s376 = scalar_select %p373, %s374, %s375
      %p379 = pneg %p373
      %p380 = scmp.eq.s32.totalorder %s29, 5
      %p381 = por %p379, %p380
      %p382 = scmp.ne.s32.totalorder %s374, %s377
      %p383 = scmp.eq.s32.totalorder %s29, 0
      %p384 = por %p382, %p383
      %p385 = scmp.ne.s32.totalorder %s374, %s377
      %p386 = scmp.eq.s32.totalorder %s34, 5
      %p387 = por %p385, %p386
      %p388 = scmp.ne.s32.totalorder %s377, %s378
      %p389 = scmp.eq.s32.totalorder %s34, 0
      %p390 = por %p388, %p389
      %p391 = scmp.ne.s32.totalorder %s377, %s378
      %p392 = scmp.eq.s32.totalorder %s35, 5
      %p393 = por %p391, %p392
      %p395 = scmp.ne.s32.totalorder %s378, %s394
      %p396 = scmp.eq.s32.totalorder %s35, 0
      %p397 = por %p395, %p396
      %s398 = ssub.s32 %s29, %s36
      %p399 = scmp.eq.s32.totalorder %s398, 0
      %s401 = sadd.s32 %s400, 1
      %s402 = scalar_select %p399, %s400, %s401
      %p405 = pneg %p399
      %p406 = scmp.eq.s32.totalorder %s29, 5
      %p407 = por %p405, %p406
      %p408 = scmp.ne.s32.totalorder %s400, %s403
      %p409 = scmp.eq.s32.totalorder %s29, 0
      %p410 = por %p408, %p409
      %p411 = scmp.ne.s32.totalorder %s400, %s403
      %p412 = scmp.eq.s32.totalorder %s34, 5
      %p413 = por %p411, %p412
      %p414 = scmp.ne.s32.totalorder %s403, %s404
      %p415 = scmp.eq.s32.totalorder %s34, 0
      %p416 = por %p414, %p415
      %p417 = scmp.ne.s32.totalorder %s403, %s404
      %p418 = scmp.eq.s32.totalorder %s35, 5
      %p419 = por %p417, %p418
      %p421 = scmp.ne.s32.totalorder %s404, %s420
      %p422 = scmp.eq.s32.totalorder %s35, 0
      %p423 = por %p421, %p422
      %p424 = scmp.le.s32.totalorder 1, %s29
      %p425 = scmp.lt.s32.totalorder %s29, 7
      %p426 = pnand %p424, %p425
      %p427 = pneg %p426
      // Predicated region
      $region9: #{part_graph_forward.1} parent=5 // pred_check
        _
      $region10: #{part_graph_forward.1} parent=5 // pred_check_branch
        %429 = sbr.rel (%p426) target = $region12
      $region11: #{part_graph_forward.1} parent=5 // pred_region
        %s430 = ssub.s32 %s29, 1
        // Predicated region
        $region13: #{part_graph_forward.1} parent=11 // pred_check
          %p431 = pneg %p364
        $region14: #{part_graph_forward.1} parent=11 // pred_check_branch
          %433 = sbr.rel (%p431) target = $region16
        $region15: #{part_graph_forward.1} parent=11 // pred_region
          %s435 = ssub.s32 128, 128
          %436 = vsyncadd [#allocation6], %s435
          %s438 = sshll.u32 %s13, 4
          %s439 = int_to_ptr.vmem [resolvable:$true] %s438
          %441 = dma.vmem_to_smem %s439, 128, [#allocation5], [#allocation6]
        $region16: #{part_graph_forward.1} parent=11 // pred_fallthru
          _
      $region12: #{part_graph_forward.1} parent=5 // pred_fallthru
        _
      %p442 = scmp.lt.s32.totalorder %s29, 6
      // Predicated region
      $region17: #{part_graph_forward.1} parent=5 // pred_check
        %p443 = pneg %p442
      $region18: #{part_graph_forward.1} parent=5 // pred_check_branch
        %445 = sbr.rel (%p443) target = $region20
      $region19: #{part_graph_forward.1} parent=5 // pred_region
        // Predicated region
        $region21: #{part_graph_forward.1} parent=19 // pred_check
          %p446 = pneg %p51
        $region22: #{part_graph_forward.1} parent=19 // pred_check_branch
          %448 = sbr.rel (%p446) target = $region24
        $region23: #{part_graph_forward.1} parent=19 // pred_region
          %s449 = sld [smem:[#allocation4 + %s29]]
          %p450 = scmp.lt.s32.totalorder %s449, 1
          %s451 = scalar_select %p450, %s449, 1
          %s452 = smul.addr %s451, 4
          %s453 = smul.addr %s452, 8
          %s454 = scalar_lea.vmem %s1, %s453
          %s455 = sld [smem:[#allocation4 + %s29]]
        $region24: #{part_graph_forward.1} parent=19 // pred_fallthru
          _
        // Predicated region
        $region25: #{part_graph_forward.1} parent=19 // pred_check
          %p456 = pneg %p77
        $region26: #{part_graph_forward.1} parent=19 // pred_check_branch
          %458 = sbr.rel (%p456) target = $region28
        $region27: #{part_graph_forward.1} parent=19 // pred_region
          %p459 = scmp.lt.s32.totalorder %s29, 5
          %s460 = scalar_select %p459, %s29, 5
          %s461 = smul.addr %s460, 4
          %s462 = smul.addr %s461, 8
          %s463 = scalar_lea.vmem %s2, %s462
        $region28: #{part_graph_forward.1} parent=19 // pred_fallthru
          _
        // Predicated region
        $region29: #{part_graph_forward.1} parent=19 // pred_check
          %p464 = pneg %p103
        $region30: #{part_graph_forward.1} parent=19 // pred_check_branch
          %466 = sbr.rel (%p464) target = $region32
        $region31: #{part_graph_forward.1} parent=19 // pred_region
          %p467 = scmp.lt.s32.totalorder %s29, 5
          %s468 = scalar_select %p467, %s29, 5
          %s469 = smul.addr %s468, 2
          %s470 = smul.addr %s469, 8
          %s471 = scalar_lea.vmem %s3, %s470
        $region32: #{part_graph_forward.1} parent=19 // pred_fallthru
          _
        // Predicated region
        $region33: #{part_graph_forward.1} parent=19 // pred_check
          %p472 = pneg %p129
        $region34: #{part_graph_forward.1} parent=19 // pred_check_branch
          %474 = sbr.rel (%p472) target = $region36
        $region35: #{part_graph_forward.1} parent=19 // pred_region
          %p475 = scmp.lt.s32.totalorder %s29, 5
          %s476 = scalar_select %p475, %s29, 5
          %s477 = smul.addr %s476, 2
          %s478 = smul.addr %s477, 8
          %s479 = scalar_lea.vmem %s4, %s478
        $region36: #{part_graph_forward.1} parent=19 // pred_fallthru
          _
        // Predicated region
        $region37: #{part_graph_forward.1} parent=19 // pred_check
          %p480 = pneg %p155
        $region38: #{part_graph_forward.1} parent=19 // pred_check_branch
          %482 = sbr.rel (%p480) target = $region40
        $region39: #{part_graph_forward.1} parent=19 // pred_region
          %p483 = scmp.lt.s32.totalorder %s29, 5
          %s484 = scalar_select %p483, %s29, 5
          %s485 = smul.addr %s484, 2
          %s486 = smul.addr %s485, 8
          %s487 = scalar_lea.vmem %s5, %s486
        $region40: #{part_graph_forward.1} parent=19 // pred_fallthru
          _
        // Predicated region
        $region41: #{part_graph_forward.1} parent=19 // pred_check
          %p488 = pneg %p181
        $region42: #{part_graph_forward.1} parent=19 // pred_check_branch
          %490 = sbr.rel (%p488) target = $region44
        $region43: #{part_graph_forward.1} parent=19 // pred_region
          %p491 = scmp.lt.s32.totalorder %s29, 5
          %s492 = scalar_select %p491, %s29, 5
          %s493 = scalar_lea.vmem %s6, %s492
        $region44: #{part_graph_forward.1} parent=19 // pred_fallthru
          _
        // Predicated region
        $region45: #{part_graph_forward.1} parent=19 // pred_check
          %p494 = pneg %p207
        $region46: #{part_graph_forward.1} parent=19 // pred_check_branch
          %496 = sbr.rel (%p494) target = $region48
        $region47: #{part_graph_forward.1} parent=19 // pred_region
          %p497 = scmp.lt.s32.totalorder %s29, 5
          %s498 = scalar_select %p497, %s29, 5
          %s499 = smul.addr %s498, 4
          %s500 = smul.addr %s499, 8
          %s501 = scalar_lea.vmem %s7, %s500
        $region48: #{part_graph_forward.1} parent=19 // pred_fallthru
          _
        // Predicated region
        $region49: #{part_graph_forward.1} parent=19 // pred_check
          %p502 = pneg %p233
        $region50: #{part_graph_forward.1} parent=19 // pred_check_branch
          %504 = sbr.rel (%p502) target = $region52
        $region51: #{part_graph_forward.1} parent=19 // pred_region
          %p505 = scmp.lt.s32.totalorder %s29, 5
          %s506 = scalar_select %p505, %s29, 5
          %s507 = smul.addr %s506, 2
          %s508 = smul.addr %s507, 8
          %s509 = scalar_lea.vmem %s8, %s508
        $region52: #{part_graph_forward.1} parent=19 // pred_fallthru
          _
        // Predicated region
        $region53: #{part_graph_forward.1} parent=19 // pred_check
          %p510 = pneg %p259
        $region54: #{part_graph_forward.1} parent=19 // pred_check_branch
          %512 = sbr.rel (%p510) target = $region56
        $region55: #{part_graph_forward.1} parent=19 // pred_region
          %p513 = scmp.lt.s32.totalorder %s29, 5
          %s514 = scalar_select %p513, %s29, 5
          %s515 = smul.addr %s514, 2
          %s516 = smul.addr %s515, 8
          %s517 = scalar_lea.vmem %s9, %s516
        $region56: #{part_graph_forward.1} parent=19 // pred_fallthru
          _
        // Predicated region
        $region57: #{part_graph_forward.1} parent=19 // pred_check
          %p518 = pneg %p285
        $region58: #{part_graph_forward.1} parent=19 // pred_check_branch
          %520 = sbr.rel (%p518) target = $region60
        $region59: #{part_graph_forward.1} parent=19 // pred_region
          %p521 = scmp.lt.s32.totalorder %s29, 5
          %s522 = scalar_select %p521, %s29, 5
          %s523 = smul.addr %s522, 2
          %s524 = smul.addr %s523, 8
          %s525 = scalar_lea.vmem %s10, %s524
        $region60: #{part_graph_forward.1} parent=19 // pred_fallthru
          _
        // Predicated region
        $region61: #{part_graph_forward.1} parent=19 // pred_check
          %p526 = pneg %p311
        $region62: #{part_graph_forward.1} parent=19 // pred_check_branch
          %528 = sbr.rel (%p526) target = $region64
        $region63: #{part_graph_forward.1} parent=19 // pred_region
          %p529 = scmp.lt.s32.totalorder %s29, 5
          %s530 = scalar_select %p529, %s29, 5
          %s531 = smul.addr %s530, 8
          %s532 = scalar_lea.vmem %s11, %s531
        $region64: #{part_graph_forward.1} parent=19 // pred_fallthru
          _
        // Predicated region
        $region65: #{part_graph_forward.1} parent=19 // pred_check
          %p533 = pneg %p337
        $region66: #{part_graph_forward.1} parent=19 // pred_check_branch
          %535 = sbr.rel (%p533) target = $region68
        $region67: #{part_graph_forward.1} parent=19 // pred_region
          %p536 = scmp.lt.s32.totalorder %s29, 5
          %s537 = scalar_select %p536, %s29, 5
          %s538 = smul.addr %s537, 8
          %s539 = scalar_lea.vmem %s12, %s538
        $region68: #{part_graph_forward.1} parent=19 // pred_fallthru
          _
      $region20: #{part_graph_forward.1} parent=5 // pred_fallthru
        _
      %p540 = scmp.le.s32.totalorder 1, %s29
      %p541 = scmp.lt.s32.totalorder %s29, 7
      %p542 = pnand %p540, %p541
      %p543 = pneg %p542
      // Predicated region
      $region69: #{part_graph_forward.1} parent=5 // pred_check
        _
      $region70: #{part_graph_forward.1} parent=5 // pred_check_branch
        %545 = sbr.rel (%p542) target = $region72
      $region71: #{part_graph_forward.1} parent=5 // pred_region
        %s546 = ssub.s32 %s29, 1
        // Predicated region
        $region73: #{part_graph_forward.1} parent=71 // pred_check
          %p547 = pneg %p364
        $region74: #{part_graph_forward.1} parent=71 // pred_check_branch
          %549 = sbr.rel (%p547) target = $region76
        $region75: #{part_graph_forward.1} parent=71 // pred_region
          %550 = dma.done [#allocation6], 128
        $region76: #{part_graph_forward.1} parent=71 // pred_fallthru
          _
        %551 = sfence
        %s552 = sld [smem:[#allocation4 + %s34]]
        %p553 = scmp.lt.s32.totalorder %s552, 1
        %s554 = scalar_select %p553, %s552, 1
        %s555 = smul.addr %s554, 4
        %s556 = smul.addr %s555, 8
        %s557 = scalar_lea.vmem %s1, %s556
        %p558 = pneg %p57
        %p559 = pneg %p54
        %p560 = scmp.lt.s32.totalorder %s34, 5
        %s561 = scalar_select %p560, %s34, 5
        %s562 = smul.addr %s561, 4
        %s563 = smul.addr %s562, 8
        %s564 = scalar_lea.vmem %s2, %s563
        %p565 = pneg %p83
        %p566 = pneg %p80
        %p567 = scmp.lt.s32.totalorder %s34, 5
        %s568 = scalar_select %p567, %s34, 5
        %s569 = smul.addr %s568, 2
        %s570 = smul.addr %s569, 8
        %s571 = scalar_lea.vmem %s3, %s570
        %p572 = pneg %p109
        %p573 = pneg %p106
        %p574 = scmp.lt.s32.totalorder %s34, 5
        %s575 = scalar_select %p574, %s34, 5
        %s576 = smul.addr %s575, 2
        %s577 = smul.addr %s576, 8
        %s578 = scalar_lea.vmem %s4, %s577
        %p579 = pneg %p135
        %p580 = pneg %p132
        %p581 = scmp.lt.s32.totalorder %s34, 5
        %s582 = scalar_select %p581, %s34, 5
        %s583 = smul.addr %s582, 2
        %s584 = smul.addr %s583, 8
        %s585 = scalar_lea.vmem %s5, %s584
        %p586 = pneg %p161
        %p587 = pneg %p158
        %p588 = scmp.lt.s32.totalorder %s34, 5
        %s589 = scalar_select %p588, %s34, 5
        %s590 = scalar_lea.vmem %s6, %s589
        %p591 = pneg %p187
        %p592 = pneg %p184
        %p593 = scmp.lt.s32.totalorder %s34, 5
        %s594 = scalar_select %p593, %s34, 5
        %s595 = smul.addr %s594, 4
        %s596 = smul.addr %s595, 8
        %s597 = scalar_lea.vmem %s7, %s596
        %p598 = pneg %p213
        %p599 = pneg %p210
        %p600 = scmp.lt.s32.totalorder %s34, 5
        %s601 = scalar_select %p600, %s34, 5
        %s602 = smul.addr %s601, 2
        %s603 = smul.addr %s602, 8
        %s604 = scalar_lea.vmem %s8, %s603
        %p605 = pneg %p239
        %p606 = pneg %p236
        %p607 = scmp.lt.s32.totalorder %s34, 5
        %s608 = scalar_select %p607, %s34, 5
        %s609 = smul.addr %s608, 2
        %s610 = smul.addr %s609, 8
        %s611 = scalar_lea.vmem %s9, %s610
        %p612 = pneg %p265
        %p613 = pneg %p262
        %p614 = scmp.lt.s32.totalorder %s34, 5
        %s615 = scalar_select %p614, %s34, 5
        %s616 = smul.addr %s615, 2
        %s617 = smul.addr %s616, 8
        %s618 = scalar_lea.vmem %s10, %s617
        %p619 = pneg %p291
        %p620 = pneg %p288
        %p621 = scmp.lt.s32.totalorder %s34, 5
        %s622 = scalar_select %p621, %s34, 5
        %s623 = smul.addr %s622, 8
        %s624 = scalar_lea.vmem %s11, %s623
        %p625 = pneg %p317
        %p626 = pneg %p314
        %p627 = scmp.lt.s32.totalorder %s34, 5
        %s628 = scalar_select %p627, %s34, 5
        %s629 = smul.addr %s628, 8
        %s630 = scalar_lea.vmem %s12, %s629
        %p631 = pneg %p343
        %p632 = pneg %p340
        %p633 = pneg %p364
        %p634 = pneg %p361
        %p635 = pneg %p390
        %p636 = pneg %p387
        %p637 = scmp.lt.s32.totalorder %s34, 5
        %s638 = scalar_select %p637, %s34, 5
        %s639 = smul.addr %s638, 4
        %s640 = scalar_lea.vmem %s14, %s639
        %p641 = pneg %p416
        %p642 = pneg %p413
        %p643 = scmp.lt.s32.totalorder %s34, 5
        %s644 = scalar_select %p643, %s34, 5
        %s645 = smul.addr %s644, 4
        %s646 = smul.addr %s645, 8
        %s647 = scalar_lea.vmem %s15, %s646
        %s648 = sld [smem:[#allocation4 + %s34]]
        %p649 = scmp.lt.s32.totalorder %s648, 1
        %s650 = scalar_select %p649, %s648, 1
        %s651 = smul.addr %s650, 4
        %s652 = smul.addr %s651, 8
        %s653 = scalar_lea.vmem %s1, %s652
        %s654 = sld [smem:[#allocation4 + %s34]]
        %p655 = scmp.lt.s32.totalorder %s34, 5
        %s656 = scalar_select %p655, %s34, 5
        %s657 = smul.addr %s656, 4
        %s658 = smul.addr %s657, 8
        %s659 = scalar_lea.vmem %s2, %s658
        %p660 = scmp.lt.s32.totalorder %s34, 5
        %s661 = scalar_select %p660, %s34, 5
        %s662 = smul.addr %s661, 2
        %s663 = smul.addr %s662, 8
        %s664 = scalar_lea.vmem %s3, %s663
        %p665 = scmp.lt.s32.totalorder %s34, 5
        %s666 = scalar_select %p665, %s34, 5
        %s667 = smul.addr %s666, 2
        %s668 = smul.addr %s667, 8
        %s669 = scalar_lea.vmem %s4, %s668
        %p670 = scmp.lt.s32.totalorder %s34, 5
        %s671 = scalar_select %p670, %s34, 5
        %s672 = smul.addr %s671, 2
        %s673 = smul.addr %s672, 8
        %s674 = scalar_lea.vmem %s5, %s673
        %p675 = scmp.lt.s32.totalorder %s34, 5
        %s676 = scalar_select %p675, %s34, 5
        %s677 = scalar_lea.vmem %s6, %s676
        %p678 = scmp.lt.s32.totalorder %s34, 5
        %s679 = scalar_select %p678, %s34, 5
        %s680 = smul.addr %s679, 4
        %s681 = smul.addr %s680, 8
        %s682 = scalar_lea.vmem %s7, %s681
        %p683 = scmp.lt.s32.totalorder %s34, 5
        %s684 = scalar_select %p683, %s34, 5
        %s685 = smul.addr %s684, 2
        %s686 = smul.addr %s685, 8
        %s687 = scalar_lea.vmem %s8, %s686
        %p688 = scmp.lt.s32.totalorder %s34, 5
        %s689 = scalar_select %p688, %s34, 5
        %s690 = smul.addr %s689, 2
        %s691 = smul.addr %s690, 8
        %s692 = scalar_lea.vmem %s9, %s691
        %p693 = scmp.lt.s32.totalorder %s34, 5
        %s694 = scalar_select %p693, %s34, 5
        %s695 = smul.addr %s694, 2
        %s696 = smul.addr %s695, 8
        %s697 = scalar_lea.vmem %s10, %s696
        %p698 = scmp.lt.s32.totalorder %s34, 5
        %s699 = scalar_select %p698, %s34, 5
        %s700 = smul.addr %s699, 8
        %s701 = scalar_lea.vmem %s11, %s700
        %p702 = scmp.lt.s32.totalorder %s34, 5
        %s703 = scalar_select %p702, %s34, 5
        %s704 = smul.addr %s703, 8
        %s705 = scalar_lea.vmem %s12, %s704
        %p706 = scmp.lt.s32.totalorder %s34, 5
        %s707 = scalar_select %p706, %s34, 5
        %s708 = smul.addr %s707, 4
        %s709 = scalar_lea.vmem %s14, %s708
        %p710 = scmp.lt.s32.totalorder %s34, 5
        %s711 = scalar_select %p710, %s34, 5
        %s712 = smul.addr %s711, 4
        %s713 = smul.addr %s712, 8
        %s714 = scalar_lea.vmem %s15, %s713
        %v715 = vld [vmem:[%s653] sm:$0xff]
        %v716 = vld [vmem:[%s653 + $0x8] sm:$0xff]
        %v717 = vld [vmem:[%s653 + $0x10] sm:$0xff]
        %v718 = vld [vmem:[%s653 + $0x18] sm:$0xff]
        %v719 = vld [vmem:[%s659] sm:$0xff]
        %v720 = vld [vmem:[%s659 + $0x8] sm:$0xff]
        %v721 = vld [vmem:[%s659 + $0x10] sm:$0xff]
        %v722 = vld [vmem:[%s659 + $0x18] sm:$0xff]
        %v723 = vld [vmem:[%s664] sm:$0xff]
        %v724 = vld [vmem:[%s664 + $0x8] sm:$0xff]
        %vm725 = vcmask 130048
        %v727 = vsel %vm725, %v723, 0
        %v730 = vsel %vm725, %v724, 0
        %732 = vmatprep.subr.mxu0 %v716
        %733 = vmatpush1.msra.mxu0 %v715
        %734 = vmatprep.subr.mxu0 %v720
        %735 = vmatpush1.msra.mxu0 %v719
        %736 = vmatprep.subr.mxu0 0.0
        %737 = vmatpush1.msra.mxu0 0.0
        %738 = vmatprep.subr.mxu0 0.0
        %739 = vmatpush1.msra.mxu0 0.0
        %740 = vmatprep.subr.mxu0 0.0
        %741 = vmatpush1.msra.mxu0 0.0
        %742 = vmatprep.subr.mxu0 0.0
        %743 = vmatpush1.msra.mxu0 0.0
        %744 = vmatprep.subr.mxu0 0.0
        %745 = vmatpush1.msra.mxu0 0.0
        %746 = vmatprep.subr.mxu0 0.0
        %747 = vmatpush1.msra.mxu0 0.0
        %748 = vmatprep.subr.mxu0 0.0
        %749 = vmatpush1.msra.mxu0 0.0
        %750 = vmatprep.subr.mxu0 0.0
        %751 = vmatpush1.msra.mxu0 0.0
        %752 = vmatprep.subr.mxu0 0.0
        %753 = vmatpush1.msra.mxu0 0.0
        %754 = vmatprep.subr.mxu0 0.0
        %755 = vmatpush1.msra.mxu0 0.0
        %756 = vmatprep.subr.mxu0 0.0
        %757 = vmatpush1.msra.mxu0 0.0
        %758 = vmatprep.subr.mxu0 0.0
        %759 = vmatpush1.msra.mxu0 0.0
        %760 = vmatprep.subr.mxu0 0.0
        %761 = vmatpush1.msra.mxu0 0.0
        %762 = vmatprep.subr.mxu0 0.0
        %763 = vmatpush1.msra.mxu0 0.0
        %764 = vmatprep.subr.mxu0 0.0
        %765 = vmatpush1.msra.mxu0 0.0
        %766 = vmatprep.subr.mxu0 0.0
        %767 = vmatpush1.msra.mxu0 0.0
        %768 = vmatprep.subr.mxu0 0.0
        %769 = vmatpush1.msra.mxu0 0.0
        %770 = vmatprep.subr.mxu0 0.0
        %771 = vmatpush1.msra.mxu0 0.0
        %772 = vmatprep.subr.mxu0 0.0
        %773 = vmatpush1.msra.mxu0 0.0
        %774 = vmatprep.subr.mxu0 0.0
        %775 = vmatpush1.msra.mxu0 0.0
        %776 = vmatprep.subr.mxu0 0.0
        %777 = vmatpush1.msra.mxu0 0.0
        %778 = vmatprep.subr.mxu0 0.0
        %779 = vmatpush1.msra.mxu0 0.0
        %780 = vmatprep.subr.mxu0 0.0
        %781 = vmatpush1.msra.mxu0 0.0
        %782 = vmatprep.subr.mxu0 0.0
        %783 = vmatpush1.msra.mxu0 0.0
        %784 = vmatprep.subr.mxu0 0.0
        %785 = vmatpush1.msra.mxu0 0.0
        %786 = vmatprep.subr.mxu0 0.0
        %787 = vmatpush1.msra.mxu0 0.0
        %788 = vmatprep.subr.mxu0 0.0
        %789 = vmatpush1.msra.mxu0 0.0
        %790 = vmatprep.subr.mxu0 0.0
        %791 = vmatpush1.msra.mxu0 0.0
        %792 = vmatprep.subr.mxu0 0.0
        %793 = vmatpush1.msra.mxu0 0.0
        %794 = vmatprep.subr.mxu0 0.0
        %795 = vmatpush1.msra.mxu0 0.0
        %796 = vmatprep.mubr.f32.mxu0 0.0
        %797 = vmatmul.mubr.f32.gmra.mrb[0].mxu0 %v727
        %v798 = vpop.f32.mrb[0].mxu0
        %v799 = vadd.f32 0.0, %v798
        %v800 = vpop.f32.mrb[0].mxu0
        %v801 = vadd.f32 0.0, %v800
        %802 = vmatprep.mubr.f32.mxu0 0.0
        %803 = vmatmul.mubr.f32.gmra.mrb[0].mxu0 %v730
        %v804 = vpop.f32.mrb[0].mxu0
        %v805 = vadd.f32 0.0, %v804
        %v806 = vpop.f32.mrb[0].mxu0
        %v807 = vadd.f32 0.0, %v806
        %808 = vdwg.mxu0
        %809 = vmatprep.subr.mxu0 %v718
        %810 = vmatpush1.msra.mxu0 %v717
        %811 = vmatprep.subr.mxu0 %v722
        %812 = vmatpush1.msra.mxu0 %v721
        %813 = vmatprep.subr.mxu0 0.0
        %814 = vmatpush1.msra.mxu0 0.0
        %815 = vmatprep.subr.mxu0 0.0
        %816 = vmatpush1.msra.mxu0 0.0
        %817 = vmatprep.subr.mxu0 0.0
        %818 = vmatpush1.msra.mxu0 0.0
        %819 = vmatprep.subr.mxu0 0.0
        %820 = vmatpush1.msra.mxu0 0.0
        %821 = vmatprep.subr.mxu0 0.0
        %822 = vmatpush1.msra.mxu0 0.0
        %823 = vmatprep.subr.mxu0 0.0
        %824 = vmatpush1.msra.mxu0 0.0
        %825 = vmatprep.subr.mxu0 0.0
        %826 = vmatpush1.msra.mxu0 0.0
        %827 = vmatprep.subr.mxu0 0.0
        %828 = vmatpush1.msra.mxu0 0.0
        %829 = vmatprep.subr.mxu0 0.0
        %830 = vmatpush1.msra.mxu0 0.0
        %831 = vmatprep.subr.mxu0 0.0
        %832 = vmatpush1.msra.mxu0 0.0
        %833 = vmatprep.subr.mxu0 0.0
        %834 = vmatpush1.msra.mxu0 0.0
        %835 = vmatprep.subr.mxu0 0.0
        %836 = vmatpush1.msra.mxu0 0.0
        %837 = vmatprep.subr.mxu0 0.0
        %838 = vmatpush1.msra.mxu0 0.0
        %839 = vmatprep.subr.mxu0 0.0
        %840 = vmatpush1.msra.mxu0 0.0
        %841 = vmatprep.subr.mxu0 0.0
        %842 = vmatpush1.msra.mxu0 0.0
        %843 = vmatprep.subr.mxu0 0.0
        %844 = vmatpush1.msra.mxu0 0.0
        %845 = vmatprep.subr.mxu0 0.0
        %846 = vmatpush1.msra.mxu0 0.0
        %847 = vmatprep.subr.mxu0 0.0
        %848 = vmatpush1.msra.mxu0 0.0
        %849 = vmatprep.subr.mxu0 0.0
        %850 = vmatpush1.msra.mxu0 0.0
        %851 = vmatprep.subr.mxu0 0.0
        %852 = vmatpush1.msra.mxu0 0.0
        %853 = vmatprep.subr.mxu0 0.0
        %854 = vmatpush1.msra.mxu0 0.0
        %855 = vmatprep.subr.mxu0 0.0
        %856 = vmatpush1.msra.mxu0 0.0
        %857 = vmatprep.subr.mxu0 0.0
        %858 = vmatpush1.msra.mxu0 0.0
        %859 = vmatprep.subr.mxu0 0.0
        %860 = vmatpush1.msra.mxu0 0.0
        %861 = vmatprep.subr.mxu0 0.0
        %862 = vmatpush1.msra.mxu0 0.0
        %863 = vmatprep.subr.mxu0 0.0
        %864 = vmatpush1.msra.mxu0 0.0
        %865 = vmatprep.subr.mxu0 0.0
        %866 = vmatpush1.msra.mxu0 0.0
        %867 = vmatprep.subr.mxu0 0.0
        %868 = vmatpush1.msra.mxu0 0.0
        %869 = vmatprep.subr.mxu0 0.0
        %870 = vmatpush1.msra.mxu0 0.0
        %871 = vmatprep.subr.mxu0 0.0
        %872 = vmatpush1.msra.mxu0 0.0
        %873 = vmatprep.mubr.f32.mxu0 0.0
        %874 = vmatmul.mubr.f32.gmra.mrb[0].mxu0 %v727
        %v875 = vpop.f32.mrb[0].mxu0
        %v876 = vadd.f32 0.0, %v875
        %v877 = vpop.f32.mrb[0].mxu0
        %v878 = vadd.f32 0.0, %v877
        %879 = vmatprep.mubr.f32.mxu0 0.0
        %880 = vmatmul.mubr.f32.gmra.mrb[0].mxu0 %v730
        %v881 = vpop.f32.mrb[0].mxu0
        %v882 = vadd.f32 0.0, %v881
        %v883 = vpop.f32.mrb[0].mxu0
        %v884 = vadd.f32 0.0, %v883
        %885 = vdwg.mxu0
        %v886 = vld [vmem:[%s669] sm:$0xff]
        %v887 = vld [vmem:[%s669 + $0x8] sm:$0xff]
        %889 = vset.pattern.permute.xlu0 0
        %890 = vperm.xlu0 %889, %v886
        %v891 = vpop.permute.xlu0 %890
        %894 = vset.pattern.permute.xlu0 0
        %895 = vperm.xlu0 %894, %v887
        %v896 = vpop.permute.xlu0 %895
        %v898 = vmul.f32 %v799, %v891
        %v899 = vmul.f32 %v801, %v891
        %v900 = vmul.f32 %v876, %v891
        %v901 = vmul.f32 %v878, %v891
        %v902 = vmul.f32 %v805, %v896
        %v903 = vmul.f32 %v807, %v896
        %v904 = vmul.f32 %v882, %v896
        %v905 = vmul.f32 %v884, %v896
        %v906 = vld [vmem:[%s674] sm:$0xff]
        %v907 = vld [vmem:[%s674 + $0x8] sm:$0xff]
        %909 = vset.pattern.permute.xlu0 0
        %910 = vperm.xlu0 %909, %v906
        %v911 = vpop.permute.xlu0 %910
        %914 = vset.pattern.permute.xlu0 0
        %915 = vperm.xlu0 %914, %v907
        %v916 = vpop.permute.xlu0 %915
        %v918 = vadd.f32 %v898, %v911
        %v919 = vadd.f32 %v899, %v911
        %v920 = vadd.f32 %v900, %v911
        %v921 = vadd.f32 %v901, %v911
        %v922 = vadd.f32 %v902, %v916
        %v923 = vadd.f32 %v903, %v916
        %v924 = vadd.f32 %v904, %v916
        %v925 = vadd.f32 %v905, %v916
        %vm926 = vcmp.ge.f32.partialorder %v918, 0.0
        %vm927 = vcmp.ge.f32.partialorder %v919, 0.0
        %vm928 = vcmp.ge.f32.partialorder %v920, 0.0
        %vm929 = vcmp.ge.f32.partialorder %v921, 0.0
        %vm930 = vcmp.ge.f32.partialorder %v922, 0.0
        %vm931 = vcmp.ge.f32.partialorder %v923, 0.0
        %vm932 = vcmp.ge.f32.partialorder %v924, 0.0
        %vm933 = vcmp.ge.f32.partialorder %v925, 0.0
        %v934 = vmul.f32 %v918, 0.01
        %v935 = vmul.f32 %v919, 0.01
        %v936 = vmul.f32 %v920, 0.01
        %v937 = vmul.f32 %v921, 0.01
        %v938 = vmul.f32 %v922, 0.01
        %v939 = vmul.f32 %v923, 0.01
        %v940 = vmul.f32 %v924, 0.01
        %v941 = vmul.f32 %v925, 0.01
        %v942 = vsel %vm926, %v918, %v934
        %v943 = vsel %vm927, %v919, %v935
        %v944 = vsel %vm928, %v920, %v936
        %v945 = vsel %vm929, %v921, %v937
        %v946 = vsel %vm930, %v922, %v938
        %v947 = vsel %vm931, %v923, %v939
        %v948 = vsel %vm932, %v924, %v940
        %v949 = vsel %vm933, %v925, %v941
        %v950 = vld [vmem:[%s677] sm:$0x1]
        %s951 = smul.u32 %s34, 128
        %s952 = sld [smem:[#allocation5 + %s951]]
        %v953 = vstv %s952
        %v955 = vsel %vm725, %v950, 0
        %957 = vmatprep.subr.mxu0 %v943
        %958 = vmatpush1.msra.mxu0 %v942
        %959 = vmatprep.subr.mxu0 %v947
        %960 = vmatpush1.msra.mxu0 %v946
        %961 = vmatprep.subr.mxu0 0.0
        %962 = vmatpush1.msra.mxu0 0.0
        %963 = vmatprep.subr.mxu0 0.0
        %964 = vmatpush1.msra.mxu0 0.0
        %965 = vmatprep.subr.mxu0 0.0
        %966 = vmatpush1.msra.mxu0 0.0
        %967 = vmatprep.subr.mxu0 0.0
        %968 = vmatpush1.msra.mxu0 0.0
        %969 = vmatprep.subr.mxu0 0.0
        %970 = vmatpush1.msra.mxu0 0.0
        %971 = vmatprep.subr.mxu0 0.0
        %972 = vmatpush1.msra.mxu0 0.0
        %973 = vmatprep.subr.mxu0 0.0
        %974 = vmatpush1.msra.mxu0 0.0
        %975 = vmatprep.subr.mxu0 0.0
        %976 = vmatpush1.msra.mxu0 0.0
        %977 = vmatprep.subr.mxu0 0.0
        %978 = vmatpush1.msra.mxu0 0.0
        %979 = vmatprep.subr.mxu0 0.0
        %980 = vmatpush1.msra.mxu0 0.0
        %981 = vmatprep.subr.mxu0 0.0
        %982 = vmatpush1.msra.mxu0 0.0
        %983 = vmatprep.subr.mxu0 0.0
        %984 = vmatpush1.msra.mxu0 0.0
        %985 = vmatprep.subr.mxu0 0.0
        %986 = vmatpush1.msra.mxu0 0.0
        %987 = vmatprep.subr.mxu0 0.0
        %988 = vmatpush1.msra.mxu0 0.0
        %989 = vmatprep.subr.mxu0 0.0
        %990 = vmatpush1.msra.mxu0 0.0
        %991 = vmatprep.subr.mxu0 0.0
        %992 = vmatpush1.msra.mxu0 0.0
        %993 = vmatprep.subr.mxu0 0.0
        %994 = vmatpush1.msra.mxu0 0.0
        %995 = vmatprep.subr.mxu0 0.0
        %996 = vmatpush1.msra.mxu0 0.0
        %997 = vmatprep.subr.mxu0 0.0
        %998 = vmatpush1.msra.mxu0 0.0
        %999 = vmatprep.subr.mxu0 0.0
        %1000 = vmatpush1.msra.mxu0 0.0
        %1001 = vmatprep.subr.mxu0 0.0
        %1002 = vmatpush1.msra.mxu0 0.0
        %1003 = vmatprep.subr.mxu0 0.0
        %1004 = vmatpush1.msra.mxu0 0.0
        %1005 = vmatprep.subr.mxu0 0.0
        %1006 = vmatpush1.msra.mxu0 0.0
        %1007 = vmatprep.subr.mxu0 0.0
        %1008 = vmatpush1.msra.mxu0 0.0
        %1009 = vmatprep.subr.mxu0 0.0
        %1010 = vmatpush1.msra.mxu0 0.0
        %1011 = vmatprep.subr.mxu0 0.0
        %1012 = vmatpush1.msra.mxu0 0.0
        %1013 = vmatprep.subr.mxu0 0.0
        %1014 = vmatpush1.msra.mxu0 0.0
        %1015 = vmatprep.subr.mxu0 0.0
        %1016 = vmatpush1.msra.mxu0 0.0
        %1017 = vmatprep.subr.mxu0 0.0
        %1018 = vmatpush1.msra.mxu0 0.0
        %1019 = vmatprep.subr.mxu0 0.0
        %1020 = vmatpush1.msra.mxu0 0.0
        %1021 = vmatprep.mubr.f32.mxu0 0.0
        %1022 = vmatmul.mubr.f32.gmra.mrb[0].mxu0 %v955
        %v1023 = vpop.f32.mrb[0].mxu0
        %v1024 = vadd.f32 %v953, %v1023
        %v1025 = vpop.f32.mrb[0].mxu0
        %v1026 = vadd.f32 %v953, %v1025
        %1027 = vdwg.mxu0
        %1028 = vmatprep.subr.mxu0 %v945
        %1029 = vmatpush1.msra.mxu0 %v944
        %1030 = vmatprep.subr.mxu0 %v949
        %1031 = vmatpush1.msra.mxu0 %v948
        %1032 = vmatprep.subr.mxu0 0.0
        %1033 = vmatpush1.msra.mxu0 0.0
        %1034 = vmatprep.subr.mxu0 0.0
        %1035 = vmatpush1.msra.mxu0 0.0
        %1036 = vmatprep.subr.mxu0 0.0
        %1037 = vmatpush1.msra.mxu0 0.0
        %1038 = vmatprep.subr.mxu0 0.0
        %1039 = vmatpush1.msra.mxu0 0.0
        %1040 = vmatprep.subr.mxu0 0.0
        %1041 = vmatpush1.msra.mxu0 0.0
        %1042 = vmatprep.subr.mxu0 0.0
        %1043 = vmatpush1.msra.mxu0 0.0
        %1044 = vmatprep.subr.mxu0 0.0
        %1045 = vmatpush1.msra.mxu0 0.0
        %1046 = vmatprep.subr.mxu0 0.0
        %1047 = vmatpush1.msra.mxu0 0.0
        %1048 = vmatprep.subr.mxu0 0.0
        %1049 = vmatpush1.msra.mxu0 0.0
        %1050 = vmatprep.subr.mxu0 0.0
        %1051 = vmatpush1.msra.mxu0 0.0
        %1052 = vmatprep.subr.mxu0 0.0
        %1053 = vmatpush1.msra.mxu0 0.0
        %1054 = vmatprep.subr.mxu0 0.0
        %1055 = vmatpush1.msra.mxu0 0.0
        %1056 = vmatprep.subr.mxu0 0.0
        %1057 = vmatpush1.msra.mxu0 0.0
        %1058 = vmatprep.subr.mxu0 0.0
        %1059 = vmatpush1.msra.mxu0 0.0
        %1060 = vmatprep.subr.mxu0 0.0
        %1061 = vmatpush1.msra.mxu0 0.0
        %1062 = vmatprep.subr.mxu0 0.0
        %1063 = vmatpush1.msra.mxu0 0.0
        %1064 = vmatprep.subr.mxu0 0.0
        %1065 = vmatpush1.msra.mxu0 0.0
        %1066 = vmatprep.subr.mxu0 0.0
        %1067 = vmatpush1.msra.mxu0 0.0
        %1068 = vmatprep.subr.mxu0 0.0
        %1069 = vmatpush1.msra.mxu0 0.0
        %1070 = vmatprep.subr.mxu0 0.0
        %1071 = vmatpush1.msra.mxu0 0.0
        %1072 = vmatprep.subr.mxu0 0.0
        %1073 = vmatpush1.msra.mxu0 0.0
        %1074 = vmatprep.subr.mxu0 0.0
        %1075 = vmatpush1.msra.mxu0 0.0
        %1076 = vmatprep.subr.mxu0 0.0
        %1077 = vmatpush1.msra.mxu0 0.0
        %1078 = vmatprep.subr.mxu0 0.0
        %1079 = vmatpush1.msra.mxu0 0.0
        %1080 = vmatprep.subr.mxu0 0.0
        %1081 = vmatpush1.msra.mxu0 0.0
        %1082 = vmatprep.subr.mxu0 0.0
        %1083 = vmatpush1.msra.mxu0 0.0
        %1084 = vmatprep.subr.mxu0 0.0
        %1085 = vmatpush1.msra.mxu0 0.0
        %1086 = vmatprep.subr.mxu0 0.0
        %1087 = vmatpush1.msra.mxu0 0.0
        %1088 = vmatprep.subr.mxu0 0.0
        %1089 = vmatpush1.msra.mxu0 0.0
        %1090 = vmatprep.subr.mxu0 0.0
        %1091 = vmatpush1.msra.mxu0 0.0
        %1092 = vmatprep.mubr.f32.mxu0 0.0
        %1093 = vmatmul.mubr.f32.gmra.mrb[0].mxu0 %v955
        %v1094 = vpop.f32.mrb[0].mxu0
        %v1095 = vadd.f32 %v953, %v1094
        %v1096 = vpop.f32.mrb[0].mxu0
        %v1097 = vadd.f32 %v953, %v1096
        %1098 = vdwg.mxu0
        %v1099 = vsub.f32 0.0, %v1024
        %v1100 = vsub.f32 0.0, %v1026
        %v1101 = vsub.f32 0.0, %v1095
        %v1102 = vsub.f32 0.0, %v1097
        %v1103 = vmul.f32 %v1099, 1.442695
        %v1104 = vpow.pop %v1103
        %v1105 = vmul.f32 %v1100, 1.442695
        %v1106 = vpow.pop %v1105
        %v1107 = vmul.f32 %v1101, 1.442695
        %v1108 = vpow.pop %v1107
        %v1109 = vmul.f32 %v1102, 1.442695
        %v1110 = vpow.pop %v1109
        %v1111 = vadd.f32 %v1104, 1.0
        %v1112 = vadd.f32 %v1106, 1.0
        %v1113 = vadd.f32 %v1108, 1.0
        %v1114 = vadd.f32 %v1110, 1.0
        %v1115 = vrcp.pop %v1111
        %v1116 = vmul.f32 1.0, %v1115
        %v1117 = vrcp.pop %v1112
        %v1118 = vmul.f32 1.0, %v1117
        %v1119 = vrcp.pop %v1113
        %v1120 = vmul.f32 1.0, %v1119
        %v1121 = vrcp.pop %v1114
        %v1122 = vmul.f32 1.0, %v1121
        %v1127 = vcombine.low %v1116, %v1118
        %v1128 = vcombine.low %v1120, %v1122
        %v1130 = vunpack.c.l.s4 1966171168
        %v1131 = vunpack.c.0.s8 %v1130
        %v1132 = vlaneseq
        %v1133 = vshrl.u32 %v1132, 7
        %v1134 = vsub.s32 %v1131, %v1133
        %v1135 = vrot.slane %v1127, %v1134
        %v1137 = vunpack.c.l.s4 1966171168
        %v1138 = vunpack.c.0.s8 %v1137
        %v1139 = vlaneseq
        %v1140 = vshrl.u32 %v1139, 7
        %v1141 = vsub.s32 %v1138, %v1140
        %v1142 = vrot.slane %v1128, %v1141
        %v1143 = vcombine.low %v1135, %v1142
        %v1145 = vunpack.c.l.s4 1966171168
        %v1146 = vunpack.c.0.s8 %v1145
        %v1147 = vlaneseq
        %v1148 = vshrl.u32 %v1147, 7
        %v1149 = vsub.s32 %v1146, %v1148
        %v1150 = vrot.slane %v1143, %v1149
        %v1152 = vlaneseq
        %vm1153 = vcmp.ge.s32.totalorder %v1152, 0
        %vm1154 = vcmp.lt.s32.totalorder %v1152, 512
        %vm1155 = vmand %vm1153, %vm1154
        %1156 = vst.msk [vmem:[%s709] sm:$0xf] %vm1155, %v1150
        %v1157 = vlaneseq
        %v1158 = vshrl.u32 %v1157, 7
        %v1159 = vsub.s32 0, %v1158
        %v1160 = vrot.slane %v1116, %v1159
        %v1161 = vlaneseq
        %v1162 = vshrl.u32 %v1161, 7
        %v1163 = vsub.s32 0, %v1162
        %v1164 = vrot.slane %v1118, %v1163
        %v1165 = vlaneseq
        %v1166 = vshrl.u32 %v1165, 7
        %v1167 = vsub.s32 0, %v1166
        %v1168 = vrot.slane %v1120, %v1167
        %v1169 = vlaneseq
        %v1170 = vshrl.u32 %v1169, 7
        %v1171 = vsub.s32 0, %v1170
        %v1172 = vrot.slane %v1122, %v1171
        %v1173 = vmul.f32 %v1160, %v715
        %v1174 = vmul.f32 %v1164, %v716
        %v1175 = vmul.f32 %v1168, %v717
        %v1176 = vmul.f32 %v1172, %v718
        %v1177 = vlaneseq
        %v1178 = vand.u32 %v1177, 127
        %v1179 = vadd.s32 %v1178, 128
        %v1180 = vadd.s32 %v1178, 256
        %v1181 = vadd.s32 %v1178, 384
        %v1182 = vand.u32 %v1178, 255
        %v1183 = vand.u32 %v1179, 255
        %v1184 = vand.u32 %v1180, 255
        %v1185 = vand.u32 %v1181, 255
        %v1186 = vand.u32 %v1182, 15
        %v1187 = vand.u32 %v1183, 15
        %v1188 = vand.u32 %v1184, 15
        %v1189 = vand.u32 %v1185, 15
        %v1190 = vshra.s32 %v1182, 4
        %v1191 = vshra.s32 %v1183, 4
        %v1192 = vshra.s32 %v1184, 4
        %v1193 = vshra.s32 %v1185, 4
        %vm1194 = vcmp.ge.s32.totalorder %v1186, 1
        %vm1195 = vcmp.ge.s32.totalorder %v1187, 1
        %vm1196 = vcmp.ge.s32.totalorder %v1188, 1
        %vm1197 = vcmp.ge.s32.totalorder %v1189, 1
        %vm1198 = vcmp.lt.s32.totalorder %v1186, 15
        %vm1199 = vcmp.lt.s32.totalorder %v1187, 15
        %vm1200 = vcmp.lt.s32.totalorder %v1188, 15
        %vm1201 = vcmp.lt.s32.totalorder %v1189, 15
        %vm1202 = vcmp.ge.s32.totalorder %v1190, 1
        %vm1203 = vcmp.ge.s32.totalorder %v1191, 1
        %vm1204 = vcmp.ge.s32.totalorder %v1192, 1
        %vm1205 = vcmp.ge.s32.totalorder %v1193, 1
        %vm1206 = vcmp.lt.s32.totalorder %v1190, 15
        %vm1207 = vcmp.lt.s32.totalorder %v1191, 15
        %vm1208 = vcmp.lt.s32.totalorder %v1192, 15
        %vm1209 = vcmp.lt.s32.totalorder %v1193, 15
        %1210 = vrot.lane.b32.xlu0 %v719, 17
        %v1211 = vpop.permute.xlu0 %1210
        %1212 = vrot.lane.b32.xlu0 %v1173, 17
        %v1213 = vpop.permute.xlu0 %1212
        %1214 = vrot.lane.b32.xlu0 %v720, 17
        %v1215 = vpop.permute.xlu0 %1214
        %1216 = vrot.lane.b32.xlu0 %v1174, 17
        %v1217 = vpop.permute.xlu0 %1216
        %1218 = vrot.lane.b32.xlu0 %v721, 17
        %v1219 = vpop.permute.xlu0 %1218
        %1220 = vrot.lane.b32.xlu0 %v1175, 17
        %v1221 = vpop.permute.xlu0 %1220
        %1222 = vrot.lane.b32.xlu0 %v722, 17
        %v1223 = vpop.permute.xlu0 %1222
        %1224 = vrot.lane.b32.xlu0 %v1176, 17
        %v1225 = vpop.permute.xlu0 %1224
        %vm1226 = vcmp.lt.s32.totalorder %v1178, 17
        %v1227 = vsel %vm1226, %v1219, %v1223
        %v1228 = vsel %vm1226, %v1221, %v1225
        %v1229 = vsel %vm1226, %v1215, %v1219
        %v1230 = vsel %vm1226, %v1217, %v1221
        %v1231 = vsel %vm1226, %v1211, %v1215
        %v1232 = vsel %vm1226, %v1213, %v1217
        %v1233 = vsel %vm1226, %v1223, %v1211
        %v1234 = vsel %vm1226, %v1225, %v1213
        %vm1235 = vmand %vm1202, %vm1194
        %vm1236 = vmand %vm1203, %vm1195
        %vm1237 = vmand %vm1204, %vm1196
        %vm1238 = vmand %vm1205, %vm1197
        %v1239 = vsel %vm1235, 1, 0
        %v1240 = vsel %vm1236, 1, 0
        %v1241 = vsel %vm1237, 1, 0
        %v1242 = vsel %vm1238, 1, 0
        %vm1243 = vcmp.eq.s32.totalorder %v1239, 1
        %vm1244 = vcmp.eq.s32.totalorder %v1240, 1
        %vm1245 = vcmp.eq.s32.totalorder %v1241, 1
        %vm1246 = vcmp.eq.s32.totalorder %v1242, 1
        %v1247 = vsel %vm1243, %v1233, 0.0
        %v1248 = vsel %vm1244, %v1231, 0.0
        %v1249 = vsel %vm1245, %v1229, 0.0
        %v1250 = vsel %vm1246, %v1227, 0.0
        %v1251 = vsel %vm1243, %v1234, 0.0
        %v1252 = vsel %vm1244, %v1232, 0.0
        %v1253 = vsel %vm1245, %v1230, 0.0
        %v1254 = vsel %vm1246, %v1228, 0.0
        %1255 = vst [vmem:[#allocation2] sm:$0xff] %v1247
        %1256 = vst [vmem:[#allocation2 + $0x8] sm:$0xff] %v1248
        %1257 = vst [vmem:[#allocation2 + $0x10] sm:$0xff] %v1249
        %1258 = vst [vmem:[#allocation2 + $0x18] sm:$0xff] %v1250
        %1259 = vst [vmem:[#allocation2 + $0x20] sm:$0xff] %v1251
        %1260 = vst [vmem:[#allocation2 + $0x28] sm:$0xff] %v1252
        %1261 = vst [vmem:[#allocation2 + $0x30] sm:$0xff] %v1253
        %1262 = vst [vmem:[#allocation2 + $0x38] sm:$0xff] %v1254
        %1263 = vrot.lane.b32.xlu0 %v719, 16
        %v1264 = vpop.permute.xlu0 %1263
        %1265 = vrot.lane.b32.xlu0 %v1173, 16
        %v1266 = vpop.permute.xlu0 %1265
        %1267 = vrot.lane.b32.xlu0 %v720, 16
        %v1268 = vpop.permute.xlu0 %1267
        %1269 = vrot.lane.b32.xlu0 %v1174, 16
        %v1270 = vpop.permute.xlu0 %1269
        %1271 = vrot.lane.b32.xlu0 %v721, 16
        %v1272 = vpop.permute.xlu0 %1271
        %1273 = vrot.lane.b32.xlu0 %v1175, 16
        %v1274 = vpop.permute.xlu0 %1273
        %1275 = vrot.lane.b32.xlu0 %v722, 16
        %v1276 = vpop.permute.xlu0 %1275
        %1277 = vrot.lane.b32.xlu0 %v1176, 16
        %v1278 = vpop.permute.xlu0 %1277
        %vm1279 = vcmp.lt.s32.totalorder %v1178, 16
        %v1280 = vsel %vm1279, %v1272, %v1276
        %v1281 = vsel %vm1279, %v1274, %v1278
        %v1282 = vsel %vm1279, %v1268, %v1272
        %v1283 = vsel %vm1279, %v1270, %v1274
        %v1284 = vsel %vm1279, %v1264, %v1268
        %v1285 = vsel %vm1279, %v1266, %v1270
        %v1286 = vsel %vm1279, %v1276, %v1264
        %v1287 = vsel %vm1279, %v1278, %v1266
        %v1288 = vsel %vm1202, 1, 0
        %v1289 = vsel %vm1203, 1, 0
        %v1290 = vsel %vm1204, 1, 0
        %v1291 = vsel %vm1205, 1, 0
        %vm1292 = vcmp.eq.s32.totalorder %v1288, 1
        %vm1293 = vcmp.eq.s32.totalorder %v1289, 1
        %vm1294 = vcmp.eq.s32.totalorder %v1290, 1
        %vm1295 = vcmp.eq.s32.totalorder %v1291, 1
        %v1296 = vsel %vm1292, %v1286, 0.0
        %v1297 = vsel %vm1293, %v1284, 0.0
        %v1298 = vsel %vm1294, %v1282, 0.0
        %v1299 = vsel %vm1295, %v1280, 0.0
        %v1300 = vsel %vm1292, %v1287, 0.0
        %v1301 = vsel %vm1293, %v1285, 0.0
        %v1302 = vsel %vm1294, %v1283, 0.0
        %v1303 = vsel %vm1295, %v1281, 0.0
        %1304 = vst [vmem:[#allocation2 + $0x40] sm:$0xff] %v1296
        %1305 = vst [vmem:[#allocation2 + $0x48] sm:$0xff] %v1297
        %1306 = vst [vmem:[#allocation2 + $0x50] sm:$0xff] %v1298
        %1307 = vst [vmem:[#allocation2 + $0x58] sm:$0xff] %v1299
        %1308 = vst [vmem:[#allocation2 + $0x60] sm:$0xff] %v1300
        %1309 = vst [vmem:[#allocation2 + $0x68] sm:$0xff] %v1301
        %1310 = vst [vmem:[#allocation2 + $0x70] sm:$0xff] %v1302
        %1311 = vst [vmem:[#allocation2 + $0x78] sm:$0xff] %v1303
        %1312 = vrot.lane.b32.xlu0 %v719, 15
        %v1313 = vpop.permute.xlu0 %1312
        %1314 = vrot.lane.b32.xlu0 %v1173, 15
        %v1315 = vpop.permute.xlu0 %1314
        %1316 = vrot.lane.b32.xlu0 %v720, 15
        %v1317 = vpop.permute.xlu0 %1316
        %1318 = vrot.lane.b32.xlu0 %v1174, 15
        %v1319 = vpop.permute.xlu0 %1318
        %1320 = vrot.lane.b32.xlu0 %v721, 15
        %v1321 = vpop.permute.xlu0 %1320
        %1322 = vrot.lane.b32.xlu0 %v1175, 15
        %v1323 = vpop.permute.xlu0 %1322
        %1324 = vrot.lane.b32.xlu0 %v722, 15
        %v1325 = vpop.permute.xlu0 %1324
        %1326 = vrot.lane.b32.xlu0 %v1176, 15
        %v1327 = vpop.permute.xlu0 %1326
        %vm1328 = vcmp.lt.s32.totalorder %v1178, 15
        %v1329 = vsel %vm1328, %v1321, %v1325
        %v1330 = vsel %vm1328, %v1323, %v1327
        %v1331 = vsel %vm1328, %v1317, %v1321
        %v1332 = vsel %vm1328, %v1319, %v1323
        %v1333 = vsel %vm1328, %v1313, %v1317
        %v1334 = vsel %vm1328, %v1315, %v1319
        %v1335 = vsel %vm1328, %v1325, %v1313
        %v1336 = vsel %vm1328, %v1327, %v1315
        %vm1337 = vmand %vm1202, %vm1198
        %vm1338 = vmand %vm1203, %vm1199
        %vm1339 = vmand %vm1204, %vm1200
        %vm1340 = vmand %vm1205, %vm1201
        %v1341 = vsel %vm1337, 1, 0
        %v1342 = vsel %vm1338, 1, 0
        %v1343 = vsel %vm1339, 1, 0
        %v1344 = vsel %vm1340, 1, 0
        %vm1345 = vcmp.eq.s32.totalorder %v1341, 1
        %vm1346 = vcmp.eq.s32.totalorder %v1342, 1
        %vm1347 = vcmp.eq.s32.totalorder %v1343, 1
        %vm1348 = vcmp.eq.s32.totalorder %v1344, 1
        %v1349 = vsel %vm1345, %v1335, 0.0
        %v1350 = vsel %vm1346, %v1333, 0.0
        %v1351 = vsel %vm1347, %v1331, 0.0
        %v1352 = vsel %vm1348, %v1329, 0.0
        %v1353 = vsel %vm1345, %v1336, 0.0
        %v1354 = vsel %vm1346, %v1334, 0.0
        %v1355 = vsel %vm1347, %v1332, 0.0
        %v1356 = vsel %vm1348, %v1330, 0.0
        %1357 = vst [vmem:[#allocation2 + $0x80] sm:$0xff] %v1349
        %1358 = vst [vmem:[#allocation2 + $0x88] sm:$0xff] %v1350
        %1359 = vst [vmem:[#allocation2 + $0x90] sm:$0xff] %v1351
        %1360 = vst [vmem:[#allocation2 + $0x98] sm:$0xff] %v1352
        %1361 = vst [vmem:[#allocation2 + $0xa0] sm:$0xff] %v1353
        %1362 = vst [vmem:[#allocation2 + $0xa8] sm:$0xff] %v1354
        %1363 = vst [vmem:[#allocation2 + $0xb0] sm:$0xff] %v1355
        %1364 = vst [vmem:[#allocation2 + $0xb8] sm:$0xff] %v1356
        %1365 = vrot.lane.b32.xlu0 %v719, 1
        %v1366 = vpop.permute.xlu0 %1365
        %1367 = vrot.lane.b32.xlu0 %v1173, 1
        %v1368 = vpop.permute.xlu0 %1367
        %1369 = vrot.lane.b32.xlu0 %v720, 1
        %v1370 = vpop.permute.xlu0 %1369
        %1371 = vrot.lane.b32.xlu0 %v1174, 1
        %v1372 = vpop.permute.xlu0 %1371
        %1373 = vrot.lane.b32.xlu0 %v721, 1
        %v1374 = vpop.permute.xlu0 %1373
        %1375 = vrot.lane.b32.xlu0 %v1175, 1
        %v1376 = vpop.permute.xlu0 %1375
        %1377 = vrot.lane.b32.xlu0 %v722, 1
        %v1378 = vpop.permute.xlu0 %1377
        %1379 = vrot.lane.b32.xlu0 %v1176, 1
        %v1380 = vpop.permute.xlu0 %1379
        %vm1381 = vcmp.lt.s32.totalorder %v1178, 1
        %v1382 = vsel %vm1381, %v1374, %v1378
        %v1383 = vsel %vm1381, %v1376, %v1380
        %v1384 = vsel %vm1381, %v1370, %v1374
        %v1385 = vsel %vm1381, %v1372, %v1376
        %v1386 = vsel %vm1381, %v1366, %v1370
        %v1387 = vsel %vm1381, %v1368, %v1372
        %v1388 = vsel %vm1381, %v1378, %v1366
        %v1389 = vsel %vm1381, %v1380, %v1368
        %v1390 = vsel %vm1194, 1, 0
        %v1391 = vsel %vm1195, 1, 0
        %v1392 = vsel %vm1196, 1, 0
        %v1393 = vsel %vm1197, 1, 0
        %vm1394 = vcmp.eq.s32.totalorder %v1390, 1
        %vm1395 = vcmp.eq.s32.totalorder %v1391, 1
        %vm1396 = vcmp.eq.s32.totalorder %v1392, 1
        %vm1397 = vcmp.eq.s32.totalorder %v1393, 1
        %v1398 = vsel %vm1394, %v1388, 0.0
        %v1399 = vsel %vm1395, %v1386, 0.0
        %v1400 = vsel %vm1396, %v1384, 0.0
        %v1401 = vsel %vm1397, %v1382, 0.0
        %v1402 = vsel %vm1394, %v1389, 0.0
        %v1403 = vsel %vm1395, %v1387, 0.0
        %v1404 = vsel %vm1396, %v1385, 0.0
        %v1405 = vsel %vm1397, %v1383, 0.0
        %1406 = vst [vmem:[#allocation2 + $0xc0] sm:$0xff] %v1398
        %1407 = vst [vmem:[#allocation2 + $0xc8] sm:$0xff] %v1399
        %1408 = vst [vmem:[#allocation2 + $0xd0] sm:$0xff] %v1400
        %1409 = vst [vmem:[#allocation2 + $0xd8] sm:$0xff] %v1401
        %1410 = vst [vmem:[#allocation2 + $0xe0] sm:$0xff] %v1402
        %1411 = vst [vmem:[#allocation2 + $0xe8] sm:$0xff] %v1403
        %1412 = vst [vmem:[#allocation2 + $0xf0] sm:$0xff] %v1404
        %1413 = vst [vmem:[#allocation2 + $0xf8] sm:$0xff] %v1405
        %1414 = vst [vmem:[#allocation2 + $0x100] sm:$0xff] %v719
        %1415 = vst [vmem:[#allocation2 + $0x108] sm:$0xff] %v720
        %1416 = vst [vmem:[#allocation2 + $0x110] sm:$0xff] %v721
        %1417 = vst [vmem:[#allocation2 + $0x118] sm:$0xff] %v722
        %1418 = vst [vmem:[#allocation2 + $0x120] sm:$0xff] %v1173
        %1419 = vst [vmem:[#allocation2 + $0x128] sm:$0xff] %v1174
        %1420 = vst [vmem:[#allocation2 + $0x130] sm:$0xff] %v1175
        %1421 = vst [vmem:[#allocation2 + $0x138] sm:$0xff] %v1176
        %1422 = vrot.lane.b32.xlu0 %v719, 127
        %v1423 = vpop.permute.xlu0 %1422
        %1424 = vrot.lane.b32.xlu0 %v1173, 127
        %v1425 = vpop.permute.xlu0 %1424
        %1426 = vrot.lane.b32.xlu0 %v720, 127
        %v1427 = vpop.permute.xlu0 %1426
        %1428 = vrot.lane.b32.xlu0 %v1174, 127
        %v1429 = vpop.permute.xlu0 %1428
        %1430 = vrot.lane.b32.xlu0 %v721, 127
        %v1431 = vpop.permute.xlu0 %1430
        %1432 = vrot.lane.b32.xlu0 %v1175, 127
        %v1433 = vpop.permute.xlu0 %1432
        %1434 = vrot.lane.b32.xlu0 %v722, 127
        %v1435 = vpop.permute.xlu0 %1434
        %1436 = vrot.lane.b32.xlu0 %v1176, 127
        %v1437 = vpop.permute.xlu0 %1436
        %vm1438 = vcmp.lt.s32.totalorder %v1178, 127
        %v1439 = vsel %vm1438, %v1431, %v1435
        %v1440 = vsel %vm1438, %v1433, %v1437
        %v1441 = vsel %vm1438, %v1427, %v1431
        %v1442 = vsel %vm1438, %v1429, %v1433
        %v1443 = vsel %vm1438, %v1423, %v1427
        %v1444 = vsel %vm1438, %v1425, %v1429
        %v1445 = vsel %vm1438, %v1435, %v1423
        %v1446 = vsel %vm1438, %v1437, %v1425
        %v1447 = vsel %vm1198, 1, 0
        %v1448 = vsel %vm1199, 1, 0
        %v1449 = vsel %vm1200, 1, 0
        %v1450 = vsel %vm1201, 1, 0
        %vm1451 = vcmp.eq.s32.totalorder %v1447, 1
        %vm1452 = vcmp.eq.s32.totalorder %v1448, 1
        %vm1453 = vcmp.eq.s32.totalorder %v1449, 1
        %vm1454 = vcmp.eq.s32.totalorder %v1450, 1
        %v1455 = vsel %vm1451, %v1443, 0.0
        %v1456 = vsel %vm1452, %v1441, 0.0
        %v1457 = vsel %vm1453, %v1439, 0.0
        %v1458 = vsel %vm1454, %v1445, 0.0
        %v1459 = vsel %vm1451, %v1444, 0.0
        %v1460 = vsel %vm1452, %v1442, 0.0
        %v1461 = vsel %vm1453, %v1440, 0.0
        %v1462 = vsel %vm1454, %v1446, 0.0
        %1463 = vst [vmem:[#allocation2 + $0x140] sm:$0xff] %v1455
        %1464 = vst [vmem:[#allocation2 + $0x148] sm:$0xff] %v1456
        %1465 = vst [vmem:[#allocation2 + $0x150] sm:$0xff] %v1457
        %1466 = vst [vmem:[#allocation2 + $0x158] sm:$0xff] %v1458
        %1467 = vst [vmem:[#allocation2 + $0x160] sm:$0xff] %v1459
        %1468 = vst [vmem:[#allocation2 + $0x168] sm:$0xff] %v1460
        %1469 = vst [vmem:[#allocation2 + $0x170] sm:$0xff] %v1461
        %1470 = vst [vmem:[#allocation2 + $0x178] sm:$0xff] %v1462
        %1471 = vrot.lane.b32.xlu0 %v719, 113
        %v1472 = vpop.permute.xlu0 %1471
        %1473 = vrot.lane.b32.xlu0 %v1173, 113
        %v1474 = vpop.permute.xlu0 %1473
        %1475 = vrot.lane.b32.xlu0 %v720, 113
        %v1476 = vpop.permute.xlu0 %1475
        %1477 = vrot.lane.b32.xlu0 %v1174, 113
        %v1478 = vpop.permute.xlu0 %1477
        %1479 = vrot.lane.b32.xlu0 %v721, 113
        %v1480 = vpop.permute.xlu0 %1479
        %1481 = vrot.lane.b32.xlu0 %v1175, 113
        %v1482 = vpop.permute.xlu0 %1481
        %1483 = vrot.lane.b32.xlu0 %v722, 113
        %v1484 = vpop.permute.xlu0 %1483
        %1485 = vrot.lane.b32.xlu0 %v1176, 113
        %v1486 = vpop.permute.xlu0 %1485
        %vm1487 = vcmp.lt.s32.totalorder %v1178, 113
        %v1488 = vsel %vm1487, %v1480, %v1484
        %v1489 = vsel %vm1487, %v1482, %v1486
        %v1490 = vsel %vm1487, %v1476, %v1480
        %v1491 = vsel %vm1487, %v1478, %v1482
        %v1492 = vsel %vm1487, %v1472, %v1476
        %v1493 = vsel %vm1487, %v1474, %v1478
        %v1494 = vsel %vm1487, %v1484, %v1472
        %v1495 = vsel %vm1487, %v1486, %v1474
        %vm1496 = vmand %vm1206, %vm1194
        %vm1497 = vmand %vm1207, %vm1195
        %vm1498 = vmand %vm1208, %vm1196
        %vm1499 = vmand %vm1209, %vm1197
        %v1500 = vsel %vm1496, 1, 0
        %v1501 = vsel %vm1497, 1, 0
        %v1502 = vsel %vm1498, 1, 0
        %v1503 = vsel %vm1499, 1, 0
        %vm1504 = vcmp.eq.s32.totalorder %v1500, 1
        %vm1505 = vcmp.eq.s32.totalorder %v1501, 1
        %vm1506 = vcmp.eq.s32.totalorder %v1502, 1
        %vm1507 = vcmp.eq.s32.totalorder %v1503, 1
        %v1508 = vsel %vm1504, %v1492, 0.0
        %v1509 = vsel %vm1505, %v1490, 0.0
        %v1510 = vsel %vm1506, %v1488, 0.0
        %v1511 = vsel %vm1507, %v1494, 0.0
        %v1512 = vsel %vm1504, %v1493, 0.0
        %v1513 = vsel %vm1505, %v1491, 0.0
        %v1514 = vsel %vm1506, %v1489, 0.0
        %v1515 = vsel %vm1507, %v1495, 0.0
        %1516 = vst [vmem:[#allocation2 + $0x180] sm:$0xff] %v1508
        %1517 = vst [vmem:[#allocation2 + $0x188] sm:$0xff] %v1509
        %1518 = vst [vmem:[#allocation2 + $0x190] sm:$0xff] %v1510
        %1519 = vst [vmem:[#allocation2 + $0x198] sm:$0xff] %v1511
        %1520 = vst [vmem:[#allocation2 + $0x1a0] sm:$0xff] %v1512
        %1521 = vst [vmem:[#allocation2 + $0x1a8] sm:$0xff] %v1513
        %1522 = vst [vmem:[#allocation2 + $0x1b0] sm:$0xff] %v1514
        %1523 = vst [vmem:[#allocation2 + $0x1b8] sm:$0xff] %v1515
        %1524 = vrot.lane.b32.xlu0 %v719, 112
        %v1525 = vpop.permute.xlu0 %1524
        %1526 = vrot.lane.b32.xlu0 %v1173, 112
        %v1527 = vpop.permute.xlu0 %1526
        %1528 = vrot.lane.b32.xlu0 %v720, 112
        %v1529 = vpop.permute.xlu0 %1528
        %1530 = vrot.lane.b32.xlu0 %v1174, 112
        %v1531 = vpop.permute.xlu0 %1530
        %1532 = vrot.lane.b32.xlu0 %v721, 112
        %v1533 = vpop.permute.xlu0 %1532
        %1534 = vrot.lane.b32.xlu0 %v1175, 112
        %v1535 = vpop.permute.xlu0 %1534
        %1536 = vrot.lane.b32.xlu0 %v722, 112
        %v1537 = vpop.permute.xlu0 %1536
        %1538 = vrot.lane.b32.xlu0 %v1176, 112
        %v1539 = vpop.permute.xlu0 %1538
        %vm1540 = vcmp.lt.s32.totalorder %v1178, 112
        %v1541 = vsel %vm1540, %v1533, %v1537
        %v1542 = vsel %vm1540, %v1535, %v1539
        %v1543 = vsel %vm1540, %v1529, %v1533
        %v1544 = vsel %vm1540, %v1531, %v1535
        %v1545 = vsel %vm1540, %v1525, %v1529
        %v1546 = vsel %vm1540, %v1527, %v1531
        %v1547 = vsel %vm1540, %v1537, %v1525
        %v1548 = vsel %vm1540, %v1539, %v1527
        %v1549 = vsel %vm1206, 1, 0
        %v1550 = vsel %vm1207, 1, 0
        %v1551 = vsel %vm1208, 1, 0
        %v1552 = vsel %vm1209, 1, 0
        %vm1553 = vcmp.eq.s32.totalorder %v1549, 1
        %vm1554 = vcmp.eq.s32.totalorder %v1550, 1
        %vm1555 = vcmp.eq.s32.totalorder %v1551, 1
        %vm1556 = vcmp.eq.s32.totalorder %v1552, 1
        %v1557 = vsel %vm1553, %v1545, 0.0
        %v1558 = vsel %vm1554, %v1543, 0.0
        %v1559 = vsel %vm1555, %v1541, 0.0
        %v1560 = vsel %vm1556, %v1547, 0.0
        %v1561 = vsel %vm1553, %v1546, 0.0
        %v1562 = vsel %vm1554, %v1544, 0.0
        %v1563 = vsel %vm1555, %v1542, 0.0
        %v1564 = vsel %vm1556, %v1548, 0.0
        %1565 = vst [vmem:[#allocation2 + $0x1c0] sm:$0xff] %v1557
        %1566 = vst [vmem:[#allocation2 + $0x1c8] sm:$0xff] %v1558
        %1567 = vst [vmem:[#allocation2 + $0x1d0] sm:$0xff] %v1559
        %1568 = vst [vmem:[#allocation2 + $0x1d8] sm:$0xff] %v1560
        %1569 = vst [vmem:[#allocation2 + $0x1e0] sm:$0xff] %v1561
        %1570 = vst [vmem:[#allocation2 + $0x1e8] sm:$0xff] %v1562
        %1571 = vst [vmem:[#allocation2 + $0x1f0] sm:$0xff] %v1563
        %1572 = vst [vmem:[#allocation2 + $0x1f8] sm:$0xff] %v1564
        %1573 = vrot.lane.b32.xlu0 %v719, 111
        %v1574 = vpop.permute.xlu0 %1573
        %1575 = vrot.lane.b32.xlu0 %v1173, 111
        %v1576 = vpop.permute.xlu0 %1575
        %1577 = vrot.lane.b32.xlu0 %v720, 111
        %v1578 = vpop.permute.xlu0 %1577
        %1579 = vrot.lane.b32.xlu0 %v1174, 111
        %v1580 = vpop.permute.xlu0 %1579
        %1581 = vrot.lane.b32.xlu0 %v721, 111
        %v1582 = vpop.permute.xlu0 %1581
        %1583 = vrot.lane.b32.xlu0 %v1175, 111
        %v1584 = vpop.permute.xlu0 %1583
        %1585 = vrot.lane.b32.xlu0 %v722, 111
        %v1586 = vpop.permute.xlu0 %1585
        %1587 = vrot.lane.b32.xlu0 %v1176, 111
        %v1588 = vpop.permute.xlu0 %1587
        %vm1589 = vcmp.lt.s32.totalorder %v1178, 111
        %v1590 = vsel %vm1589, %v1582, %v1586
        %v1591 = vsel %vm1589, %v1584, %v1588
        %v1592 = vsel %vm1589, %v1578, %v1582
        %v1593 = vsel %vm1589, %v1580, %v1584
        %v1594 = vsel %vm1589, %v1574, %v1578
        %v1595 = vsel %vm1589, %v1576, %v1580
        %v1596 = vsel %vm1589, %v1586, %v1574
        %v1597 = vsel %vm1589, %v1588, %v1576
        %vm1598 = vmand %vm1206, %vm1198
        %vm1599 = vmand %vm1207, %vm1199
        %vm1600 = vmand %vm1208, %vm1200
        %vm1601 = vmand %vm1209, %vm1201
        %v1602 = vsel %vm1598, 1, 0
        %v1603 = vsel %vm1599, 1, 0
        %v1604 = vsel %vm1600, 1, 0
        %v1605 = vsel %vm1601, 1, 0
        %vm1606 = vcmp.eq.s32.totalorder %v1602, 1
        %vm1607 = vcmp.eq.s32.totalorder %v1603, 1
        %vm1608 = vcmp.eq.s32.totalorder %v1604, 1
        %vm1609 = vcmp.eq.s32.totalorder %v1605, 1
        %v1610 = vsel %vm1606, %v1594, 0.0
        %v1611 = vsel %vm1607, %v1592, 0.0
        %v1612 = vsel %vm1608, %v1590, 0.0
        %v1613 = vsel %vm1609, %v1596, 0.0
        %v1614 = vsel %vm1606, %v1595, 0.0
        %v1615 = vsel %vm1607, %v1593, 0.0
        %v1616 = vsel %vm1608, %v1591, 0.0
        %v1617 = vsel %vm1609, %v1597, 0.0
        %1618 = vst [vmem:[#allocation2 + $0x200] sm:$0xff] %v1610
        %1619 = vst [vmem:[#allocation2 + $0x208] sm:$0xff] %v1611
        %1620 = vst [vmem:[#allocation2 + $0x210] sm:$0xff] %v1612
        %1621 = vst [vmem:[#allocation2 + $0x218] sm:$0xff] %v1613
        %1622 = vst [vmem:[#allocation2 + $0x220] sm:$0xff] %v1614
        %1623 = vst [vmem:[#allocation2 + $0x228] sm:$0xff] %v1615
        %1624 = vst [vmem:[#allocation2 + $0x230] sm:$0xff] %v1616
        %1625 = vst [vmem:[#allocation2 + $0x238] sm:$0xff] %v1617
        %v1626 = vld [vmem:[%s682] sm:$0xff]
        %v1627 = vld [vmem:[%s682 + $0x8] sm:$0xff]
        %v1628 = vld [vmem:[%s682 + $0x10] sm:$0xff]
        %v1629 = vld [vmem:[%s682 + $0x18] sm:$0xff]
        %v1630 = vld [vmem:[#allocation2] sm:$0xff]
        %v1631 = vld [vmem:[#allocation2 + $0x8] sm:$0xff]
        %v1632 = vld [vmem:[#allocation2 + $0x10] sm:$0xff]
        %v1633 = vld [vmem:[#allocation2 + $0x18] sm:$0xff]
        %v1634 = vld [vmem:[#allocation2 + $0x20] sm:$0xff]
        %v1635 = vld [vmem:[#allocation2 + $0x28] sm:$0xff]
        %v1636 = vld [vmem:[#allocation2 + $0x30] sm:$0xff]
        %v1637 = vld [vmem:[#allocation2 + $0x38] sm:$0xff]
        %v1638 = vld [vmem:[#allocation2 + $0x40] sm:$0xff]
        %v1639 = vld [vmem:[#allocation2 + $0x48] sm:$0xff]
        %v1640 = vld [vmem:[#allocation2 + $0x50] sm:$0xff]
        %v1641 = vld [vmem:[#allocation2 + $0x58] sm:$0xff]
        %v1642 = vld [vmem:[#allocation2 + $0x60] sm:$0xff]
        %v1643 = vld [vmem:[#allocation2 + $0x68] sm:$0xff]
        %v1644 = vld [vmem:[#allocation2 + $0x70] sm:$0xff]
        %v1645 = vld [vmem:[#allocation2 + $0x78] sm:$0xff]
        %v1646 = vld [vmem:[#allocation2 + $0x80] sm:$0xff]
        %v1647 = vld [vmem:[#allocation2 + $0x88] sm:$0xff]
        %v1648 = vld [vmem:[#allocation2 + $0x90] sm:$0xff]
        %v1649 = vld [vmem:[#allocation2 + $0x98] sm:$0xff]
        %v1650 = vld [vmem:[#allocation2 + $0xa0] sm:$0xff]
        %v1651 = vld [vmem:[#allocation2 + $0xa8] sm:$0xff]
        %v1652 = vld [vmem:[#allocation2 + $0xb0] sm:$0xff]
        %v1653 = vld [vmem:[#allocation2 + $0xb8] sm:$0xff]
        %v1654 = vld [vmem:[#allocation2 + $0xc0] sm:$0xff]
        %v1655 = vld [vmem:[#allocation2 + $0xc8] sm:$0xff]
        %v1656 = vld [vmem:[#allocation2 + $0xd0] sm:$0xff]
        %v1657 = vld [vmem:[#allocation2 + $0xd8] sm:$0xff]
        %v1658 = vld [vmem:[#allocation2 + $0xe0] sm:$0xff]
        %v1659 = vld [vmem:[#allocation2 + $0xe8] sm:$0xff]
        %v1660 = vld [vmem:[#allocation2 + $0xf0] sm:$0xff]
        %v1661 = vld [vmem:[#allocation2 + $0xf8] sm:$0xff]
        %v1662 = vld [vmem:[#allocation2 + $0x100] sm:$0xff]
        %v1663 = vld [vmem:[#allocation2 + $0x108] sm:$0xff]
        %v1664 = vld [vmem:[#allocation2 + $0x110] sm:$0xff]
        %v1665 = vld [vmem:[#allocation2 + $0x118] sm:$0xff]
        %v1666 = vld [vmem:[#allocation2 + $0x120] sm:$0xff]
        %v1667 = vld [vmem:[#allocation2 + $0x128] sm:$0xff]
        %v1668 = vld [vmem:[#allocation2 + $0x130] sm:$0xff]
        %v1669 = vld [vmem:[#allocation2 + $0x138] sm:$0xff]
        %v1670 = vld [vmem:[#allocation2 + $0x140] sm:$0xff]
        %v1671 = vld [vmem:[#allocation2 + $0x148] sm:$0xff]
        %v1672 = vld [vmem:[#allocation2 + $0x150] sm:$0xff]
        %v1673 = vld [vmem:[#allocation2 + $0x158] sm:$0xff]
        %v1674 = vld [vmem:[#allocation2 + $0x160] sm:$0xff]
        %v1675 = vld [vmem:[#allocation2 + $0x168] sm:$0xff]
        %v1676 = vld [vmem:[#allocation2 + $0x170] sm:$0xff]
        %v1677 = vld [vmem:[#allocation2 + $0x178] sm:$0xff]
        %v1678 = vld [vmem:[#allocation2 + $0x180] sm:$0xff]
        %v1679 = vld [vmem:[#allocation2 + $0x188] sm:$0xff]
        %v1680 = vld [vmem:[#allocation2 + $0x190] sm:$0xff]
        %v1681 = vld [vmem:[#allocation2 + $0x198] sm:$0xff]
        %v1682 = vld [vmem:[#allocation2 + $0x1a0] sm:$0xff]
        %v1683 = vld [vmem:[#allocation2 + $0x1a8] sm:$0xff]
        %v1684 = vld [vmem:[#allocation2 + $0x1b0] sm:$0xff]
        %v1685 = vld [vmem:[#allocation2 + $0x1b8] sm:$0xff]
        %v1686 = vld [vmem:[#allocation2 + $0x1c0] sm:$0xff]
        %v1687 = vld [vmem:[#allocation2 + $0x1c8] sm:$0xff]
        %v1688 = vld [vmem:[#allocation2 + $0x1d0] sm:$0xff]
        %v1689 = vld [vmem:[#allocation2 + $0x1d8] sm:$0xff]
        %v1690 = vld [vmem:[#allocation2 + $0x1e0] sm:$0xff]
        %v1691 = vld [vmem:[#allocation2 + $0x1e8] sm:$0xff]
        %v1692 = vld [vmem:[#allocation2 + $0x1f0] sm:$0xff]
        %v1693 = vld [vmem:[#allocation2 + $0x1f8] sm:$0xff]
        %v1694 = vld [vmem:[#allocation2 + $0x200] sm:$0xff]
        %v1695 = vld [vmem:[#allocation2 + $0x208] sm:$0xff]
        %v1696 = vld [vmem:[#allocation2 + $0x210] sm:$0xff]
        %v1697 = vld [vmem:[#allocation2 + $0x218] sm:$0xff]
        %v1698 = vld [vmem:[#allocation2 + $0x220] sm:$0xff]
        %v1699 = vld [vmem:[#allocation2 + $0x228] sm:$0xff]
        %v1700 = vld [vmem:[#allocation2 + $0x230] sm:$0xff]
        %v1701 = vld [vmem:[#allocation2 + $0x238] sm:$0xff]
        %v1703 = vsel %vm725, %v1627, 0
        %v1706 = vsel %vm725, %v1629, 0
        %1708 = vmatprep.subr.mxu0 %v1631
        %1709 = vmatpush1.msra.mxu0 %v1630
        %1710 = vmatprep.subr.mxu0 %v1635
        %1711 = vmatpush1.msra.mxu0 %v1634
        %1712 = vmatprep.subr.mxu0 %v1639
        %1713 = vmatpush1.msra.mxu0 %v1638
        %1714 = vmatprep.subr.mxu0 %v1643
        %1715 = vmatpush1.msra.mxu0 %v1642
        %1716 = vmatprep.subr.mxu0 %v1647
        %1717 = vmatpush1.msra.mxu0 %v1646
        %1718 = vmatprep.subr.mxu0 %v1651
        %1719 = vmatpush1.msra.mxu0 %v1650
        %1720 = vmatprep.subr.mxu0 %v1655
        %1721 = vmatpush1.msra.mxu0 %v1654
        %1722 = vmatprep.subr.mxu0 %v1659
        %1723 = vmatpush1.msra.mxu0 %v1658
        %1724 = vmatprep.subr.mxu0 %v1663
        %1725 = vmatpush1.msra.mxu0 %v1662
        %1726 = vmatprep.subr.mxu0 %v1667
        %1727 = vmatpush1.msra.mxu0 %v1666
        %1728 = vmatprep.subr.mxu0 %v1671
        %1729 = vmatpush1.msra.mxu0 %v1670
        %1730 = vmatprep.subr.mxu0 %v1675
        %1731 = vmatpush1.msra.mxu0 %v1674
        %1732 = vmatprep.subr.mxu0 %v1679
        %1733 = vmatpush1.msra.mxu0 %v1678
        %1734 = vmatprep.subr.mxu0 %v1683
        %1735 = vmatpush1.msra.mxu0 %v1682
        %1736 = vmatprep.subr.mxu0 %v1687
        %1737 = vmatpush1.msra.mxu0 %v1686
        %1738 = vmatprep.subr.mxu0 %v1691
        %1739 = vmatpush1.msra.mxu0 %v1690
        %1740 = vmatprep.subr.mxu0 %v1695
        %1741 = vmatpush1.msra.mxu0 %v1694
        %1742 = vmatprep.subr.mxu0 %v1699
        %1743 = vmatpush1.msra.mxu0 %v1698
        %1744 = vmatprep.subr.mxu0 0.0
        %1745 = vmatpush1.msra.mxu0 0.0
        %1746 = vmatprep.subr.mxu0 0.0
        %1747 = vmatpush1.msra.mxu0 0.0
        %1748 = vmatprep.subr.mxu0 0.0
        %1749 = vmatpush1.msra.mxu0 0.0
        %1750 = vmatprep.subr.mxu0 0.0
        %1751 = vmatpush1.msra.mxu0 0.0
        %1752 = vmatprep.subr.mxu0 0.0
        %1753 = vmatpush1.msra.mxu0 0.0
        %1754 = vmatprep.subr.mxu0 0.0
        %1755 = vmatpush1.msra.mxu0 0.0
        %1756 = vmatprep.subr.mxu0 0.0
        %1757 = vmatpush1.msra.mxu0 0.0
        %1758 = vmatprep.subr.mxu0 0.0
        %1759 = vmatpush1.msra.mxu0 0.0
        %1760 = vmatprep.subr.mxu0 0.0
        %1761 = vmatpush1.msra.mxu0 0.0
        %1762 = vmatprep.subr.mxu0 0.0
        %1763 = vmatpush1.msra.mxu0 0.0
        %1764 = vmatprep.subr.mxu0 0.0
        %1765 = vmatpush1.msra.mxu0 0.0
        %1766 = vmatprep.subr.mxu0 0.0
        %1767 = vmatpush1.msra.mxu0 0.0
        %1768 = vmatprep.subr.mxu0 0.0
        %1769 = vmatpush1.msra.mxu0 0.0
        %1770 = vmatprep.subr.mxu0 0.0
        %1771 = vmatpush1.msra.mxu0 0.0
        %1772 = vmatprep.mubr.f32.mxu0 %v1703
        %1773 = vmatmul.mubr.f32.gmra.mrb[0].mxu0 %v1626
        %v1774 = vpop.f32.mrb[0].mxu0
        %v1775 = vadd.f32 0.0, %v1774
        %v1776 = vpop.f32.mrb[0].mxu0
        %v1777 = vadd.f32 0.0, %v1776
        %1778 = vmatprep.mubr.f32.mxu0 %v1706
        %1779 = vmatmul.mubr.f32.gmra.mrb[0].mxu0 %v1628
        %v1780 = vpop.f32.mrb[0].mxu0
        %v1781 = vadd.f32 0.0, %v1780
        %v1782 = vpop.f32.mrb[0].mxu0
        %v1783 = vadd.f32 0.0, %v1782
        %1784 = vdwg.mxu0
        %1785 = vmatprep.subr.mxu0 %v1633
        %1786 = vmatpush1.msra.mxu0 %v1632
        %1787 = vmatprep.subr.mxu0 %v1637
        %1788 = vmatpush1.msra.mxu0 %v1636
        %1789 = vmatprep.subr.mxu0 %v1641
        %1790 = vmatpush1.msra.mxu0 %v1640
        %1791 = vmatprep.subr.mxu0 %v1645
        %1792 = vmatpush1.msra.mxu0 %v1644
        %1793 = vmatprep.subr.mxu0 %v1649
        %1794 = vmatpush1.msra.mxu0 %v1648
        %1795 = vmatprep.subr.mxu0 %v1653
        %1796 = vmatpush1.msra.mxu0 %v1652
        %1797 = vmatprep.subr.mxu0 %v1657
        %1798 = vmatpush1.msra.mxu0 %v1656
        %1799 = vmatprep.subr.mxu0 %v1661
        %1800 = vmatpush1.msra.mxu0 %v1660
        %1801 = vmatprep.subr.mxu0 %v1665
        %1802 = vmatpush1.msra.mxu0 %v1664
        %1803 = vmatprep.subr.mxu0 %v1669
        %1804 = vmatpush1.msra.mxu0 %v1668
        %1805 = vmatprep.subr.mxu0 %v1673
        %1806 = vmatpush1.msra.mxu0 %v1672
        %1807 = vmatprep.subr.mxu0 %v1677
        %1808 = vmatpush1.msra.mxu0 %v1676
        %1809 = vmatprep.subr.mxu0 %v1681
        %1810 = vmatpush1.msra.mxu0 %v1680
        %1811 = vmatprep.subr.mxu0 %v1685
        %1812 = vmatpush1.msra.mxu0 %v1684
        %1813 = vmatprep.subr.mxu0 %v1689
        %1814 = vmatpush1.msra.mxu0 %v1688
        %1815 = vmatprep.subr.mxu0 %v1693
        %1816 = vmatpush1.msra.mxu0 %v1692
        %1817 = vmatprep.subr.mxu0 %v1697
        %1818 = vmatpush1.msra.mxu0 %v1696
        %1819 = vmatprep.subr.mxu0 %v1701
        %1820 = vmatpush1.msra.mxu0 %v1700
        %1821 = vmatprep.subr.mxu0 0.0
        %1822 = vmatpush1.msra.mxu0 0.0
        %1823 = vmatprep.subr.mxu0 0.0
        %1824 = vmatpush1.msra.mxu0 0.0
        %1825 = vmatprep.subr.mxu0 0.0
        %1826 = vmatpush1.msra.mxu0 0.0
        %1827 = vmatprep.subr.mxu0 0.0
        %1828 = vmatpush1.msra.mxu0 0.0
        %1829 = vmatprep.subr.mxu0 0.0
        %1830 = vmatpush1.msra.mxu0 0.0
        %1831 = vmatprep.subr.mxu0 0.0
        %1832 = vmatpush1.msra.mxu0 0.0
        %1833 = vmatprep.subr.mxu0 0.0
        %1834 = vmatpush1.msra.mxu0 0.0
        %1835 = vmatprep.subr.mxu0 0.0
        %1836 = vmatpush1.msra.mxu0 0.0
        %1837 = vmatprep.subr.mxu0 0.0
        %1838 = vmatpush1.msra.mxu0 0.0
        %1839 = vmatprep.subr.mxu0 0.0
        %1840 = vmatpush1.msra.mxu0 0.0
        %1841 = vmatprep.subr.mxu0 0.0
        %1842 = vmatpush1.msra.mxu0 0.0
        %1843 = vmatprep.subr.mxu0 0.0
        %1844 = vmatpush1.msra.mxu0 0.0
        %1845 = vmatprep.subr.mxu0 0.0
        %1846 = vmatpush1.msra.mxu0 0.0
        %1847 = vmatprep.subr.mxu0 0.0
        %1848 = vmatpush1.msra.mxu0 0.0
        %1849 = vmatprep.mubr.f32.mxu0 %v1703
        %1850 = vmatmul.mubr.f32.gmra.mrb[0].mxu0 %v1626
        %v1851 = vpop.f32.mrb[0].mxu0
        %v1852 = vadd.f32 0.0, %v1851
        %v1853 = vpop.f32.mrb[0].mxu0
        %v1854 = vadd.f32 0.0, %v1853
        %1855 = vmatprep.mubr.f32.mxu0 %v1706
        %1856 = vmatmul.mubr.f32.gmra.mrb[0].mxu0 %v1628
        %v1857 = vpop.f32.mrb[0].mxu0
        %v1858 = vadd.f32 0.0, %v1857
        %v1859 = vpop.f32.mrb[0].mxu0
        %v1860 = vadd.f32 0.0, %v1859
        %1861 = vdwg.mxu0
        %v1862 = vld [vmem:[%s687] sm:$0xff]
        %v1863 = vld [vmem:[%s687 + $0x8] sm:$0xff]
        %1865 = vset.pattern.permute.xlu0 0
        %1866 = vperm.xlu0 %1865, %v1862
        %v1867 = vpop.permute.xlu0 %1866
        %1870 = vset.pattern.permute.xlu0 0
        %1871 = vperm.xlu0 %1870, %v1863
        %v1872 = vpop.permute.xlu0 %1871
        %v1874 = vmul.f32 %v1775, %v1867
        %v1875 = vmul.f32 %v1777, %v1867
        %v1876 = vmul.f32 %v1852, %v1867
        %v1877 = vmul.f32 %v1854, %v1867
        %v1878 = vmul.f32 %v1781, %v1872
        %v1879 = vmul.f32 %v1783, %v1872
        %v1880 = vmul.f32 %v1858, %v1872
        %v1881 = vmul.f32 %v1860, %v1872
        %v1882 = vld [vmem:[%s692] sm:$0xff]
        %v1883 = vld [vmem:[%s692 + $0x8] sm:$0xff]
        %1885 = vset.pattern.permute.xlu0 0
        %1886 = vperm.xlu0 %1885, %v1882
        %v1887 = vpop.permute.xlu0 %1886
        %1890 = vset.pattern.permute.xlu0 0
        %1891 = vperm.xlu0 %1890, %v1883
        %v1892 = vpop.permute.xlu0 %1891
        %v1894 = vadd.f32 %v1874, %v1887
        %v1895 = vadd.f32 %v1875, %v1887
        %v1896 = vadd.f32 %v1876, %v1887
        %v1897 = vadd.f32 %v1877, %v1887
        %v1898 = vadd.f32 %v1878, %v1892
        %v1899 = vadd.f32 %v1879, %v1892
        %v1900 = vadd.f32 %v1880, %v1892
        %v1901 = vadd.f32 %v1881, %v1892
        %v1902 = vmax.f32 %v1894, 0.0
        %v1903 = vmax.f32 %v1895, 0.0
        %v1904 = vmax.f32 %v1896, 0.0
        %v1905 = vmax.f32 %v1897, 0.0
        %v1906 = vmax.f32 %v1898, 0.0
        %v1907 = vmax.f32 %v1899, 0.0
        %v1908 = vmax.f32 %v1900, 0.0
        %v1909 = vmax.f32 %v1901, 0.0
        %1910 = vrot.lane.b32.xlu0 %v1902, 17
        %v1911 = vpop.permute.xlu0 %1910
        %1912 = vrot.lane.b32.xlu0 %v1906, 17
        %v1913 = vpop.permute.xlu0 %1912
        %1914 = vrot.lane.b32.xlu0 %v1903, 17
        %v1915 = vpop.permute.xlu0 %1914
        %1916 = vrot.lane.b32.xlu0 %v1907, 17
        %v1917 = vpop.permute.xlu0 %1916
        %1918 = vrot.lane.b32.xlu0 %v1904, 17
        %v1919 = vpop.permute.xlu0 %1918
        %1920 = vrot.lane.b32.xlu0 %v1908, 17
        %v1921 = vpop.permute.xlu0 %1920
        %1922 = vrot.lane.b32.xlu0 %v1905, 17
        %v1923 = vpop.permute.xlu0 %1922
        %1924 = vrot.lane.b32.xlu0 %v1909, 17
        %v1925 = vpop.permute.xlu0 %1924
        %v1926 = vsel %vm1226, %v1919, %v1923
        %v1927 = vsel %vm1226, %v1921, %v1925
        %v1928 = vsel %vm1226, %v1915, %v1919
        %v1929 = vsel %vm1226, %v1917, %v1921
        %v1930 = vsel %vm1226, %v1911, %v1915
        %v1931 = vsel %vm1226, %v1913, %v1917
        %v1932 = vsel %vm1226, %v1923, %v1911
        %v1933 = vsel %vm1226, %v1925, %v1913
        %v1934 = vsel %vm1243, %v1932, 0.0
        %v1935 = vsel %vm1244, %v1930, 0.0
        %v1936 = vsel %vm1245, %v1928, 0.0
        %v1937 = vsel %vm1246, %v1926, 0.0
        %v1938 = vsel %vm1243, %v1933, 0.0
        %v1939 = vsel %vm1244, %v1931, 0.0
        %v1940 = vsel %vm1245, %v1929, 0.0
        %v1941 = vsel %vm1246, %v1927, 0.0
        %1942 = vst [vmem:[#allocation2] sm:$0xff] %v1934
        %1943 = vst [vmem:[#allocation2 + $0x8] sm:$0xff] %v1935
        %1944 = vst [vmem:[#allocation2 + $0x10] sm:$0xff] %v1936
        %1945 = vst [vmem:[#allocation2 + $0x18] sm:$0xff] %v1937
        %1946 = vst [vmem:[#allocation2 + $0x20] sm:$0xff] %v1938
        %1947 = vst [vmem:[#allocation2 + $0x28] sm:$0xff] %v1939
        %1948 = vst [vmem:[#allocation2 + $0x30] sm:$0xff] %v1940
        %1949 = vst [vmem:[#allocation2 + $0x38] sm:$0xff] %v1941
        %1950 = vrot.lane.b32.xlu0 %v1902, 16
        %v1951 = vpop.permute.xlu0 %1950
        %1952 = vrot.lane.b32.xlu0 %v1906, 16
        %v1953 = vpop.permute.xlu0 %1952
        %1954 = vrot.lane.b32.xlu0 %v1903, 16
        %v1955 = vpop.permute.xlu0 %1954
        %1956 = vrot.lane.b32.xlu0 %v1907, 16
        %v1957 = vpop.permute.xlu0 %1956
        %1958 = vrot.lane.b32.xlu0 %v1904, 16
        %v1959 = vpop.permute.xlu0 %1958
        %1960 = vrot.lane.b32.xlu0 %v1908, 16
        %v1961 = vpop.permute.xlu0 %1960
        %1962 = vrot.lane.b32.xlu0 %v1905, 16
        %v1963 = vpop.permute.xlu0 %1962
        %1964 = vrot.lane.b32.xlu0 %v1909, 16
        %v1965 = vpop.permute.xlu0 %1964
        %v1966 = vsel %vm1279, %v1959, %v1963
        %v1967 = vsel %vm1279, %v1961, %v1965
        %v1968 = vsel %vm1279, %v1955, %v1959
        %v1969 = vsel %vm1279, %v1957, %v1961
        %v1970 = vsel %vm1279, %v1951, %v1955
        %v1971 = vsel %vm1279, %v1953, %v1957
        %v1972 = vsel %vm1279, %v1963, %v1951
        %v1973 = vsel %vm1279, %v1965, %v1953
        %v1974 = vsel %vm1292, %v1972, 0.0
        %v1975 = vsel %vm1293, %v1970, 0.0
        %v1976 = vsel %vm1294, %v1968, 0.0
        %v1977 = vsel %vm1295, %v1966, 0.0
        %v1978 = vsel %vm1292, %v1973, 0.0
        %v1979 = vsel %vm1293, %v1971, 0.0
        %v1980 = vsel %vm1294, %v1969, 0.0
        %v1981 = vsel %vm1295, %v1967, 0.0
        %1982 = vst [vmem:[#allocation2 + $0x40] sm:$0xff] %v1974
        %1983 = vst [vmem:[#allocation2 + $0x48] sm:$0xff] %v1975
        %1984 = vst [vmem:[#allocation2 + $0x50] sm:$0xff] %v1976
        %1985 = vst [vmem:[#allocation2 + $0x58] sm:$0xff] %v1977
        %1986 = vst [vmem:[#allocation2 + $0x60] sm:$0xff] %v1978
        %1987 = vst [vmem:[#allocation2 + $0x68] sm:$0xff] %v1979
        %1988 = vst [vmem:[#allocation2 + $0x70] sm:$0xff] %v1980
        %1989 = vst [vmem:[#allocation2 + $0x78] sm:$0xff] %v1981
        %1990 = vrot.lane.b32.xlu0 %v1902, 15
        %v1991 = vpop.permute.xlu0 %1990
        %1992 = vrot.lane.b32.xlu0 %v1906, 15
        %v1993 = vpop.permute.xlu0 %1992
        %1994 = vrot.lane.b32.xlu0 %v1903, 15
        %v1995 = vpop.permute.xlu0 %1994
        %1996 = vrot.lane.b32.xlu0 %v1907, 15
        %v1997 = vpop.permute.xlu0 %1996
        %1998 = vrot.lane.b32.xlu0 %v1904, 15
        %v1999 = vpop.permute.xlu0 %1998
        %2000 = vrot.lane.b32.xlu0 %v1908, 15
        %v2001 = vpop.permute.xlu0 %2000
        %2002 = vrot.lane.b32.xlu0 %v1905, 15
        %v2003 = vpop.permute.xlu0 %2002
        %2004 = vrot.lane.b32.xlu0 %v1909, 15
        %v2005 = vpop.permute.xlu0 %2004
        %v2006 = vsel %vm1328, %v1999, %v2003
        %v2007 = vsel %vm1328, %v2001, %v2005
        %v2008 = vsel %vm1328, %v1995, %v1999
        %v2009 = vsel %vm1328, %v1997, %v2001
        %v2010 = vsel %vm1328, %v1991, %v1995
        %v2011 = vsel %vm1328, %v1993, %v1997
        %v2012 = vsel %vm1328, %v2003, %v1991
        %v2013 = vsel %vm1328, %v2005, %v1993
        %v2014 = vsel %vm1345, %v2012, 0.0
        %v2015 = vsel %vm1346, %v2010, 0.0
        %v2016 = vsel %vm1347, %v2008, 0.0
        %v2017 = vsel %vm1348, %v2006, 0.0
        %v2018 = vsel %vm1345, %v2013, 0.0
        %v2019 = vsel %vm1346, %v2011, 0.0
        %v2020 = vsel %vm1347, %v2009, 0.0
        %v2021 = vsel %vm1348, %v2007, 0.0
        %2022 = vst [vmem:[#allocation2 + $0x80] sm:$0xff] %v2014
        %2023 = vst [vmem:[#allocation2 + $0x88] sm:$0xff] %v2015
        %2024 = vst [vmem:[#allocation2 + $0x90] sm:$0xff] %v2016
        %2025 = vst [vmem:[#allocation2 + $0x98] sm:$0xff] %v2017
        %2026 = vst [vmem:[#allocation2 + $0xa0] sm:$0xff] %v2018
        %2027 = vst [vmem:[#allocation2 + $0xa8] sm:$0xff] %v2019
        %2028 = vst [vmem:[#allocation2 + $0xb0] sm:$0xff] %v2020
        %2029 = vst [vmem:[#allocation2 + $0xb8] sm:$0xff] %v2021
        %2030 = vrot.lane.b32.xlu0 %v1902, 1
        %v2031 = vpop.permute.xlu0 %2030
        %2032 = vrot.lane.b32.xlu0 %v1906, 1
        %v2033 = vpop.permute.xlu0 %2032
        %2034 = vrot.lane.b32.xlu0 %v1903, 1
        %v2035 = vpop.permute.xlu0 %2034
        %2036 = vrot.lane.b32.xlu0 %v1907, 1
        %v2037 = vpop.permute.xlu0 %2036
        %2038 = vrot.lane.b32.xlu0 %v1904, 1
        %v2039 = vpop.permute.xlu0 %2038
        %2040 = vrot.lane.b32.xlu0 %v1908, 1
        %v2041 = vpop.permute.xlu0 %2040
        %2042 = vrot.lane.b32.xlu0 %v1905, 1
        %v2043 = vpop.permute.xlu0 %2042
        %2044 = vrot.lane.b32.xlu0 %v1909, 1
        %v2045 = vpop.permute.xlu0 %2044
        %v2046 = vsel %vm1381, %v2039, %v2043
        %v2047 = vsel %vm1381, %v2041, %v2045
        %v2048 = vsel %vm1381, %v2035, %v2039
        %v2049 = vsel %vm1381, %v2037, %v2041
        %v2050 = vsel %vm1381, %v2031, %v2035
        %v2051 = vsel %vm1381, %v2033, %v2037
        %v2052 = vsel %vm1381, %v2043, %v2031
        %v2053 = vsel %vm1381, %v2045, %v2033
        %v2054 = vsel %vm1394, %v2052, 0.0
        %v2055 = vsel %vm1395, %v2050, 0.0
        %v2056 = vsel %vm1396, %v2048, 0.0
        %v2057 = vsel %vm1397, %v2046, 0.0
        %v2058 = vsel %vm1394, %v2053, 0.0
        %v2059 = vsel %vm1395, %v2051, 0.0
        %v2060 = vsel %vm1396, %v2049, 0.0
        %v2061 = vsel %vm1397, %v2047, 0.0
        %2062 = vst [vmem:[#allocation2 + $0xc0] sm:$0xff] %v2054
        %2063 = vst [vmem:[#allocation2 + $0xc8] sm:$0xff] %v2055
        %2064 = vst [vmem:[#allocation2 + $0xd0] sm:$0xff] %v2056
        %2065 = vst [vmem:[#allocation2 + $0xd8] sm:$0xff] %v2057
        %2066 = vst [vmem:[#allocation2 + $0xe0] sm:$0xff] %v2058
        %2067 = vst [vmem:[#allocation2 + $0xe8] sm:$0xff] %v2059
        %2068 = vst [vmem:[#allocation2 + $0xf0] sm:$0xff] %v2060
        %2069 = vst [vmem:[#allocation2 + $0xf8] sm:$0xff] %v2061
        %2070 = vst [vmem:[#allocation2 + $0x100] sm:$0xff] %v1902
        %2071 = vst [vmem:[#allocation2 + $0x108] sm:$0xff] %v1903
        %2072 = vst [vmem:[#allocation2 + $0x110] sm:$0xff] %v1904
        %2073 = vst [vmem:[#allocation2 + $0x118] sm:$0xff] %v1905
        %2074 = vst [vmem:[#allocation2 + $0x120] sm:$0xff] %v1906
        %2075 = vst [vmem:[#allocation2 + $0x128] sm:$0xff] %v1907
        %2076 = vst [vmem:[#allocation2 + $0x130] sm:$0xff] %v1908
        %2077 = vst [vmem:[#allocation2 + $0x138] sm:$0xff] %v1909
        %2078 = vrot.lane.b32.xlu0 %v1902, 127
        %v2079 = vpop.permute.xlu0 %2078
        %2080 = vrot.lane.b32.xlu0 %v1906, 127
        %v2081 = vpop.permute.xlu0 %2080
        %2082 = vrot.lane.b32.xlu0 %v1903, 127
        %v2083 = vpop.permute.xlu0 %2082
        %2084 = vrot.lane.b32.xlu0 %v1907, 127
        %v2085 = vpop.permute.xlu0 %2084
        %2086 = vrot.lane.b32.xlu0 %v1904, 127
        %v2087 = vpop.permute.xlu0 %2086
        %2088 = vrot.lane.b32.xlu0 %v1908, 127
        %v2089 = vpop.permute.xlu0 %2088
        %2090 = vrot.lane.b32.xlu0 %v1905, 127
        %v2091 = vpop.permute.xlu0 %2090
        %2092 = vrot.lane.b32.xlu0 %v1909, 127
        %v2093 = vpop.permute.xlu0 %2092
        %v2094 = vsel %vm1438, %v2087, %v2091
        %v2095 = vsel %vm1438, %v2089, %v2093
        %v2096 = vsel %vm1438, %v2083, %v2087
        %v2097 = vsel %vm1438, %v2085, %v2089
        %v2098 = vsel %vm1438, %v2079, %v2083
        %v2099 = vsel %vm1438, %v2081, %v2085
        %v2100 = vsel %vm1438, %v2091, %v2079
        %v2101 = vsel %vm1438, %v2093, %v2081
        %v2102 = vsel %vm1451, %v2098, 0.0
        %v2103 = vsel %vm1452, %v2096, 0.0
        %v2104 = vsel %vm1453, %v2094, 0.0
        %v2105 = vsel %vm1454, %v2100, 0.0
        %v2106 = vsel %vm1451, %v2099, 0.0
        %v2107 = vsel %vm1452, %v2097, 0.0
        %v2108 = vsel %vm1453, %v2095, 0.0
        %v2109 = vsel %vm1454, %v2101, 0.0
        %2110 = vst [vmem:[#allocation2 + $0x140] sm:$0xff] %v2102
        %2111 = vst [vmem:[#allocation2 + $0x148] sm:$0xff] %v2103
        %2112 = vst [vmem:[#allocation2 + $0x150] sm:$0xff] %v2104
        %2113 = vst [vmem:[#allocation2 + $0x158] sm:$0xff] %v2105
        %2114 = vst [vmem:[#allocation2 + $0x160] sm:$0xff] %v2106
        %2115 = vst [vmem:[#allocation2 + $0x168] sm:$0xff] %v2107
        %2116 = vst [vmem:[#allocation2 + $0x170] sm:$0xff] %v2108
        %2117 = vst [vmem:[#allocation2 + $0x178] sm:$0xff] %v2109
        %2118 = vrot.lane.b32.xlu0 %v1902, 113
        %v2119 = vpop.permute.xlu0 %2118
        %2120 = vrot.lane.b32.xlu0 %v1906, 113
        %v2121 = vpop.permute.xlu0 %2120
        %2122 = vrot.lane.b32.xlu0 %v1903, 113
        %v2123 = vpop.permute.xlu0 %2122
        %2124 = vrot.lane.b32.xlu0 %v1907, 113
        %v2125 = vpop.permute.xlu0 %2124
        %2126 = vrot.lane.b32.xlu0 %v1904, 113
        %v2127 = vpop.permute.xlu0 %2126
        %2128 = vrot.lane.b32.xlu0 %v1908, 113
        %v2129 = vpop.permute.xlu0 %2128
        %2130 = vrot.lane.b32.xlu0 %v1905, 113
        %v2131 = vpop.permute.xlu0 %2130
        %2132 = vrot.lane.b32.xlu0 %v1909, 113
        %v2133 = vpop.permute.xlu0 %2132
        %v2134 = vsel %vm1487, %v2127, %v2131
        %v2135 = vsel %vm1487, %v2129, %v2133
        %v2136 = vsel %vm1487, %v2123, %v2127
        %v2137 = vsel %vm1487, %v2125, %v2129
        %v2138 = vsel %vm1487, %v2119, %v2123
        %v2139 = vsel %vm1487, %v2121, %v2125
        %v2140 = vsel %vm1487, %v2131, %v2119
        %v2141 = vsel %vm1487, %v2133, %v2121
        %v2142 = vsel %vm1504, %v2138, 0.0
        %v2143 = vsel %vm1505, %v2136, 0.0
        %v2144 = vsel %vm1506, %v2134, 0.0
        %v2145 = vsel %vm1507, %v2140, 0.0
        %v2146 = vsel %vm1504, %v2139, 0.0
        %v2147 = vsel %vm1505, %v2137, 0.0
        %v2148 = vsel %vm1506, %v2135, 0.0
        %v2149 = vsel %vm1507, %v2141, 0.0
        %2150 = vst [vmem:[#allocation2 + $0x180] sm:$0xff] %v2142
        %2151 = vst [vmem:[#allocation2 + $0x188] sm:$0xff] %v2143
        %2152 = vst [vmem:[#allocation2 + $0x190] sm:$0xff] %v2144
        %2153 = vst [vmem:[#allocation2 + $0x198] sm:$0xff] %v2145
        %2154 = vst [vmem:[#allocation2 + $0x1a0] sm:$0xff] %v2146
        %2155 = vst [vmem:[#allocation2 + $0x1a8] sm:$0xff] %v2147
        %2156 = vst [vmem:[#allocation2 + $0x1b0] sm:$0xff] %v2148
        %2157 = vst [vmem:[#allocation2 + $0x1b8] sm:$0xff] %v2149
        %2158 = vrot.lane.b32.xlu0 %v1902, 112
        %v2159 = vpop.permute.xlu0 %2158
        %2160 = vrot.lane.b32.xlu0 %v1906, 112
        %v2161 = vpop.permute.xlu0 %2160
        %2162 = vrot.lane.b32.xlu0 %v1903, 112
        %v2163 = vpop.permute.xlu0 %2162
        %2164 = vrot.lane.b32.xlu0 %v1907, 112
        %v2165 = vpop.permute.xlu0 %2164
        %2166 = vrot.lane.b32.xlu0 %v1904, 112
        %v2167 = vpop.permute.xlu0 %2166
        %2168 = vrot.lane.b32.xlu0 %v1908, 112
        %v2169 = vpop.permute.xlu0 %2168
        %2170 = vrot.lane.b32.xlu0 %v1905, 112
        %v2171 = vpop.permute.xlu0 %2170
        %2172 = vrot.lane.b32.xlu0 %v1909, 112
        %v2173 = vpop.permute.xlu0 %2172
        %v2174 = vsel %vm1540, %v2167, %v2171
        %v2175 = vsel %vm1540, %v2169, %v2173
        %v2176 = vsel %vm1540, %v2163, %v2167
        %v2177 = vsel %vm1540, %v2165, %v2169
        %v2178 = vsel %vm1540, %v2159, %v2163
        %v2179 = vsel %vm1540, %v2161, %v2165
        %v2180 = vsel %vm1540, %v2171, %v2159
        %v2181 = vsel %vm1540, %v2173, %v2161
        %v2182 = vsel %vm1553, %v2178, 0.0
        %v2183 = vsel %vm1554, %v2176, 0.0
        %v2184 = vsel %vm1555, %v2174, 0.0
        %v2185 = vsel %vm1556, %v2180, 0.0
        %v2186 = vsel %vm1553, %v2179, 0.0
        %v2187 = vsel %vm1554, %v2177, 0.0
        %v2188 = vsel %vm1555, %v2175, 0.0
        %v2189 = vsel %vm1556, %v2181, 0.0
        %2190 = vst [vmem:[#allocation2 + $0x1c0] sm:$0xff] %v2182
        %2191 = vst [vmem:[#allocation2 + $0x1c8] sm:$0xff] %v2183
        %2192 = vst [vmem:[#allocation2 + $0x1d0] sm:$0xff] %v2184
        %2193 = vst [vmem:[#allocation2 + $0x1d8] sm:$0xff] %v2185
        %2194 = vst [vmem:[#allocation2 + $0x1e0] sm:$0xff] %v2186
        %2195 = vst [vmem:[#allocation2 + $0x1e8] sm:$0xff] %v2187
        %2196 = vst [vmem:[#allocation2 + $0x1f0] sm:$0xff] %v2188
        %2197 = vst [vmem:[#allocation2 + $0x1f8] sm:$0xff] %v2189
        %2198 = vrot.lane.b32.xlu0 %v1902, 111
        %v2199 = vpop.permute.xlu0 %2198
        %2200 = vrot.lane.b32.xlu0 %v1906, 111
        %v2201 = vpop.permute.xlu0 %2200
        %2202 = vrot.lane.b32.xlu0 %v1903, 111
        %v2203 = vpop.permute.xlu0 %2202
        %2204 = vrot.lane.b32.xlu0 %v1907, 111
        %v2205 = vpop.permute.xlu0 %2204
        %2206 = vrot.lane.b32.xlu0 %v1904, 111
        %v2207 = vpop.permute.xlu0 %2206
        %2208 = vrot.lane.b32.xlu0 %v1908, 111
        %v2209 = vpop.permute.xlu0 %2208
        %2210 = vrot.lane.b32.xlu0 %v1905, 111
        %v2211 = vpop.permute.xlu0 %2210
        %2212 = vrot.lane.b32.xlu0 %v1909, 111
        %v2213 = vpop.permute.xlu0 %2212
        %v2214 = vsel %vm1589, %v2207, %v2211
        %v2215 = vsel %vm1589, %v2209, %v2213
        %v2216 = vsel %vm1589, %v2203, %v2207
        %v2217 = vsel %vm1589, %v2205, %v2209
        %v2218 = vsel %vm1589, %v2199, %v2203
        %v2219 = vsel %vm1589, %v2201, %v2205
        %v2220 = vsel %vm1589, %v2211, %v2199
        %v2221 = vsel %vm1589, %v2213, %v2201
        %v2222 = vsel %vm1606, %v2218, 0.0
        %v2223 = vsel %vm1607, %v2216, 0.0
        %v2224 = vsel %vm1608, %v2214, 0.0
        %v2225 = vsel %vm1609, %v2220, 0.0
        %v2226 = vsel %vm1606, %v2219, 0.0
        %v2227 = vsel %vm1607, %v2217, 0.0
        %v2228 = vsel %vm1608, %v2215, 0.0
        %v2229 = vsel %vm1609, %v2221, 0.0
        %2230 = vst [vmem:[#allocation2 + $0x200] sm:$0xff] %v2222
        %2231 = vst [vmem:[#allocation2 + $0x208] sm:$0xff] %v2223
        %2232 = vst [vmem:[#allocation2 + $0x210] sm:$0xff] %v2224
        %2233 = vst [vmem:[#allocation2 + $0x218] sm:$0xff] %v2225
        %2234 = vst [vmem:[#allocation2 + $0x220] sm:$0xff] %v2226
        %2235 = vst [vmem:[#allocation2 + $0x228] sm:$0xff] %v2227
        %2236 = vst [vmem:[#allocation2 + $0x230] sm:$0xff] %v2228
        %2237 = vst [vmem:[#allocation2 + $0x238] sm:$0xff] %v2229
        %v2238 = vld [vmem:[%s697] sm:$0xff]
        %v2239 = vld [vmem:[%s697 + $0x8] sm:$0xff]
        %v2240 = vld [vmem:[#allocation2] sm:$0xff]
        %v2241 = vld [vmem:[#allocation2 + $0x8] sm:$0xff]
        %v2242 = vld [vmem:[#allocation2 + $0x10] sm:$0xff]
        %v2243 = vld [vmem:[#allocation2 + $0x18] sm:$0xff]
        %v2244 = vld [vmem:[#allocation2 + $0x20] sm:$0xff]
        %v2245 = vld [vmem:[#allocation2 + $0x28] sm:$0xff]
        %v2246 = vld [vmem:[#allocation2 + $0x30] sm:$0xff]
        %v2247 = vld [vmem:[#allocation2 + $0x38] sm:$0xff]
        %v2248 = vld [vmem:[#allocation2 + $0x40] sm:$0xff]
        %v2249 = vld [vmem:[#allocation2 + $0x48] sm:$0xff]
        %v2250 = vld [vmem:[#allocation2 + $0x50] sm:$0xff]
        %v2251 = vld [vmem:[#allocation2 + $0x58] sm:$0xff]
        %v2252 = vld [vmem:[#allocation2 + $0x60] sm:$0xff]
        %v2253 = vld [vmem:[#allocation2 + $0x68] sm:$0xff]
        %v2254 = vld [vmem:[#allocation2 + $0x70] sm:$0xff]
        %v2255 = vld [vmem:[#allocation2 + $0x78] sm:$0xff]
        %v2256 = vld [vmem:[#allocation2 + $0x80] sm:$0xff]
        %v2257 = vld [vmem:[#allocation2 + $0x88] sm:$0xff]
        %v2258 = vld [vmem:[#allocation2 + $0x90] sm:$0xff]
        %v2259 = vld [vmem:[#allocation2 + $0x98] sm:$0xff]
        %v2260 = vld [vmem:[#allocation2 + $0xa0] sm:$0xff]
        %v2261 = vld [vmem:[#allocation2 + $0xa8] sm:$0xff]
        %v2262 = vld [vmem:[#allocation2 + $0xb0] sm:$0xff]
        %v2263 = vld [vmem:[#allocation2 + $0xb8] sm:$0xff]
        %v2264 = vld [vmem:[#allocation2 + $0xc0] sm:$0xff]
        %v2265 = vld [vmem:[#allocation2 + $0xc8] sm:$0xff]
        %v2266 = vld [vmem:[#allocation2 + $0xd0] sm:$0xff]
        %v2267 = vld [vmem:[#allocation2 + $0xd8] sm:$0xff]
        %v2268 = vld [vmem:[#allocation2 + $0xe0] sm:$0xff]
        %v2269 = vld [vmem:[#allocation2 + $0xe8] sm:$0xff]
        %v2270 = vld [vmem:[#allocation2 + $0xf0] sm:$0xff]
        %v2271 = vld [vmem:[#allocation2 + $0xf8] sm:$0xff]
        %v2272 = vld [vmem:[#allocation2 + $0x100] sm:$0xff]
        %v2273 = vld [vmem:[#allocation2 + $0x108] sm:$0xff]
        %v2274 = vld [vmem:[#allocation2 + $0x110] sm:$0xff]
        %v2275 = vld [vmem:[#allocation2 + $0x118] sm:$0xff]
        %v2276 = vld [vmem:[#allocation2 + $0x120] sm:$0xff]
        %v2277 = vld [vmem:[#allocation2 + $0x128] sm:$0xff]
        %v2278 = vld [vmem:[#allocation2 + $0x130] sm:$0xff]
        %v2279 = vld [vmem:[#allocation2 + $0x138] sm:$0xff]
        %v2280 = vld [vmem:[#allocation2 + $0x140] sm:$0xff]
        %v2281 = vld [vmem:[#allocation2 + $0x148] sm:$0xff]
        %v2282 = vld [vmem:[#allocation2 + $0x150] sm:$0xff]
        %v2283 = vld [vmem:[#allocation2 + $0x158] sm:$0xff]
        %v2284 = vld [vmem:[#allocation2 + $0x160] sm:$0xff]
        %v2285 = vld [vmem:[#allocation2 + $0x168] sm:$0xff]
        %v2286 = vld [vmem:[#allocation2 + $0x170] sm:$0xff]
        %v2287 = vld [vmem:[#allocation2 + $0x178] sm:$0xff]
        %v2288 = vld [vmem:[#allocation2 + $0x180] sm:$0xff]
        %v2289 = vld [vmem:[#allocation2 + $0x188] sm:$0xff]
        %v2290 = vld [vmem:[#allocation2 + $0x190] sm:$0xff]
        %v2291 = vld [vmem:[#allocation2 + $0x198] sm:$0xff]
        %v2292 = vld [vmem:[#allocation2 + $0x1a0] sm:$0xff]
        %v2293 = vld [vmem:[#allocation2 + $0x1a8] sm:$0xff]
        %v2294 = vld [vmem:[#allocation2 + $0x1b0] sm:$0xff]
        %v2295 = vld [vmem:[#allocation2 + $0x1b8] sm:$0xff]
        %v2296 = vld [vmem:[#allocation2 + $0x1c0] sm:$0xff]
        %v2297 = vld [vmem:[#allocation2 + $0x1c8] sm:$0xff]
        %v2298 = vld [vmem:[#allocation2 + $0x1d0] sm:$0xff]
        %v2299 = vld [vmem:[#allocation2 + $0x1d8] sm:$0xff]
        %v2300 = vld [vmem:[#allocation2 + $0x1e0] sm:$0xff]
        %v2301 = vld [vmem:[#allocation2 + $0x1e8] sm:$0xff]
        %v2302 = vld [vmem:[#allocation2 + $0x1f0] sm:$0xff]
        %v2303 = vld [vmem:[#allocation2 + $0x1f8] sm:$0xff]
        %v2304 = vld [vmem:[#allocation2 + $0x200] sm:$0xff]
        %v2305 = vld [vmem:[#allocation2 + $0x208] sm:$0xff]
        %v2306 = vld [vmem:[#allocation2 + $0x210] sm:$0xff]
        %v2307 = vld [vmem:[#allocation2 + $0x218] sm:$0xff]
        %v2308 = vld [vmem:[#allocation2 + $0x220] sm:$0xff]
        %v2309 = vld [vmem:[#allocation2 + $0x228] sm:$0xff]
        %v2310 = vld [vmem:[#allocation2 + $0x230] sm:$0xff]
        %v2311 = vld [vmem:[#allocation2 + $0x238] sm:$0xff]
        %v2313 = vsel %vm725, %v2239, 0
        %2315 = vmatprep.subr.mxu0 %v2241
        %2316 = vmatpush1.msra.mxu0 %v2240
        %2317 = vmatprep.subr.mxu0 %v2245
        %2318 = vmatpush1.msra.mxu0 %v2244
        %2319 = vmatprep.subr.mxu0 %v2249
        %2320 = vmatpush1.msra.mxu0 %v2248
        %2321 = vmatprep.subr.mxu0 %v2253
        %2322 = vmatpush1.msra.mxu0 %v2252
        %2323 = vmatprep.subr.mxu0 %v2257
        %2324 = vmatpush1.msra.mxu0 %v2256
        %2325 = vmatprep.subr.mxu0 %v2261
        %2326 = vmatpush1.msra.mxu0 %v2260
        %2327 = vmatprep.subr.mxu0 %v2265
        %2328 = vmatpush1.msra.mxu0 %v2264
        %2329 = vmatprep.subr.mxu0 %v2269
        %2330 = vmatpush1.msra.mxu0 %v2268
        %2331 = vmatprep.subr.mxu0 %v2273
        %2332 = vmatpush1.msra.mxu0 %v2272
        %2333 = vmatprep.subr.mxu0 %v2277
        %2334 = vmatpush1.msra.mxu0 %v2276
        %2335 = vmatprep.subr.mxu0 %v2281
        %2336 = vmatpush1.msra.mxu0 %v2280
        %2337 = vmatprep.subr.mxu0 %v2285
        %2338 = vmatpush1.msra.mxu0 %v2284
        %2339 = vmatprep.subr.mxu0 %v2289
        %2340 = vmatpush1.msra.mxu0 %v2288
        %2341 = vmatprep.subr.mxu0 %v2293
        %2342 = vmatpush1.msra.mxu0 %v2292
        %2343 = vmatprep.subr.mxu0 %v2297
        %2344 = vmatpush1.msra.mxu0 %v2296
        %2345 = vmatprep.subr.mxu0 %v2301
        %2346 = vmatpush1.msra.mxu0 %v2300
        %2347 = vmatprep.subr.mxu0 %v2305
        %2348 = vmatpush1.msra.mxu0 %v2304
        %2349 = vmatprep.subr.mxu0 %v2309
        %2350 = vmatpush1.msra.mxu0 %v2308
        %2351 = vmatprep.subr.mxu0 0.0
        %2352 = vmatpush1.msra.mxu0 0.0
        %2353 = vmatprep.subr.mxu0 0.0
        %2354 = vmatpush1.msra.mxu0 0.0
        %2355 = vmatprep.subr.mxu0 0.0
        %2356 = vmatpush1.msra.mxu0 0.0
        %2357 = vmatprep.subr.mxu0 0.0
        %2358 = vmatpush1.msra.mxu0 0.0
        %2359 = vmatprep.subr.mxu0 0.0
        %2360 = vmatpush1.msra.mxu0 0.0
        %2361 = vmatprep.subr.mxu0 0.0
        %2362 = vmatpush1.msra.mxu0 0.0
        %2363 = vmatprep.subr.mxu0 0.0
        %2364 = vmatpush1.msra.mxu0 0.0
        %2365 = vmatprep.subr.mxu0 0.0
        %2366 = vmatpush1.msra.mxu0 0.0
        %2367 = vmatprep.subr.mxu0 0.0
        %2368 = vmatpush1.msra.mxu0 0.0
        %2369 = vmatprep.subr.mxu0 0.0
        %2370 = vmatpush1.msra.mxu0 0.0
        %2371 = vmatprep.subr.mxu0 0.0
        %2372 = vmatpush1.msra.mxu0 0.0
        %2373 = vmatprep.subr.mxu0 0.0
        %2374 = vmatpush1.msra.mxu0 0.0
        %2375 = vmatprep.subr.mxu0 0.0
        %2376 = vmatpush1.msra.mxu0 0.0
        %2377 = vmatprep.subr.mxu0 0.0
        %2378 = vmatpush1.msra.mxu0 0.0
        %2379 = vmatprep.mubr.f32.mxu0 %v2313
        %2380 = vmatmul.mubr.f32.gmra.mrb[0].mxu0 %v2238
        %v2381 = vpop.f32.mrb[0].mxu0
        %v2382 = vadd.f32 0.0, %v2381
        %v2383 = vpop.f32.mrb[0].mxu0
        %v2384 = vadd.f32 0.0, %v2383
        %2385 = vdwg.mxu0
        %2386 = vmatprep.subr.mxu0 %v2243
        %2387 = vmatpush1.msra.mxu0 %v2242
        %2388 = vmatprep.subr.mxu0 %v2247
        %2389 = vmatpush1.msra.mxu0 %v2246
        %2390 = vmatprep.subr.mxu0 %v2251
        %2391 = vmatpush1.msra.mxu0 %v2250
        %2392 = vmatprep.subr.mxu0 %v2255
        %2393 = vmatpush1.msra.mxu0 %v2254
        %2394 = vmatprep.subr.mxu0 %v2259
        %2395 = vmatpush1.msra.mxu0 %v2258
        %2396 = vmatprep.subr.mxu0 %v2263
        %2397 = vmatpush1.msra.mxu0 %v2262
        %2398 = vmatprep.subr.mxu0 %v2267
        %2399 = vmatpush1.msra.mxu0 %v2266
        %2400 = vmatprep.subr.mxu0 %v2271
        %2401 = vmatpush1.msra.mxu0 %v2270
        %2402 = vmatprep.subr.mxu0 %v2275
        %2403 = vmatpush1.msra.mxu0 %v2274
        %2404 = vmatprep.subr.mxu0 %v2279
        %2405 = vmatpush1.msra.mxu0 %v2278
        %2406 = vmatprep.subr.mxu0 %v2283
        %2407 = vmatpush1.msra.mxu0 %v2282
        %2408 = vmatprep.subr.mxu0 %v2287
        %2409 = vmatpush1.msra.mxu0 %v2286
        %2410 = vmatprep.subr.mxu0 %v2291
        %2411 = vmatpush1.msra.mxu0 %v2290
        %2412 = vmatprep.subr.mxu0 %v2295
        %2413 = vmatpush1.msra.mxu0 %v2294
        %2414 = vmatprep.subr.mxu0 %v2299
        %2415 = vmatpush1.msra.mxu0 %v2298
        %2416 = vmatprep.subr.mxu0 %v2303
        %2417 = vmatpush1.msra.mxu0 %v2302
        %2418 = vmatprep.subr.mxu0 %v2307
        %2419 = vmatpush1.msra.mxu0 %v2306
        %2420 = vmatprep.subr.mxu0 %v2311
        %2421 = vmatpush1.msra.mxu0 %v2310
        %2422 = vmatprep.subr.mxu0 0.0
        %2423 = vmatpush1.msra.mxu0 0.0
        %2424 = vmatprep.subr.mxu0 0.0
        %2425 = vmatpush1.msra.mxu0 0.0
        %2426 = vmatprep.subr.mxu0 0.0
        %2427 = vmatpush1.msra.mxu0 0.0
        %2428 = vmatprep.subr.mxu0 0.0
        %2429 = vmatpush1.msra.mxu0 0.0
        %2430 = vmatprep.subr.mxu0 0.0
        %2431 = vmatpush1.msra.mxu0 0.0
        %2432 = vmatprep.subr.mxu0 0.0
        %2433 = vmatpush1.msra.mxu0 0.0
        %2434 = vmatprep.subr.mxu0 0.0
        %2435 = vmatpush1.msra.mxu0 0.0
        %2436 = vmatprep.subr.mxu0 0.0
        %2437 = vmatpush1.msra.mxu0 0.0
        %2438 = vmatprep.subr.mxu0 0.0
        %2439 = vmatpush1.msra.mxu0 0.0
        %2440 = vmatprep.subr.mxu0 0.0
        %2441 = vmatpush1.msra.mxu0 0.0
        %2442 = vmatprep.subr.mxu0 0.0
        %2443 = vmatpush1.msra.mxu0 0.0
        %2444 = vmatprep.subr.mxu0 0.0
        %2445 = vmatpush1.msra.mxu0 0.0
        %2446 = vmatprep.subr.mxu0 0.0
        %2447 = vmatpush1.msra.mxu0 0.0
        %2448 = vmatprep.subr.mxu0 0.0
        %2449 = vmatpush1.msra.mxu0 0.0
        %2450 = vmatprep.mubr.f32.mxu0 %v2313
        %2451 = vmatmul.mubr.f32.gmra.mrb[0].mxu0 %v2238
        %v2452 = vpop.f32.mrb[0].mxu0
        %v2453 = vadd.f32 0.0, %v2452
        %v2454 = vpop.f32.mrb[0].mxu0
        %v2455 = vadd.f32 0.0, %v2454
        %2456 = vdwg.mxu0
        %v2457 = vld [vmem:[%s701] sm:$0xff]
        %2459 = vset.pattern.permute.xlu0 0
        %2460 = vperm.xlu0 %2459, %v2457
        %v2461 = vpop.permute.xlu0 %2460
        %v2463 = vmul.f32 %v2382, %v2461
        %v2464 = vmul.f32 %v2384, %v2461
        %v2465 = vmul.f32 %v2453, %v2461
        %v2466 = vmul.f32 %v2455, %v2461
        %v2467 = vld [vmem:[%s705] sm:$0xff]
        %2469 = vset.pattern.permute.xlu0 0
        %2470 = vperm.xlu0 %2469, %v2467
        %v2471 = vpop.permute.xlu0 %2470
        %v2473 = vadd.f32 %v2463, %v2471
        %v2474 = vadd.f32 %v2464, %v2471
        %v2475 = vadd.f32 %v2465, %v2471
        %v2476 = vadd.f32 %v2466, %v2471
        %v2477 = vmax.f32 %v2473, 0.0
        %v2478 = vmax.f32 %v2474, 0.0
        %v2479 = vmax.f32 %v2475, 0.0
        %v2480 = vmax.f32 %v2476, 0.0
        %s2481 = sadd.s32 %s951, 1
        %s2482 = sld [smem:[#allocation5 + %s2481]]
        %v2483 = vstv %s2482
        %v2484 = vmul.f32 %v2483, %v719
        %v2485 = vmul.f32 %v2483, %v720
        %v2486 = vmul.f32 %v2483, %v721
        %v2487 = vmul.f32 %v2483, %v722
        %v2488 = vadd.f32 %v2484, %v2477
        %v2489 = vadd.f32 %v2485, %v2478
        %v2490 = vadd.f32 %v2486, %v2479
        %v2491 = vadd.f32 %v2487, %v2480
        %v2492 = vmax.f32 %v2488, 0.0
        %v2493 = vmax.f32 %v2489, 0.0
        %v2494 = vmax.f32 %v2490, 0.0
        %v2495 = vmax.f32 %v2491, 0.0
        %2496 = vst [vmem:[%s714] sm:$0xff] %v2492
        %2497 = vst [vmem:[%s714 + $0x8] sm:$0xff] %v2493
        %2498 = vst [vmem:[%s714 + $0x10] sm:$0xff] %v2494
        %2499 = vst [vmem:[%s714 + $0x18] sm:$0xff] %v2495
        %p2500 = scmp.lt.s32.totalorder %s34, 5
        %s2501 = scalar_select %p2500, %s34, 5
        %s2502 = smul.addr %s2501, 4
        %s2503 = scalar_lea.vmem %s14, %s2502
        %p2504 = scmp.lt.s32.totalorder %s34, 5
        %s2505 = scalar_select %p2504, %s34, 5
        %s2506 = smul.addr %s2505, 4
        %s2507 = smul.addr %s2506, 8
        %s2508 = scalar_lea.vmem %s15, %s2507
        // Predicated region
        $region77: #{part_graph_forward.1} parent=71 // pred_check
          %p2509 = pneg %p387
        $region78: #{part_graph_forward.1} parent=71 // pred_check_branch
          %2511 = sbr.rel (%p2509) target = $region80
        $region79: #{part_graph_forward.1} parent=71 // pred_region
          _
        $region80: #{part_graph_forward.1} parent=71 // pred_fallthru
          _
        // Predicated region
        $region81: #{part_graph_forward.1} parent=71 // pred_check
          %p2512 = pneg %p413
        $region82: #{part_graph_forward.1} parent=71 // pred_check_branch
          %2514 = sbr.rel (%p2512) target = $region84
        $region83: #{part_graph_forward.1} parent=71 // pred_region
          _
        $region84: #{part_graph_forward.1} parent=71 // pred_fallthru
          _
      $region72: #{part_graph_forward.1} parent=5 // pred_fallthru
        _
      %p2515 = scmp.le.s32.totalorder 2, %s29
      // Predicated region
      $region85: #{part_graph_forward.1} parent=5 // pred_check
        %p2516 = pneg %p2515
      $region86: #{part_graph_forward.1} parent=5 // pred_check_branch
        %2518 = sbr.rel (%p2516) target = $region88
      $region87: #{part_graph_forward.1} parent=5 // pred_region
        %s2519 = ssub.s32 %s29, 2
        // Predicated region
        $region89: #{part_graph_forward.1} parent=87 // pred_check
          %p2520 = pneg %p393
        $region90: #{part_graph_forward.1} parent=87 // pred_check_branch
          %2522 = sbr.rel (%p2520) target = $region92
        $region91: #{part_graph_forward.1} parent=87 // pred_region
          %p2523 = scmp.lt.s32.totalorder %s35, 5
          %s2524 = scalar_select %p2523, %s35, 5
          %s2525 = smul.addr %s2524, 4
          %s2526 = scalar_lea.vmem %s14, %s2525
        $region92: #{part_graph_forward.1} parent=87 // pred_fallthru
          _
        // Predicated region
        $region93: #{part_graph_forward.1} parent=87 // pred_check
          %p2527 = pneg %p419
        $region94: #{part_graph_forward.1} parent=87 // pred_check_branch
          %2529 = sbr.rel (%p2527) target = $region96
        $region95: #{part_graph_forward.1} parent=87 // pred_region
          %p2530 = scmp.lt.s32.totalorder %s35, 5
          %s2531 = scalar_select %p2530, %s35, 5
          %s2532 = smul.addr %s2531, 4
          %s2533 = smul.addr %s2532, 8
          %s2534 = scalar_lea.vmem %s15, %s2533
        $region96: #{part_graph_forward.1} parent=87 // pred_fallthru
          _
      $region88: #{part_graph_forward.1} parent=5 // pred_fallthru
        _
    $region6: #{part_graph_forward.1} parent=1 // loop_footer
      %s33 = sadd.s32 1, %s29
    $region7: #{part_graph_forward.1} parent=1 // loop_footer_branch
      %28 = sbr.rel target = $region3
    $region8: #{part_graph_forward.1} parent=1 // loop_exit
      _
    %2535 = vsyncpa [#allocation6], 1
    %s2536 = scalar_lea.sflag [#allocation6], 1
    %2537 = vsyncpa %s2536, 1

</llo_original>
